<compile_context>
chip_gen: v5e
topology: v5e:2x2
jax: 0.10.0
libtpu: 0.0.40
codegen_flags: <defaults>
</compile_context>

<pallas_src>
import functools

import jax
import jax.numpy as jnp
from jax.experimental import pallas as pl
from jax.experimental.pallas import tpu as pltpu

_LANES = 128
_EPS = 1e-5


# -----------------------------------------------------------------------------
# small helpers
# -----------------------------------------------------------------------------
def _round_up(x, m):
    return ((x + m - 1) // m) * m


def _pad_last(x, n):
    return jnp.pad(x, ((0, 0), (0, n - x.shape[1])))


def _group_proj(cout, num_groups, cp):
    # proj[c1, c2] = 1 iff c1, c2 are real channels in the same GroupNorm group.
    cg = cout // num_groups
    ch = jnp.arange(cp)
    grp = ch // cg
    valid = ch < cout
    proj = (grp[:, None] == grp[None, :]) & valid[:, None] & valid[None, :]
    return proj.astype(jnp.float32)


def _sample_mats(block_batch, hw):
    # ssum  (bb, bb*hw): row b has ones over sample b's spatial rows (block-diag).
    # bcast (bb*hw, bb): one-hot row->sample, broadcasts per-sample stats back.
    rows = block_batch * hw
    sample = jnp.arange(rows, dtype=jnp.int32) // hw
    ssum = (sample[None, :] ==
            jnp.arange(block_batch, dtype=jnp.int32)[:, None]).astype(jnp.float32)
    return ssum, ssum.T


def _conv_block_batch(B, hw, kkc, cout, budget_bytes=48 << 20):
    # Largest divisor of B (<= 8) whose double-buffered bf16 in/out blocks fit
    # the VMEM budget; prefer >= 2 grid steps (pipelining / v7x megacore) when
    # that does not shrink the block by more than 2x.
    divs = [d for d in range(1, min(B, 8) + 1) if B % d == 0]
    fits = [d for d in divs if 2 * d * hw * (kkc + cout) * 2 <= budget_bytes] or [1]
    best = max(fits)
    for d in sorted(fits, reverse=True):
        if B // d >= 2 and 2 * d >= best:
            return d
    return best


def _vmem_limit(rows, kkc, cout_lanes):
    blocks = 2 * rows * (kkc + cout_lanes) * 2          # double-buffered bf16 blocks
    consts = kkc * _LANES * 2 + _LANES * _LANES * 4 + rows * 64 + (4 << 20)
    return int(min(max(blocks + consts, 32 << 20), 96 << 20))


# -----------------------------------------------------------------------------
# shared in-kernel GroupNorm + ReLU on a block of samples (all f32 / MXU)
# -----------------------------------------------------------------------------
def _gn_relu(y, g, be, proj, ssum, bcast, *, inv_n, block_batch):
    # y: (rows, 128) f32 conv output (+bias); rows = bb*hw, padded lanes are 0.
    f32 = jnp.float32

    def to_rows(v):                    # per-sample (bb,128) stats -> (rows,128)
        if block_batch == 1:
            return v                   # (1,128) broadcasts directly
        return jnp.dot(bcast, v, preferred_element_type=f32)

    col_sums = jnp.dot(ssum, y, preferred_element_type=f32)            # (bb,128)
    mean = jnp.dot(col_sums, proj, preferred_element_type=f32) * inv_n
    d = y - to_rows(mean)
    sq_sums = jnp.dot(ssum, d * d, preferred_element_type=f32)         # centered
    var = jnp.dot(sq_sums, proj, preferred_element_type=f32) * inv_n
    scale = jax.lax.rsqrt(var + _EPS) * g                              # (bb,128)
    return jnp.maximum(d * to_rows(scale) + be, 0.0)


# -----------------------------------------------------------------------------
# Kernel 1: conv (im2col matmul) + GroupNorm + ReLU, block of samples per step
# -----------------------------------------------------------------------------
def _conv_gn_relu_kernel(p_ref, w_ref, b_ref, g_ref, be_ref, proj_ref,
                         ssum_ref, bcast_ref, o_ref, *, inv_n, cout,
                         block_batch):
    y = jnp.dot(p_ref[...], w_ref[...],
                preferred_element_type=jnp.float32) + b_ref[...]
    act = _gn_relu(y, g_ref[...], be_ref[...], proj_ref[...],
                   ssum_ref[...], bcast_ref[...],
                   inv_n=inv_n, block_batch=block_batch)
    o_ref[...] = act[:, :cout].astype(o_ref.dtype)      # compact Cout-wide out


def conv_gn_relu(patches2d, w_mat, bias, gamma, beta, *, num_groups, hw,
                 block_batch):
    BHW, KKC = patches2d.shape
    assert hw % 8 == 0, "TODO(synk): pad hw to a multiple of 8 for odd resolutions"
    B = BHW // hw
    assert B % block_batch == 0
    rows = block_batch * hw
    Cout = w_mat.shape[1]
    cg = Cout // num_groups

    wp = jnp.pad(w_mat, ((0, 0), (0, _LANES - Cout))).astype(jnp.bfloat16)
    bp = _pad_last(bias, _LANES)
    gp = _pad_last(gamma, _LANES)
    bep = _pad_last(beta, _LANES)
    proj = _group_proj(Cout, num_groups, _LANES)
    ssum, bcast = _sample_mats(block_batch, hw)

    kernel = functools.partial(_conv_gn_relu_kernel, inv_n=1.0 / float(hw * cg),
                               cout=Cout, block_batch=block_batch)
    cost = pl.CostEstimate(
        flops=int(2 * BHW * KKC * _LANES),
        transcendentals=int(B * _LANES),
        bytes_accessed=int(BHW * KKC * 2 + BHW * Cout * 2 + KKC * _LANES * 2))
    return pl.pallas_call(
        kernel,
        out_shape=jax.ShapeDtypeStruct((BHW, Cout), jnp.bfloat16),
        grid_spec=pltpu.PrefetchScalarGridSpec(
            num_scalar_prefetch=0,
            grid=(B // block_batch,),
            in_specs=[
                pl.BlockSpec((rows, KKC), lambda i: (i, 0)),
                pl.BlockSpec((KKC, _LANES), lambda i: (0, 0)),
                pl.BlockSpec((1, _LANES), lambda i: (0, 0)),
                pl.BlockSpec((1, _LANES), lambda i: (0, 0)),
                pl.BlockSpec((1, _LANES), lambda i: (0, 0)),
                pl.BlockSpec((_LANES, _LANES), lambda i: (0, 0)),
                pl.BlockSpec((block_batch, rows), lambda i: (0, 0)),
                pl.BlockSpec((rows, block_batch), lambda i: (0, 0)),
            ],
            out_specs=pl.BlockSpec((rows, Cout), lambda i: (i, 0)),
        ),
        compiler_params=pltpu.CompilerParams(
            dimension_semantics=("parallel",),
            vmem_limit_bytes=_vmem_limit(rows, KKC, Cout)),
        cost_estimate=cost,
    )(patches2d.astype(jnp.bfloat16), wp, bp, gp, bep, proj, ssum, bcast)


# -----------------------------------------------------------------------------
# Kernel 2: conv3 + GroupNorm + ReLU + global-avg-pool + fused dueling head
# -----------------------------------------------------------------------------
def _conv3_pool_head_kernel(p_ref, w_ref, b_ref, g_ref, be_ref, proj_ref,
                            ssum_ref, bcast_ref, w1_ref, b1_ref, w2_ref, b2_ref,
                            o_ref, *, inv_n, inv_hw, block_batch):
    f32 = jnp.float32
    y = jnp.dot(p_ref[...], w_ref[...], preferred_element_type=f32) + b_ref[...]
    act = _gn_relu(y, g_ref[...], be_ref[...], proj_ref[...],
                   ssum_ref[...], bcast_ref[...],
                   inv_n=inv_n, block_batch=block_batch)
    # global average pool: one block-diagonal ones matmul -> (bb, 128)
    pooled = jnp.dot(ssum_ref[...], act, preferred_element_type=f32) * inv_hw
    # fused dueling head: two matmuls total (dueling combine folded into w2)
    h = jnp.maximum(
        jnp.dot(pooled.astype(jnp.bfloat16), w1_ref[...],
                preferred_element_type=f32) + b1_ref[...], 0.0)
    o_ref[...] = jnp.dot(h.astype(jnp.bfloat16), w2_ref[...],
                         preferred_element_type=f32) + b2_ref[...]


def conv3_pool_head(patches2d, w_mat, bias, gamma, beta, head_mats, *,
                    num_groups, hw, block_batch, action_size):
    BHW, KKC = patches2d.shape
    assert hw % 8 == 0, "TODO(synk): pad hw to a multiple of 8 for odd resolutions"
    B = BHW // hw
    assert B % block_batch == 0
    rows = block_batch * hw
    Cout = w_mat.shape[1]
    cg = Cout // num_groups

    wp = jnp.pad(w_mat, ((0, 0), (0, _LANES - Cout))).astype(jnp.bfloat16)
    bp = _pad_last(bias, _LANES)
    gp = _pad_last(gamma, _LANES)
    bep = _pad_last(beta, _LANES)
    proj = _group_proj(Cout, num_groups, _LANES)
    ssum, bcast = _sample_mats(block_batch, hw)
    w1p, b1p, w2p, b2p = head_mats
    p1 = w1p.shape[1]

    kernel = functools.partial(_conv3_pool_head_kernel,
                               inv_n=1.0 / float(hw * cg),
                               inv_hw=1.0 / float(hw),
                               block_batch=block_batch)
    cost = pl.CostEstimate(
        flops=int(2 * BHW * KKC * _LANES + 4 * B * p1 * _LANES),
        transcendentals=int(B * _LANES),
        bytes_accessed=int(BHW * KKC * 2 + B * _LANES * 4 + KKC * _LANES * 2
                           + 2 * p1 * _LANES * 2))
    q_pad = pl.pallas_call(
        kernel,
        out_shape=jax.ShapeDtypeStruct((B, _LANES), jnp.float32),
        grid_spec=pltpu.PrefetchScalarGridSpec(
            num_scalar_prefetch=0,
            grid=(B // block_batch,),
            in_specs=[
                pl.BlockSpec((rows, KKC), lambda i: (i, 0)),
                pl.BlockSpec((KKC, _LANES), lambda i: (0, 0)),
                pl.BlockSpec((1, _LANES), lambda i: (0, 0)),
                pl.BlockSpec((1, _LANES), lambda i: (0, 0)),
                pl.BlockSpec((1, _LANES), lambda i: (0, 0)),
                pl.BlockSpec((_LANES, _LANES), lambda i: (0, 0)),
                pl.BlockSpec((block_batch, rows), lambda i: (0, 0)),
                pl.BlockSpec((rows, block_batch), lambda i: (0, 0)),
                pl.BlockSpec((_LANES, p1), lambda i: (0, 0)),
                pl.BlockSpec((1, p1), lambda i: (0, 0)),
                pl.BlockSpec((p1, _LANES), lambda i: (0, 0)),
                pl.BlockSpec((1, _LANES), lambda i: (0, 0)),
            ],
            out_specs=pl.BlockSpec((block_batch, _LANES), lambda i: (i, 0)),
        ),
        compiler_params=pltpu.CompilerParams(
            dimension_semantics=("parallel",),
            vmem_limit_bytes=_vmem_limit(rows, KKC, _LANES)),
        cost_estimate=cost,
    )(patches2d.astype(jnp.bfloat16), wp, bp, gp, bep, proj, ssum, bcast,
      w1p, b1p, w2p, b2p)
    return q_pad[:, :action_size]


# -----------------------------------------------------------------------------
# JAX glue: im2col, head-matrix fusion, parameter init, forward, reference
# -----------------------------------------------------------------------------
def im2col(x_nhwc, k, stride, pad):
    # TODO(synk): replace with in-kernel patch formation (halo DMA) at 84x84.
    B, H, W, C = x_nhwc.shape
    xp = jnp.pad(x_nhwc, ((0, 0), (pad, pad), (pad, pad), (0, 0)))
    Ho = (H + 2 * pad - k) // stride + 1
    Wo = (W + 2 * pad - k) // stride + 1
    cols = []
    for i in range(k):
        for j in range(k):
            cols.append(xp[:, i:i + stride * Ho:stride,
                           j:j + stride * Wo:stride, :])
    patches = jnp.concatenate(cols, axis=-1)            # (B, Ho, Wo, k*k*C)
    return patches.reshape(B * Ho * Wo, k * k * C), Ho, Wo


def _build_head_mats(params):
    feat = params["w1v"].shape[0]               # 64
    hid = params["w1v"].shape[1]
    A = params["w2a"].shape[1]
    # layer 1: value|advantage branches side by side -> one matmul
    w1 = jnp.concatenate([params["w1v"], params["w1a"]], axis=1)       # (feat, 2H)
    b1 = jnp.concatenate([params["b1v"], params["b1a"]], axis=1)       # (1, 2H)
    # layer 2: block-diagonal, then fold the (linear) dueling combine matrix C
    w2_full = jnp.zeros((2 * hid, 1 + A), jnp.float32)
    w2_full = w2_full.at[:hid, :1].set(params["w2v"])
    w2_full = w2_full.at[hid:, 1:].set(params["w2a"])
    b2_full = jnp.concatenate([params["b2v"], params["b2a"]], axis=1)  # (1, 1+A)
    comb = jnp.concatenate([jnp.ones((1, A), jnp.float32),
                            jnp.eye(A, dtype=jnp.float32) - 1.0 / A], axis=0)
    w2c = w2_full @ comb                                               # (2H, A)
    b2c = b2_full @ comb                                               # (1, A)

    p1 = max(_LANES, _round_up(2 * hid, _LANES))
    w1p = jnp.zeros((_LANES, p1), jnp.float32).at[:feat, :2 * hid].set(w1)
    b1p = jnp.zeros((1, p1), jnp.float32).at[:, :2 * hid].set(b1)
    w2p = jnp.zeros((p1, _LANES), jnp.float32).at[:2 * hid, :A].set(w2c)
    b2p = jnp.zeros((1, _LANES), jnp.float32).at[:, :A].set(b2c)
    return w1p.astype(jnp.bfloat16), b1p, w2p.astype(jnp.bfloat16), b2p


def init_params(key, input_channels=3, action_size=4, hidden_size=32):
    ks = jax.random.split(key, 16)

    def wmat(k, kh, kw, cin, cout):
        fan_in = kh * kw * cin
        w = jax.random.normal(k, (kh, kw, cin, cout), jnp.float32) / jnp.sqrt(fan_in)
        return w.reshape(kh * kw * cin, cout)

    def lin(k, fin, fout):
        return jax.random.normal(k, (fin, fout), jnp.float32) / jnp.sqrt(fin)

    p = {}
    p["w1"] = wmat(ks[0], 3, 3, input_channels, 32)
    p["b1"] = 0.01 * jax.random.normal(ks[1], (1, 32), jnp.float32)
    p["g1"] = 1.0 + 0.1 * jax.random.normal(ks[2], (1, 32), jnp.float32)
    p["be1"] = 0.1 * jax.random.normal(ks[3], (1, 32), jnp.float32)

    p["w2"] = wmat(ks[4], 3, 3, 32, 64)
    p["b2"] = 0.01 * jax.random.normal(ks[5], (1, 64), jnp.float32)
    p["g2"] = 1.0 + 0.1 * jax.random.normal(ks[6], (1, 64), jnp.float32)
    p["be2"] = 0.1 * jax.random.normal(ks[7], (1, 64), jnp.float32)

    p["w3"] = wmat(ks[8], 3, 3, 64, 64)
    p["b3"] = 0.01 * jax.random.normal(ks[9], (1, 64), jnp.float32)
    p["g3"] = 1.0 + 0.1 * jax.random.normal(ks[10], (1, 64), jnp.float32)
    p["be3"] = 0.1 * jax.random.normal(ks[11], (1, 64), jnp.float32)

    p["w1v"] = lin(ks[12], 64, hidden_size)
    p["b1v"] = jnp.zeros((1, hidden_size), jnp.float32)
    p["w2v"] = lin(ks[13], hidden_size, 1)
    p["b2v"] = jnp.zeros((1, 1), jnp.float32)

    p["w1a"] = lin(ks[14], 64, hidden_size)
    p["b1a"] = jnp.zeros((1, hidden_size), jnp.float32)
    p["w2a"] = lin(ks[15], hidden_size, action_size)
    p["b2a"] = jnp.zeros((1, action_size), jnp.float32)
    return p


def dqn_forward(x_nchw, params, num_groups=8):
    # public input is NCHW (PyTorch); convert to NHWC for the kernels.
    x = jnp.transpose(x_nchw, (0, 2, 3, 1)).astype(jnp.float32)
    B = x.shape[0]
    # batch blocking: B <= 8 handled in one block; otherwise pad to multiple of 8
    if B <= 8:
        B_pad, bb_head = B, B
    else:
        B_pad, bb_head = _round_up(B, 8), 8
    if B_pad != B:
        x = jnp.pad(x, ((0, B_pad - B), (0, 0), (0, 0), (0, 0)))
    xb = x.astype(jnp.bfloat16)
    A = params["w2a"].shape[1]

    p1, H1, W1 = im2col(xb, 3, 1, 1)
    hw1 = H1 * W1
    bb1 = _conv_block_batch(B_pad, hw1, p1.shape[1], 32)
    y1 = conv_gn_relu(p1, params["w1"], params["b1"], params["g1"],
                      params["be1"], num_groups=num_groups,
                      hw=hw1, block_batch=bb1)
    y1 = y1.reshape(B_pad, H1, W1, 32)

    p2, H2, W2 = im2col(y1, 3, 2, 1)
    hw2 = H2 * W2
    bb2 = _conv_block_batch(B_pad, hw2, p2.shape[1], 64)
    y2 = conv_gn_relu(p2, params["w2"], params["b2"], params["g2"],
                      params["be2"], num_groups=num_groups,
                      hw=hw2, block_batch=bb2)
    y2 = y2.reshape(B_pad, H2, W2, 64)

    p3, H3, W3 = im2col(y2, 3, 2, 1)
    head = _build_head_mats(params)
    q = conv3_pool_head(p3, params["w3"], params["b3"], params["g3"],
                        params["be3"], head, num_groups=num_groups,
                        hw=H3 * W3, block_batch=bb_head, action_size=A)
    return q[:B]


def ref_forward(x_nchw, params, num_groups=8):
    x = jnp.transpose(x_nchw, (0, 2, 3, 1)).astype(jnp.float32)

    def block(x, w_mat, b, g, be, cin, cout, stride):
        w = w_mat.reshape(3, 3, cin, cout)
        y = jax.lax.conv_general_dilated(
            x, w, (stride, stride), [(1, 1), (1, 1)],
            dimension_numbers=("NHWC", "HWIO", "NHWC")) + b.reshape(1, 1, 1, cout)
        B, H, W, C = y.shape
        cg = C // num_groups
        yg = y.reshape(B, H, W, num_groups, cg)
        mean = jnp.mean(yg, axis=(1, 2, 4), keepdims=True)
        var = jnp.mean((yg - mean) ** 2, axis=(1, 2, 4), keepdims=True)
        yn = ((yg - mean) / jnp.sqrt(var + 1e-5)).reshape(B, H, W, C)
        return jnp.maximum(yn * g.reshape(1, 1, 1, C) + be.reshape(1, 1, 1, C), 0.0)

    y = block(x, params["w1"], params["b1"], params["g1"], params["be1"],
              x.shape[-1], 32, 1)
    y = block(y, params["w2"], params["b2"], params["g2"], params["be2"], 32, 64, 2)
    y = block(y, params["w3"], params["b3"], params["g3"], params["be3"], 64, 64, 2)
    pooled = jnp.mean(y, axis=(1, 2))
    hv = jnp.maximum(pooled @ params["w1v"] + params["b1v"], 0.0)
    v = hv @ params["w2v"] + params["b2v"]
    ha = jnp.maximum(pooled @ params["w1a"] + params["b1a"], 0.0)
    a = ha @ params["w2a"] + params["b2a"]
    return v + (a - jnp.mean(a, axis=1, keepdims=True))


if __name__ == "__main__":
    key = jax.random.PRNGKey(0)
    kx, kp = jax.random.split(key)

    B, C, H, W = 2, 3, 16, 16
    x = jax.random.normal(kx, (B, C, H, W), jnp.float32)
    params = init_params(kp, input_channels=C, action_size=4, hidden_size=32)

    q = jax.block_until_ready(jax.jit(dqn_forward)(x, params))
    q_ref = jax.block_until_ready(ref_forward(x, params))

    assert q.shape == (B, 4), q.shape
    # bf16 MXU inputs (f32 accumulate / f32 GN stats): allow ~5e-2 drift vs f32 ref.
    err = float(jnp.max(jnp.abs(q - q_ref)))
    tol = 5e-2 * max(1.0, float(jnp.max(jnp.abs(q_ref))))
    assert err <= tol, (err, tol, q, q_ref)

    print("KERNEL_OK")
</pallas_src>

<mosaic_0001>
module attributes {stable_mosaic.version = 11 : i64} {
  func.func @_conv_gn_relu_kernel(%arg0: i32, %arg1: memref<256x27xbf16, #tpu.memory_space<vmem>>, %arg2: memref<27x128xbf16, #tpu.memory_space<vmem>>, %arg3: memref<1x128xf32, #tpu.memory_space<vmem>>, %arg4: memref<1x128xf32, #tpu.memory_space<vmem>>, %arg5: memref<1x128xf32, #tpu.memory_space<vmem>>, %arg6: memref<128x128xf32, #tpu.memory_space<vmem>>, %arg7: memref<1x256xf32, #tpu.memory_space<vmem>>, %arg8: memref<256x1xf32, #tpu.memory_space<vmem>>, %arg9: memref<256x32xbf16, #tpu.memory_space<vmem>>) attributes {dimension_semantics = [#tpu.dimension_semantics<parallel>], iteration_bounds = array<i64: 2>, scalar_prefetch = 0 : i64, scratch_operands = 0 : i64, tpu.core_type = #tpu.core_type<tc>, window_params = [{transform_indices = @transform_0, window_bounds = array<i64: 256, 27>}, {pipeline_mode = #tpu.pipeline_mode<synchronous>, transform_indices = @transform_1, window_bounds = array<i64: 27, 128>}, {pipeline_mode = #tpu.pipeline_mode<synchronous>, transform_indices = @transform_2, window_bounds = array<i64: 1, 128>}, {pipeline_mode = #tpu.pipeline_mode<synchronous>, transform_indices = @transform_3, window_bounds = array<i64: 1, 128>}, {pipeline_mode = #tpu.pipeline_mode<synchronous>, transform_indices = @transform_4, window_bounds = array<i64: 1, 128>}, {pipeline_mode = #tpu.pipeline_mode<synchronous>, transform_indices = @transform_5, window_bounds = array<i64: 128, 128>}, {pipeline_mode = #tpu.pipeline_mode<synchronous>, transform_indices = @transform_6, window_bounds = array<i64: 1, 256>}, {pipeline_mode = #tpu.pipeline_mode<synchronous>, transform_indices = @transform_7, window_bounds = array<i64: 256, 1>}, {transform_indices = @transform_8, window_bounds = array<i64: 256, 32>}]} {
    %c0 = arith.constant 0 : index
    %c0_0 = arith.constant 0 : index
    %0 = vector.load %arg1[%c0, %c0_0] : memref<256x27xbf16, #tpu.memory_space<vmem>>, vector<256x27xbf16>
    %c0_1 = arith.constant 0 : index
    %c0_2 = arith.constant 0 : index
    %1 = vector.load %arg2[%c0_1, %c0_2] : memref<27x128xbf16, #tpu.memory_space<vmem>>, vector<27x128xbf16>
    %cst = arith.constant dense<0.000000e+00> : vector<256x128xf32>
    %2 = tpu.matmul %0, %1, %cst {dimension_numbers = #tpu.dot_dimension_numbers<[1], [0], [0], [1], [0, 0, 1, 1], [], []>} : vector<256x27xbf16>, vector<27x128xbf16>, vector<256x128xf32> -> vector<256x128xf32>
    %c0_3 = arith.constant 0 : index
    %c0_4 = arith.constant 0 : index
    %3 = vector.load %arg3[%c0_3, %c0_4] : memref<1x128xf32, #tpu.memory_space<vmem>>, vector<1x128xf32>
    %4 = vector.broadcast %3 : vector<1x128xf32> to vector<256x128xf32>
    %5 = arith.addf %2, %4 : vector<256x128xf32>
    %c0_5 = arith.constant 0 : index
    %c0_6 = arith.constant 0 : index
    %6 = vector.load %arg4[%c0_5, %c0_6] : memref<1x128xf32, #tpu.memory_space<vmem>>, vector<1x128xf32>
    %c0_7 = arith.constant 0 : index
    %c0_8 = arith.constant 0 : index
    %7 = vector.load %arg5[%c0_7, %c0_8] : memref<1x128xf32, #tpu.memory_space<vmem>>, vector<1x128xf32>
    %c0_9 = arith.constant 0 : index
    %c0_10 = arith.constant 0 : index
    %8 = vector.load %arg6[%c0_9, %c0_10] : memref<128x128xf32, #tpu.memory_space<vmem>>, vector<128x128xf32>
    %c0_11 = arith.constant 0 : index
    %c0_12 = arith.constant 0 : index
    %9 = vector.load %arg7[%c0_11, %c0_12] : memref<1x256xf32, #tpu.memory_space<vmem>>, vector<1x256xf32>
    %cst_13 = arith.constant dense<0.000000e+00> : vector<1x128xf32>
    %10 = tpu.matmul %9, %5, %cst_13 {dimension_numbers = #tpu.dot_dimension_numbers<[1], [0], [0], [1], [0, 0, 1, 1], [], []>} : vector<1x256xf32>, vector<256x128xf32>, vector<1x128xf32> -> vector<1x128xf32>
    %cst_14 = arith.constant dense<0.000000e+00> : vector<1x128xf32>
    %11 = tpu.matmul %10, %8, %cst_14 {dimension_numbers = #tpu.dot_dimension_numbers<[1], [0], [0], [1], [0, 0, 1, 1], [], []>} : vector<1x128xf32>, vector<128x128xf32>, vector<1x128xf32> -> vector<1x128xf32>
    %cst_15 = arith.constant 9.765625E-4 : f32
    %12 = vector.broadcast %cst_15 : f32 to vector<1x128xf32>
    %13 = arith.mulf %11, %12 : vector<1x128xf32>
    %14 = vector.broadcast %13 : vector<1x128xf32> to vector<256x128xf32>
    %15 = arith.subf %5, %14 : vector<256x128xf32>
    %16 = arith.mulf %15, %15 : vector<256x128xf32>
    %cst_16 = arith.constant dense<0.000000e+00> : vector<1x128xf32>
    %17 = tpu.matmul %9, %16, %cst_16 {dimension_numbers = #tpu.dot_dimension_numbers<[1], [0], [0], [1], [0, 0, 1, 1], [], []>} : vector<1x256xf32>, vector<256x128xf32>, vector<1x128xf32> -> vector<1x128xf32>
    %cst_17 = arith.constant dense<0.000000e+00> : vector<1x128xf32>
    %18 = tpu.matmul %17, %8, %cst_17 {dimension_numbers = #tpu.dot_dimension_numbers<[1], [0], [0], [1], [0, 0, 1, 1], [], []>} : vector<1x128xf32>, vector<128x128xf32>, vector<1x128xf32> -> vector<1x128xf32>
    %cst_18 = arith.constant 9.765625E-4 : f32
    %19 = vector.broadcast %cst_18 : f32 to vector<1x128xf32>
    %20 = arith.mulf %18, %19 : vector<1x128xf32>
    %cst_19 = arith.constant 9.99999974E-6 : f32
    %21 = vector.broadcast %cst_19 : f32 to vector<1x128xf32>
    %22 = arith.addf %20, %21 : vector<1x128xf32>
    %23 = math.rsqrt %22 : vector<1x128xf32>
    %24 = arith.mulf %23, %6 : vector<1x128xf32>
    %25 = vector.broadcast %24 : vector<1x128xf32> to vector<256x128xf32>
    %26 = arith.mulf %15, %25 : vector<256x128xf32>
    %27 = vector.broadcast %7 : vector<1x128xf32> to vector<256x128xf32>
    %28 = arith.addf %26, %27 : vector<256x128xf32>
    %cst_20 = arith.constant 0.000000e+00 : f32
    %29 = vector.broadcast %cst_20 : f32 to vector<256x128xf32>
    %30 = arith.maximumf %28, %29 : vector<256x128xf32>
    %31 = vector.extract_strided_slice %30 {offsets = [0, 0], sizes = [256, 32], strides = [1, 1]} : vector<256x128xf32> to vector<256x32xf32>
    %32 = arith.truncf %31 : vector<256x32xf32> to vector<256x32xbf16>
    %c0_21 = arith.constant 0 : index
    %c0_22 = arith.constant 0 : index
    %33 = vector.load %arg9[%c0_21, %c0_22] : memref<256x32xbf16, #tpu.memory_space<vmem>>, vector<256x32xbf16>
    tpu.vector_store %arg9[%c0_21, %c0_22], %32 {strides = array<i32>} : memref<256x32xbf16, #tpu.memory_space<vmem>>, vector<256x32xbf16>,
    return
  }
  func.func @transform_0(%arg0: i32) -> (i32, i32) {
    %c0_i32 = arith.constant 0 : i32
    %c0_i32_0 = arith.constant 0 : i32
    return %arg0, %c0_i32 : i32, i32
  }
  func.func @transform_1(%arg0: i32) -> (i32, i32) {
    %c0_i32 = arith.constant 0 : i32
    %c0_i32_0 = arith.constant 0 : i32
    %c0_i32_1 = arith.constant 0 : i32
    return %c0_i32, %c0_i32_0 : i32, i32
  }
  func.func @transform_2(%arg0: i32) -> (i32, i32) {
    %c0_i32 = arith.constant 0 : i32
    %c0_i32_0 = arith.constant 0 : i32
    %c0_i32_1 = arith.constant 0 : i32
    return %c0_i32, %c0_i32_0 : i32, i32
  }
  func.func @transform_3(%arg0: i32) -> (i32, i32) {
    %c0_i32 = arith.constant 0 : i32
    %c0_i32_0 = arith.constant 0 : i32
    %c0_i32_1 = arith.constant 0 : i32
    return %c0_i32, %c0_i32_0 : i32, i32
  }
  func.func @transform_4(%arg0: i32) -> (i32, i32) {
    %c0_i32 = arith.constant 0 : i32
    %c0_i32_0 = arith.constant 0 : i32
    %c0_i32_1 = arith.constant 0 : i32
    return %c0_i32, %c0_i32_0 : i32, i32
  }
  func.func @transform_5(%arg0: i32) -> (i32, i32) {
    %c0_i32 = arith.constant 0 : i32
    %c0_i32_0 = arith.constant 0 : i32
    %c0_i32_1 = arith.constant 0 : i32
    return %c0_i32, %c0_i32_0 : i32, i32
  }
  func.func @transform_6(%arg0: i32) -> (i32, i32) {
    %c0_i32 = arith.constant 0 : i32
    %c0_i32_0 = arith.constant 0 : i32
    %c0_i32_1 = arith.constant 0 : i32
    return %c0_i32, %c0_i32_0 : i32, i32
  }
  func.func @transform_7(%arg0: i32) -> (i32, i32) {
    %c0_i32 = arith.constant 0 : i32
    %c0_i32_0 = arith.constant 0 : i32
    %c0_i32_1 = arith.constant 0 : i32
    return %c0_i32, %c0_i32_0 : i32, i32
  }
  func.func @transform_8(%arg0: i32) -> (i32, i32) {
    %c0_i32 = arith.constant 0 : i32
    %c0_i32_0 = arith.constant 0 : i32
    return %arg0, %c0_i32 : i32, i32
  }
}

module attributes {stable_mosaic.version = 11 : i64} {
  func.func @_conv_gn_relu_kernel(%arg0: i32, %arg1: memref<64x288xbf16, #tpu.memory_space<vmem>>, %arg2: memref<288x128xbf16, #tpu.memory_space<vmem>>, %arg3: memref<1x128xf32, #tpu.memory_space<vmem>>, %arg4: memref<1x128xf32, #tpu.memory_space<vmem>>, %arg5: memref<1x128xf32, #tpu.memory_space<vmem>>, %arg6: memref<128x128xf32, #tpu.memory_space<vmem>>, %arg7: memref<1x64xf32, #tpu.memory_space<vmem>>, %arg8: memref<64x1xf32, #tpu.memory_space<vmem>>, %arg9: memref<64x64xbf16, #tpu.memory_space<vmem>>) attributes {dimension_semantics = [#tpu.dimension_semantics<parallel>], iteration_bounds = array<i64: 2>, scalar_prefetch = 0 : i64, scratch_operands = 0 : i64, tpu.core_type = #tpu.core_type<tc>, window_params = [{transform_indices = @transform_0, window_bounds = array<i64: 64, 288>}, {pipeline_mode = #tpu.pipeline_mode<synchronous>, transform_indices = @transform_1, window_bounds = array<i64: 288, 128>}, {pipeline_mode = #tpu.pipeline_mode<synchronous>, transform_indices = @transform_2, window_bounds = array<i64: 1, 128>}, {pipeline_mode = #tpu.pipeline_mode<synchronous>, transform_indices = @transform_3, window_bounds = array<i64: 1, 128>}, {pipeline_mode = #tpu.pipeline_mode<synchronous>, transform_indices = @transform_4, window_bounds = array<i64: 1, 128>}, {pipeline_mode = #tpu.pipeline_mode<synchronous>, transform_indices = @transform_5, window_bounds = array<i64: 128, 128>}, {pipeline_mode = #tpu.pipeline_mode<synchronous>, transform_indices = @transform_6, window_bounds = array<i64: 1, 64>}, {pipeline_mode = #tpu.pipeline_mode<synchronous>, transform_indices = @transform_7, window_bounds = array<i64: 64, 1>}, {transform_indices = @transform_8, window_bounds = array<i64: 64, 64>}]} {
    %c0 = arith.constant 0 : index
    %c0_0 = arith.constant 0 : index
    %0 = vector.load %arg1[%c0, %c0_0] : memref<64x288xbf16, #tpu.memory_space<vmem>>, vector<64x288xbf16>
    %c0_1 = arith.constant 0 : index
    %c0_2 = arith.constant 0 : index
    %1 = vector.load %arg2[%c0_1, %c0_2] : memref<288x128xbf16, #tpu.memory_space<vmem>>, vector<288x128xbf16>
    %cst = arith.constant dense<0.000000e+00> : vector<64x128xf32>
    %2 = tpu.matmul %0, %1, %cst {dimension_numbers = #tpu.dot_dimension_numbers<[1], [0], [0], [1], [0, 0, 1, 1], [], []>} : vector<64x288xbf16>, vector<288x128xbf16>, vector<64x128xf32> -> vector<64x128xf32>
    %c0_3 = arith.constant 0 : index
    %c0_4 = arith.constant 0 : index
    %3 = vector.load %arg3[%c0_3, %c0_4] : memref<1x128xf32, #tpu.memory_space<vmem>>, vector<1x128xf32>
    %4 = vector.broadcast %3 : vector<1x128xf32> to vector<64x128xf32>
    %5 = arith.addf %2, %4 : vector<64x128xf32>
    %c0_5 = arith.constant 0 : index
    %c0_6 = arith.constant 0 : index
    %6 = vector.load %arg4[%c0_5, %c0_6] : memref<1x128xf32, #tpu.memory_space<vmem>>, vector<1x128xf32>
    %c0_7 = arith.constant 0 : index
    %c0_8 = arith.constant 0 : index
    %7 = vector.load %arg5[%c0_7, %c0_8] : memref<1x128xf32, #tpu.memory_space<vmem>>, vector<1x128xf32>
    %c0_9 = arith.constant 0 : index
    %c0_10 = arith.constant 0 : index
    %8 = vector.load %arg6[%c0_9, %c0_10] : memref<128x128xf32, #tpu.memory_space<vmem>>, vector<128x128xf32>
    %c0_11 = arith.constant 0 : index
    %c0_12 = arith.constant 0 : index
    %9 = vector.load %arg7[%c0_11, %c0_12] : memref<1x64xf32, #tpu.memory_space<vmem>>, vector<1x64xf32>
    %cst_13 = arith.constant dense<0.000000e+00> : vector<1x128xf32>
    %10 = tpu.matmul %9, %5, %cst_13 {dimension_numbers = #tpu.dot_dimension_numbers<[1], [0], [0], [1], [0, 0, 1, 1], [], []>} : vector<1x64xf32>, vector<64x128xf32>, vector<1x128xf32> -> vector<1x128xf32>
    %cst_14 = arith.constant dense<0.000000e+00> : vector<1x128xf32>
    %11 = tpu.matmul %10, %8, %cst_14 {dimension_numbers = #tpu.dot_dimension_numbers<[1], [0], [0], [1], [0, 0, 1, 1], [], []>} : vector<1x128xf32>, vector<128x128xf32>, vector<1x128xf32> -> vector<1x128xf32>
    %cst_15 = arith.constant 0.001953125 : f32
    %12 = vector.broadcast %cst_15 : f32 to vector<1x128xf32>
    %13 = arith.mulf %11, %12 : vector<1x128xf32>
    %14 = vector.broadcast %13 : vector<1x128xf32> to vector<64x128xf32>
    %15 = arith.subf %5, %14 : vector<64x128xf32>
    %16 = arith.mulf %15, %15 : vector<64x128xf32>
    %cst_16 = arith.constant dense<0.000000e+00> : vector<1x128xf32>
    %17 = tpu.matmul %9, %16, %cst_16 {dimension_numbers = #tpu.dot_dimension_numbers<[1], [0], [0], [1], [0, 0, 1, 1], [], []>} : vector<1x64xf32>, vector<64x128xf32>, vector<1x128xf32> -> vector<1x128xf32>
    %cst_17 = arith.constant dense<0.000000e+00> : vector<1x128xf32>
    %18 = tpu.matmul %17, %8, %cst_17 {dimension_numbers = #tpu.dot_dimension_numbers<[1], [0], [0], [1], [0, 0, 1, 1], [], []>} : vector<1x128xf32>, vector<128x128xf32>, vector<1x128xf32> -> vector<1x128xf32>
    %cst_18 = arith.constant 0.001953125 : f32
    %19 = vector.broadcast %cst_18 : f32 to vector<1x128xf32>
    %20 = arith.mulf %18, %19 : vector<1x128xf32>
    %cst_19 = arith.constant 9.99999974E-6 : f32
    %21 = vector.broadcast %cst_19 : f32 to vector<1x128xf32>
    %22 = arith.addf %20, %21 : vector<1x128xf32>
    %23 = math.rsqrt %22 : vector<1x128xf32>
    %24 = arith.mulf %23, %6 : vector<1x128xf32>
    %25 = vector.broadcast %24 : vector<1x128xf32> to vector<64x128xf32>
    %26 = arith.mulf %15, %25 : vector<64x128xf32>
    %27 = vector.broadcast %7 : vector<1x128xf32> to vector<64x128xf32>
    %28 = arith.addf %26, %27 : vector<64x128xf32>
    %cst_20 = arith.constant 0.000000e+00 : f32
    %29 = vector.broadcast %cst_20 : f32 to vector<64x128xf32>
    %30 = arith.maximumf %28, %29 : vector<64x128xf32>
    %31 = vector.extract_strided_slice %30 {offsets = [0, 0], sizes = [64, 64], strides = [1, 1]} : vector<64x128xf32> to vector<64x64xf32>
    %32 = arith.truncf %31 : vector<64x64xf32> to vector<64x64xbf16>
    %c0_21 = arith.constant 0 : index
    %c0_22 = arith.constant 0 : index
    %33 = vector.load %arg9[%c0_21, %c0_22] : memref<64x64xbf16, #tpu.memory_space<vmem>>, vector<64x64xbf16>
    tpu.vector_store %arg9[%c0_21, %c0_22], %32 {strides = array<i32>} : memref<64x64xbf16, #tpu.memory_space<vmem>>, vector<64x64xbf16>,
    return
  }
  func.func @transform_0(%arg0: i32) -> (i32, i32) {
    %c0_i32 = arith.constant 0 : i32
    %c0_i32_0 = arith.constant 0 : i32
    return %arg0, %c0_i32 : i32, i32
  }
  func.func @transform_1(%arg0: i32) -> (i32, i32) {
    %c0_i32 = arith.constant 0 : i32
    %c0_i32_0 = arith.constant 0 : i32
    %c0_i32_1 = arith.constant 0 : i32
    return %c0_i32, %c0_i32_0 : i32, i32
  }
  func.func @transform_2(%arg0: i32) -> (i32, i32) {
    %c0_i32 = arith.constant 0 : i32
    %c0_i32_0 = arith.constant 0 : i32
    %c0_i32_1 = arith.constant 0 : i32
    return %c0_i32, %c0_i32_0 : i32, i32
  }
  func.func @transform_3(%arg0: i32) -> (i32, i32) {
    %c0_i32 = arith.constant 0 : i32
    %c0_i32_0 = arith.constant 0 : i32
    %c0_i32_1 = arith.constant 0 : i32
    return %c0_i32, %c0_i32_0 : i32, i32
  }
  func.func @transform_4(%arg0: i32) -> (i32, i32) {
    %c0_i32 = arith.constant 0 : i32
    %c0_i32_0 = arith.constant 0 : i32
    %c0_i32_1 = arith.constant 0 : i32
    return %c0_i32, %c0_i32_0 : i32, i32
  }
  func.func @transform_5(%arg0: i32) -> (i32, i32) {
    %c0_i32 = arith.constant 0 : i32
    %c0_i32_0 = arith.constant 0 : i32
    %c0_i32_1 = arith.constant 0 : i32
    return %c0_i32, %c0_i32_0 : i32, i32
  }
  func.func @transform_6(%arg0: i32) -> (i32, i32) {
    %c0_i32 = arith.constant 0 : i32
    %c0_i32_0 = arith.constant 0 : i32
    %c0_i32_1 = arith.constant 0 : i32
    return %c0_i32, %c0_i32_0 : i32, i32
  }
  func.func @transform_7(%arg0: i32) -> (i32, i32) {
    %c0_i32 = arith.constant 0 : i32
    %c0_i32_0 = arith.constant 0 : i32
    %c0_i32_1 = arith.constant 0 : i32
    return %c0_i32, %c0_i32_0 : i32, i32
  }
  func.func @transform_8(%arg0: i32) -> (i32, i32) {
    %c0_i32 = arith.constant 0 : i32
    %c0_i32_0 = arith.constant 0 : i32
    return %arg0, %c0_i32 : i32, i32
  }
}

module attributes {stable_mosaic.version = 11 : i64} {
  func.func @_conv3_pool_head_kernel(%arg0: i32, %arg1: memref<32x576xbf16, #tpu.memory_space<vmem>>, %arg2: memref<576x128xbf16, #tpu.memory_space<vmem>>, %arg3: memref<1x128xf32, #tpu.memory_space<vmem>>, %arg4: memref<1x128xf32, #tpu.memory_space<vmem>>, %arg5: memref<1x128xf32, #tpu.memory_space<vmem>>, %arg6: memref<128x128xf32, #tpu.memory_space<vmem>>, %arg7: memref<2x32xf32, #tpu.memory_space<vmem>>, %arg8: memref<32x2xf32, #tpu.memory_space<vmem>>, %arg9: memref<128x128xbf16, #tpu.memory_space<vmem>>, %arg10: memref<1x128xf32, #tpu.memory_space<vmem>>, %arg11: memref<128x128xbf16, #tpu.memory_space<vmem>>, %arg12: memref<1x128xf32, #tpu.memory_space<vmem>>, %arg13: memref<2x128xf32, #tpu.memory_space<vmem>>) attributes {dimension_semantics = [#tpu.dimension_semantics<parallel>], iteration_bounds = array<i64: 1>, scalar_prefetch = 0 : i64, scratch_operands = 0 : i64, tpu.core_type = #tpu.core_type<tc>, window_params = [{transform_indices = @transform_0, window_bounds = array<i64: 32, 576>}, {pipeline_mode = #tpu.pipeline_mode<synchronous>, transform_indices = @transform_1, window_bounds = array<i64: 576, 128>}, {pipeline_mode = #tpu.pipeline_mode<synchronous>, transform_indices = @transform_2, window_bounds = array<i64: 1, 128>}, {pipeline_mode = #tpu.pipeline_mode<synchronous>, transform_indices = @transform_3, window_bounds = array<i64: 1, 128>}, {pipeline_mode = #tpu.pipeline_mode<synchronous>, transform_indices = @transform_4, window_bounds = array<i64: 1, 128>}, {pipeline_mode = #tpu.pipeline_mode<synchronous>, transform_indices = @transform_5, window_bounds = array<i64: 128, 128>}, {pipeline_mode = #tpu.pipeline_mode<synchronous>, transform_indices = @transform_6, window_bounds = array<i64: 2, 32>}, {pipeline_mode = #tpu.pipeline_mode<synchronous>, transform_indices = @transform_7, window_bounds = array<i64: 32, 2>}, {pipeline_mode = #tpu.pipeline_mode<synchronous>, transform_indices = @transform_8, window_bounds = array<i64: 128, 128>}, {pipeline_mode = #tpu.pipeline_mode<synchronous>, transform_indices = @transform_9, window_bounds = array<i64: 1, 128>}, {pipeline_mode = #tpu.pipeline_mode<synchronous>, transform_indices = @transform_10, window_bounds = array<i64: 128, 128>}, {pipeline_mode = #tpu.pipeline_mode<synchronous>, transform_indices = @transform_11, window_bounds = array<i64: 1, 128>}, {transform_indices = @transform_12, window_bounds = array<i64: 2, 128>}]} {
    %c0 = arith.constant 0 : index
    %c0_0 = arith.constant 0 : index
    %0 = vector.load %arg1[%c0, %c0_0] : memref<32x576xbf16, #tpu.memory_space<vmem>>, vector<32x576xbf16>
    %c0_1 = arith.constant 0 : index
    %c0_2 = arith.constant 0 : index
    %1 = vector.load %arg2[%c0_1, %c0_2] : memref<576x128xbf16, #tpu.memory_space<vmem>>, vector<576x128xbf16>
    %cst = arith.constant dense<0.000000e+00> : vector<32x128xf32>
    %2 = tpu.matmul %0, %1, %cst {dimension_numbers = #tpu.dot_dimension_numbers<[1], [0], [0], [1], [0, 0, 1, 1], [], []>} : vector<32x576xbf16>, vector<576x128xbf16>, vector<32x128xf32> -> vector<32x128xf32>
    %c0_3 = arith.constant 0 : index
    %c0_4 = arith.constant 0 : index
    %3 = vector.load %arg3[%c0_3, %c0_4] : memref<1x128xf32, #tpu.memory_space<vmem>>, vector<1x128xf32>
    %4 = vector.broadcast %3 : vector<1x128xf32> to vector<32x128xf32>
    %5 = arith.addf %2, %4 : vector<32x128xf32>
    %c0_5 = arith.constant 0 : index
    %c0_6 = arith.constant 0 : index
    %6 = vector.load %arg4[%c0_5, %c0_6] : memref<1x128xf32, #tpu.memory_space<vmem>>, vector<1x128xf32>
    %c0_7 = arith.constant 0 : index
    %c0_8 = arith.constant 0 : index
    %7 = vector.load %arg5[%c0_7, %c0_8] : memref<1x128xf32, #tpu.memory_space<vmem>>, vector<1x128xf32>
    %c0_9 = arith.constant 0 : index
    %c0_10 = arith.constant 0 : index
    %8 = vector.load %arg6[%c0_9, %c0_10] : memref<128x128xf32, #tpu.memory_space<vmem>>, vector<128x128xf32>
    %c0_11 = arith.constant 0 : index
    %c0_12 = arith.constant 0 : index
    %9 = vector.load %arg7[%c0_11, %c0_12] : memref<2x32xf32, #tpu.memory_space<vmem>>, vector<2x32xf32>
    %c0_13 = arith.constant 0 : index
    %c0_14 = arith.constant 0 : index
    %10 = vector.load %arg8[%c0_13, %c0_14] : memref<32x2xf32, #tpu.memory_space<vmem>>, vector<32x2xf32>
    %cst_15 = arith.constant dense<0.000000e+00> : vector<2x128xf32>
    %11 = tpu.matmul %9, %5, %cst_15 {dimension_numbers = #tpu.dot_dimension_numbers<[1], [0], [0], [1], [0, 0, 1, 1], [], []>} : vector<2x32xf32>, vector<32x128xf32>, vector<2x128xf32> -> vector<2x128xf32>
    %cst_16 = arith.constant dense<0.000000e+00> : vector<2x128xf32>
    %12 = tpu.matmul %11, %8, %cst_16 {dimension_numbers = #tpu.dot_dimension_numbers<[1], [0], [0], [1], [0, 0, 1, 1], [], []>} : vector<2x128xf32>, vector<128x128xf32>, vector<2x128xf32> -> vector<2x128xf32>
    %cst_17 = arith.constant 7.812500e-03 : f32
    %13 = vector.broadcast %cst_17 : f32 to vector<2x128xf32>
    %14 = arith.mulf %12, %13 : vector<2x128xf32>
    %cst_18 = arith.constant dense<0.000000e+00> : vector<32x128xf32>
    %15 = tpu.matmul %10, %14, %cst_18 {dimension_numbers = #tpu.dot_dimension_numbers<[1], [0], [0], [1], [0, 0, 1, 1], [], []>} : vector<32x2xf32>, vector<2x128xf32>, vector<32x128xf32> -> vector<32x128xf32>
    %16 = arith.subf %5, %15 : vector<32x128xf32>
    %17 = arith.mulf %16, %16 : vector<32x128xf32>
    %cst_19 = arith.constant dense<0.000000e+00> : vector<2x128xf32>
    %18 = tpu.matmul %9, %17, %cst_19 {dimension_numbers = #tpu.dot_dimension_numbers<[1], [0], [0], [1], [0, 0, 1, 1], [], []>} : vector<2x32xf32>, vector<32x128xf32>, vector<2x128xf32> -> vector<2x128xf32>
    %cst_20 = arith.constant dense<0.000000e+00> : vector<2x128xf32>
    %19 = tpu.matmul %18, %8, %cst_20 {dimension_numbers = #tpu.dot_dimension_numbers<[1], [0], [0], [1], [0, 0, 1, 1], [], []>} : vector<2x128xf32>, vector<128x128xf32>, vector<2x128xf32> -> vector<2x128xf32>
    %cst_21 = arith.constant 7.812500e-03 : f32
    %20 = vector.broadcast %cst_21 : f32 to vector<2x128xf32>
    %21 = arith.mulf %19, %20 : vector<2x128xf32>
    %cst_22 = arith.constant 9.99999974E-6 : f32
    %22 = vector.broadcast %cst_22 : f32 to vector<2x128xf32>
    %23 = arith.addf %21, %22 : vector<2x128xf32>
    %24 = math.rsqrt %23 : vector<2x128xf32>
    %25 = vector.broadcast %6 : vector<1x128xf32> to vector<2x128xf32>
    %26 = arith.mulf %24, %25 : vector<2x128xf32>
    %cst_23 = arith.constant dense<0.000000e+00> : vector<32x128xf32>
    %27 = tpu.matmul %10, %26, %cst_23 {dimension_numbers = #tpu.dot_dimension_numbers<[1], [0], [0], [1], [0, 0, 1, 1], [], []>} : vector<32x2xf32>, vector<2x128xf32>, vector<32x128xf32> -> vector<32x128xf32>
    %28 = arith.mulf %16, %27 : vector<32x128xf32>
    %29 = vector.broadcast %7 : vector<1x128xf32> to vector<32x128xf32>
    %30 = arith.addf %28, %29 : vector<32x128xf32>
    %cst_24 = arith.constant 0.000000e+00 : f32
    %31 = vector.broadcast %cst_24 : f32 to vector<32x128xf32>
    %32 = arith.maximumf %30, %31 : vector<32x128xf32>
    %c0_25 = arith.constant 0 : index
    %c0_26 = arith.constant 0 : index
    %33 = vector.load %arg7[%c0_25, %c0_26] : memref<2x32xf32, #tpu.memory_space<vmem>>, vector<2x32xf32>
    %cst_27 = arith.constant dense<0.000000e+00> : vector<2x128xf32>
    %34 = tpu.matmul %33, %32, %cst_27 {dimension_numbers = #tpu.dot_dimension_numbers<[1], [0], [0], [1], [0, 0, 1, 1], [], []>} : vector<2x32xf32>, vector<32x128xf32>, vector<2x128xf32> -> vector<2x128xf32>
    %cst_28 = arith.constant 6.250000e-02 : f32
    %35 = vector.broadcast %cst_28 : f32 to vector<2x128xf32>
    %36 = arith.mulf %34, %35 : vector<2x128xf32>
    %37 = arith.truncf %36 : vector<2x128xf32> to vector<2x128xbf16>
    %c0_29 = arith.constant 0 : index
    %c0_30 = arith.constant 0 : index
    %38 = vector.load %arg9[%c0_29, %c0_30] : memref<128x128xbf16, #tpu.memory_space<vmem>>, vector<128x128xbf16>
    %cst_31 = arith.constant dense<0.000000e+00> : vector<2x128xf32>
    %39 = tpu.matmul %37, %38, %cst_31 {dimension_numbers = #tpu.dot_dimension_numbers<[1], [0], [0], [1], [0, 0, 1, 1], [], []>} : vector<2x128xbf16>, vector<128x128xbf16>, vector<2x128xf32> -> vector<2x128xf32>
    %c0_32 = arith.constant 0 : index
    %c0_33 = arith.constant 0 : index
    %40 = vector.load %arg10[%c0_32, %c0_33] : memref<1x128xf32, #tpu.memory_space<vmem>>, vector<1x128xf32>
    %41 = vector.broadcast %40 : vector<1x128xf32> to vector<2x128xf32>
    %42 = arith.addf %39, %41 : vector<2x128xf32>
    %cst_34 = arith.constant 0.000000e+00 : f32
    %43 = vector.broadcast %cst_34 : f32 to vector<2x128xf32>
    %44 = arith.maximumf %42, %43 : vector<2x128xf32>
    %45 = arith.truncf %44 : vector<2x128xf32> to vector<2x128xbf16>
    %c0_35 = arith.constant 0 : index
    %c0_36 = arith.constant 0 : index
    %46 = vector.load %arg11[%c0_35, %c0_36] : memref<128x128xbf16, #tpu.memory_space<vmem>>, vector<128x128xbf16>
    %cst_37 = arith.constant dense<0.000000e+00> : vector<2x128xf32>
    %47 = tpu.matmul %45, %46, %cst_37 {dimension_numbers = #tpu.dot_dimension_numbers<[1], [0], [0], [1], [0, 0, 1, 1], [], []>} : vector<2x128xbf16>, vector<128x128xbf16>, vector<2x128xf32> -> vector<2x128xf32>
    %c0_38 = arith.constant 0 : index
    %c0_39 = arith.constant 0 : index
    %48 = vector.load %arg12[%c0_38, %c0_39] : memref<1x128xf32, #tpu.memory_space<vmem>>, vector<1x128xf32>
    %49 = vector.broadcast %48 : vector<1x128xf32> to vector<2x128xf32>
    %50 = arith.addf %47, %49 : vector<2x128xf32>
    %c0_40 = arith.constant 0 : index
    %c0_41 = arith.constant 0 : index
    %51 = vector.load %arg13[%c0_40, %c0_41] : memref<2x128xf32, #tpu.memory_space<vmem>>, vector<2x128xf32>
    tpu.vector_store %arg13[%c0_40, %c0_41], %50 {strides = array<i32>} : memref<2x128xf32, #tpu.memory_space<vmem>>, vector<2x128xf32>,
    return
  }
  func.func @transform_0(%arg0: i32) -> (i32, i32) {
    %c0_i32 = arith.constant 0 : i32
    %c0_i32_0 = arith.constant 0 : i32
    return %arg0, %c0_i32 : i32, i32
  }
  func.func @transform_1(%arg0: i32) -> (i32, i32) {
    %c0_i32 = arith.constant 0 : i32
    %c0_i32_0 = arith.constant 0 : i32
    %c0_i32_1 = arith.constant 0 : i32
    return %c0_i32, %c0_i32_0 : i32, i32
  }
  func.func @transform_2(%arg0: i32) -> (i32, i32) {
    %c0_i32 = arith.constant 0 : i32
    %c0_i32_0 = arith.constant 0 : i32
    %c0_i32_1 = arith.constant 0 : i32
    return %c0_i32, %c0_i32_0 : i32, i32
  }
  func.func @transform_3(%arg0: i32) -> (i32, i32) {
    %c0_i32 = arith.constant 0 : i32
    %c0_i32_0 = arith.constant 0 : i32
    %c0_i32_1 = arith.constant 0 : i32
    return %c0_i32, %c0_i32_0 : i32, i32
  }
  func.func @transform_4(%arg0: i32) -> (i32, i32) {
    %c0_i32 = arith.constant 0 : i32
    %c0_i32_0 = arith.constant 0 : i32
    %c0_i32_1 = arith.constant 0 : i32
    return %c0_i32, %c0_i32_0 : i32, i32
  }
  func.func @transform_5(%arg0: i32) -> (i32, i32) {
    %c0_i32 = arith.constant 0 : i32
    %c0_i32_0 = arith.constant 0 : i32
    %c0_i32_1 = arith.constant 0 : i32
    return %c0_i32, %c0_i32_0 : i32, i32
  }
  func.func @transform_6(%arg0: i32) -> (i32, i32) {
    %c0_i32 = arith.constant 0 : i32
    %c0_i32_0 = arith.constant 0 : i32
    %c0_i32_1 = arith.constant 0 : i32
    return %c0_i32, %c0_i32_0 : i32, i32
  }
  func.func @transform_7(%arg0: i32) -> (i32, i32) {
    %c0_i32 = arith.constant 0 : i32
    %c0_i32_0 = arith.constant 0 : i32
    %c0_i32_1 = arith.constant 0 : i32
    return %c0_i32, %c0_i32_0 : i32, i32
  }
  func.func @transform_8(%arg0: i32) -> (i32, i32) {
    %c0_i32 = arith.constant 0 : i32
    %c0_i32_0 = arith.constant 0 : i32
    %c0_i32_1 = arith.constant 0 : i32
    return %c0_i32, %c0_i32_0 : i32, i32
  }
  func.func @transform_9(%arg0: i32) -> (i32, i32) {
    %c0_i32 = arith.constant 0 : i32
    %c0_i32_0 = arith.constant 0 : i32
    %c0_i32_1 = arith.constant 0 : i32
    return %c0_i32, %c0_i32_0 : i32, i32
  }
  func.func @transform_10(%arg0: i32) -> (i32, i32) {
    %c0_i32 = arith.constant 0 : i32
    %c0_i32_0 = arith.constant 0 : i32
    %c0_i32_1 = arith.constant 0 : i32
    return %c0_i32, %c0_i32_0 : i32, i32
  }
  func.func @transform_11(%arg0: i32) -> (i32, i32) {
    %c0_i32 = arith.constant 0 : i32
    %c0_i32_0 = arith.constant 0 : i32
    %c0_i32_1 = arith.constant 0 : i32
    return %c0_i32, %c0_i32_0 : i32, i32
  }
  func.func @transform_12(%arg0: i32) -> (i32, i32) {
    %c0_i32 = arith.constant 0 : i32
    %c0_i32_0 = arith.constant 0 : i32
    return %arg0, %c0_i32 : i32, i32
  }
}

</mosaic_0001>

<llo_original>
// kernel: dqn_forward.3
$region0: #{dqn_forward.3}
  #allocation0 [shape = 'u32[]', space=smem, size = 0x4, offset = 0x4, fixed_abs, tag = 'smem constant byte address 0x4 - core index']
  #allocation1 [shape = 'u32[72,128]{1,0:T(1,128)}', space=vmem, size = 0x9000, scoped, tag = 'internal scratch']
  %s0 = inlined_call_operand.vmem [shape: bf16[512,27], index: 0, kind: input, shape index: {}]
  %s1 = inlined_call_operand.vmem [shape: bf16[27,128], index: 1, kind: input, shape index: {}]
  %s2 = inlined_call_operand.vmem [shape: f32[1,128], index: 2, kind: input, shape index: {}]
  %s3 = inlined_call_operand.vmem [shape: f32[1,128], index: 3, kind: input, shape index: {}]
  %s4 = inlined_call_operand.vmem [shape: f32[1,128], index: 4, kind: input, shape index: {}]
  %s5 = inlined_call_operand.vmem [shape: f32[128,128], index: 5, kind: input, shape index: {}]
  %s6 = inlined_call_operand.vmem [shape: f32[1,256], index: 6, kind: input, shape index: {}]
  %s7 = inlined_call_operand.vmem [shape: f32[256,1], index: 7, kind: input, shape index: {}]
  %s8 = inlined_call_operand.vmem [shape: bf16[512,32], index: 8, kind: output, shape index: {}]
  %s9 = sld [smem:[#allocation0]]
  $region65: #{dqn_forward.3} parent=0
    _
  %s11 = ssub.s32 1, %s9
  %s12 = scalar_select 0, %s11, %s9
  loop: start=0, step=1, limit=4
  $region2: #{dqn_forward.3} parent=0 // loop_pre_header
    _
  $region3: #{dqn_forward.3} parent=0 // loop_header
    %s14 = sphi 0, %s18
    %p15 = scmp.ge.s32.totalorder %s14, 4
    %s24 = sphi 0, %s26
    %s27 = sphi 0, %s24
    %s28 = sphi 0, %s27
    %s44 = sphi 0, %s28
    %s48 = sphi 0, %s48
    %s50 = sphi 0, %s48
    %s51 = sphi 0, %s50
    %s65 = sphi 0, %s51
    %s69 = sphi 0, %s69
    %s71 = sphi 0, %s69
    %s72 = sphi 0, %s71
    %s86 = sphi 0, %s72
    %s90 = sphi 0, %s90
    %s92 = sphi 0, %s90
    %s93 = sphi 0, %s92
    %s107 = sphi 0, %s93
    %s111 = sphi 0, %s111
    %s113 = sphi 0, %s111
    %s114 = sphi 0, %s113
    %s128 = sphi 0, %s114
    %s132 = sphi 0, %s132
    %s134 = sphi 0, %s132
    %s135 = sphi 0, %s134
    %s149 = sphi 0, %s135
    %s153 = sphi 0, %s153
    %s155 = sphi 0, %s153
    %s156 = sphi 0, %s155
    %s170 = sphi 0, %s156
    %s174 = sphi 0, %s174
    %s176 = sphi 0, %s174
    %s177 = sphi 0, %s176
    %s191 = sphi 0, %s177
    %s197 = sphi 0, %s199
    %s200 = sphi 0, %s197
    %s201 = sphi 0, %s200
    %s217 = sphi 0, %s201
  $region4: #{dqn_forward.3} parent=0 // loop_header_branch
    %17 = sbr.rel (%p15) target = $region8
  $region5: #{dqn_forward.3} parent=0 // loop_body
    %s19 = ssub.s32 %s14, 1
    %s20 = ssub.s32 %s14, 2
    %s21 = sadd.s32 %s14, 1
    %s22 = ssub.s32 %s14, %s21
    %p23 = scmp.eq.s32.totalorder %s22, 0
    %s25 = sadd.s32 %s24, 1
    %s26 = scalar_select %p23, %s24, %s25
    %p29 = pneg %p23
    %p30 = scmp.eq.s32.totalorder %s14, 1
    %p31 = por %p29, %p30
    %p32 = scmp.ne.s32.totalorder %s24, %s27
    %p33 = scmp.eq.s32.totalorder %s14, 0
    %p34 = por %p32, %p33
    %p35 = scmp.ne.s32.totalorder %s24, %s27
    %p36 = scmp.eq.s32.totalorder %s19, 1
    %p37 = por %p35, %p36
    %p38 = scmp.ne.s32.totalorder %s27, %s28
    %p39 = scmp.eq.s32.totalorder %s19, 0
    %p40 = por %p38, %p39
    %p41 = scmp.ne.s32.totalorder %s27, %s28
    %p42 = scmp.eq.s32.totalorder %s20, 1
    %p43 = por %p41, %p42
    %p45 = scmp.ne.s32.totalorder %s28, %s44
    %p46 = scmp.eq.s32.totalorder %s20, 0
    %p47 = por %p45, %p46
    %s49 = sadd.s32 %s48, 1
    %p52 = scmp.eq.s32.totalorder %s14, 1
    %p53 = scmp.ne.s32.totalorder %s48, %s50
    %p54 = scmp.eq.s32.totalorder %s14, 0
    %p55 = por %p53, %p54
    %p56 = scmp.ne.s32.totalorder %s48, %s50
    %p57 = scmp.eq.s32.totalorder %s19, 1
    %p58 = por %p56, %p57
    %p59 = scmp.ne.s32.totalorder %s50, %s51
    %p60 = scmp.eq.s32.totalorder %s19, 0
    %p61 = por %p59, %p60
    %p62 = scmp.ne.s32.totalorder %s50, %s51
    %p63 = scmp.eq.s32.totalorder %s20, 1
    %p64 = por %p62, %p63
    %p66 = scmp.ne.s32.totalorder %s51, %s65
    %p67 = scmp.eq.s32.totalorder %s20, 0
    %p68 = por %p66, %p67
    %s70 = sadd.s32 %s69, 1
    %p73 = scmp.eq.s32.totalorder %s14, 1
    %p74 = scmp.ne.s32.totalorder %s69, %s71
    %p75 = scmp.eq.s32.totalorder %s14, 0
    %p76 = por %p74, %p75
    %p77 = scmp.ne.s32.totalorder %s69, %s71
    %p78 = scmp.eq.s32.totalorder %s19, 1
    %p79 = por %p77, %p78
    %p80 = scmp.ne.s32.totalorder %s71, %s72
    %p81 = scmp.eq.s32.totalorder %s19, 0
    %p82 = por %p80, %p81
    %p83 = scmp.ne.s32.totalorder %s71, %s72
    %p84 = scmp.eq.s32.totalorder %s20, 1
    %p85 = por %p83, %p84
    %p87 = scmp.ne.s32.totalorder %s72, %s86
    %p88 = scmp.eq.s32.totalorder %s20, 0
    %p89 = por %p87, %p88
    %s91 = sadd.s32 %s90, 1
    %p94 = scmp.eq.s32.totalorder %s14, 1
    %p95 = scmp.ne.s32.totalorder %s90, %s92
    %p96 = scmp.eq.s32.totalorder %s14, 0
    %p97 = por %p95, %p96
    %p98 = scmp.ne.s32.totalorder %s90, %s92
    %p99 = scmp.eq.s32.totalorder %s19, 1
    %p100 = por %p98, %p99
    %p101 = scmp.ne.s32.totalorder %s92, %s93
    %p102 = scmp.eq.s32.totalorder %s19, 0
    %p103 = por %p101, %p102
    %p104 = scmp.ne.s32.totalorder %s92, %s93
    %p105 = scmp.eq.s32.totalorder %s20, 1
    %p106 = por %p104, %p105
    %p108 = scmp.ne.s32.totalorder %s93, %s107
    %p109 = scmp.eq.s32.totalorder %s20, 0
    %p110 = por %p108, %p109
    %s112 = sadd.s32 %s111, 1
    %p115 = scmp.eq.s32.totalorder %s14, 1
    %p116 = scmp.ne.s32.totalorder %s111, %s113
    %p117 = scmp.eq.s32.totalorder %s14, 0
    %p118 = por %p116, %p117
    %p119 = scmp.ne.s32.totalorder %s111, %s113
    %p120 = scmp.eq.s32.totalorder %s19, 1
    %p121 = por %p119, %p120
    %p122 = scmp.ne.s32.totalorder %s113, %s114
    %p123 = scmp.eq.s32.totalorder %s19, 0
    %p124 = por %p122, %p123
    %p125 = scmp.ne.s32.totalorder %s113, %s114
    %p126 = scmp.eq.s32.totalorder %s20, 1
    %p127 = por %p125, %p126
    %p129 = scmp.ne.s32.totalorder %s114, %s128
    %p130 = scmp.eq.s32.totalorder %s20, 0
    %p131 = por %p129, %p130
    %s133 = sadd.s32 %s132, 1
    %p136 = scmp.eq.s32.totalorder %s14, 1
    %p137 = scmp.ne.s32.totalorder %s132, %s134
    %p138 = scmp.eq.s32.totalorder %s14, 0
    %p139 = por %p137, %p138
    %p140 = scmp.ne.s32.totalorder %s132, %s134
    %p141 = scmp.eq.s32.totalorder %s19, 1
    %p142 = por %p140, %p141
    %p143 = scmp.ne.s32.totalorder %s134, %s135
    %p144 = scmp.eq.s32.totalorder %s19, 0
    %p145 = por %p143, %p144
    %p146 = scmp.ne.s32.totalorder %s134, %s135
    %p147 = scmp.eq.s32.totalorder %s20, 1
    %p148 = por %p146, %p147
    %p150 = scmp.ne.s32.totalorder %s135, %s149
    %p151 = scmp.eq.s32.totalorder %s20, 0
    %p152 = por %p150, %p151
    %s154 = sadd.s32 %s153, 1
    %p157 = scmp.eq.s32.totalorder %s14, 1
    %p158 = scmp.ne.s32.totalorder %s153, %s155
    %p159 = scmp.eq.s32.totalorder %s14, 0
    %p160 = por %p158, %p159
    %p161 = scmp.ne.s32.totalorder %s153, %s155
    %p162 = scmp.eq.s32.totalorder %s19, 1
    %p163 = por %p161, %p162
    %p164 = scmp.ne.s32.totalorder %s155, %s156
    %p165 = scmp.eq.s32.totalorder %s19, 0
    %p166 = por %p164, %p165
    %p167 = scmp.ne.s32.totalorder %s155, %s156
    %p168 = scmp.eq.s32.totalorder %s20, 1
    %p169 = por %p167, %p168
    %p171 = scmp.ne.s32.totalorder %s156, %s170
    %p172 = scmp.eq.s32.totalorder %s20, 0
    %p173 = por %p171, %p172
    %s175 = sadd.s32 %s174, 1
    %p178 = scmp.eq.s32.totalorder %s14, 1
    %p179 = scmp.ne.s32.totalorder %s174, %s176
    %p180 = scmp.eq.s32.totalorder %s14, 0
    %p181 = por %p179, %p180
    %p182 = scmp.ne.s32.totalorder %s174, %s176
    %p183 = scmp.eq.s32.totalorder %s19, 1
    %p184 = por %p182, %p183
    %p185 = scmp.ne.s32.totalorder %s176, %s177
    %p186 = scmp.eq.s32.totalorder %s19, 0
    %p187 = por %p185, %p186
    %p188 = scmp.ne.s32.totalorder %s176, %s177
    %p189 = scmp.eq.s32.totalorder %s20, 1
    %p190 = por %p188, %p189
    %p192 = scmp.ne.s32.totalorder %s177, %s191
    %p193 = scmp.eq.s32.totalorder %s20, 0
    %p194 = por %p192, %p193
    %s195 = ssub.s32 %s14, %s21
    %p196 = scmp.eq.s32.totalorder %s195, 0
    %s198 = sadd.s32 %s197, 1
    %s199 = scalar_select %p196, %s197, %s198
    %p202 = pneg %p196
    %p203 = scmp.eq.s32.totalorder %s14, 1
    %p204 = por %p202, %p203
    %p205 = scmp.ne.s32.totalorder %s197, %s200
    %p206 = scmp.eq.s32.totalorder %s14, 0
    %p207 = por %p205, %p206
    %p208 = scmp.ne.s32.totalorder %s197, %s200
    %p209 = scmp.eq.s32.totalorder %s19, 1
    %p210 = por %p208, %p209
    %p211 = scmp.ne.s32.totalorder %s200, %s201
    %p212 = scmp.eq.s32.totalorder %s19, 0
    %p213 = por %p211, %p212
    %p214 = scmp.ne.s32.totalorder %s200, %s201
    %p215 = scmp.eq.s32.totalorder %s20, 1
    %p216 = por %p214, %p215
    %p218 = scmp.ne.s32.totalorder %s201, %s217
    %p219 = scmp.eq.s32.totalorder %s20, 0
    %p220 = por %p218, %p219
    %p221 = scmp.le.s32.totalorder 1, %s14
    %p222 = scmp.lt.s32.totalorder %s14, 3
    %p223 = pnand %p221, %p222
    %p224 = pneg %p223
    // Predicated region
    $region9: #{dqn_forward.3} parent=5 // pred_check
      _
    $region10: #{dqn_forward.3} parent=5 // pred_check_branch
      %226 = sbr.rel (%p223) target = $region12
    $region11: #{dqn_forward.3} parent=5 // pred_region
      %s227 = ssub.s32 %s14, 1
      // Predicated region
      $region13: #{dqn_forward.3} parent=11 // pred_check
        %p228 = pneg %p61
      $region14: #{dqn_forward.3} parent=11 // pred_check_branch
        %230 = sbr.rel (%p228) target = $region16
      $region15: #{dqn_forward.3} parent=11 // pred_region
        _
      $region16: #{dqn_forward.3} parent=11 // pred_fallthru
        _
      // Predicated region
      $region17: #{dqn_forward.3} parent=11 // pred_check
        %p231 = pneg %p82
      $region18: #{dqn_forward.3} parent=11 // pred_check_branch
        %233 = sbr.rel (%p231) target = $region20
      $region19: #{dqn_forward.3} parent=11 // pred_region
        _
      $region20: #{dqn_forward.3} parent=11 // pred_fallthru
        _
      // Predicated region
      $region21: #{dqn_forward.3} parent=11 // pred_check
        %p234 = pneg %p103
      $region22: #{dqn_forward.3} parent=11 // pred_check_branch
        %236 = sbr.rel (%p234) target = $region24
      $region23: #{dqn_forward.3} parent=11 // pred_region
        _
      $region24: #{dqn_forward.3} parent=11 // pred_fallthru
        _
      // Predicated region
      $region25: #{dqn_forward.3} parent=11 // pred_check
        %p237 = pneg %p124
      $region26: #{dqn_forward.3} parent=11 // pred_check_branch
        %239 = sbr.rel (%p237) target = $region28
      $region27: #{dqn_forward.3} parent=11 // pred_region
        _
      $region28: #{dqn_forward.3} parent=11 // pred_fallthru
        _
      // Predicated region
      $region29: #{dqn_forward.3} parent=11 // pred_check
        %p240 = pneg %p145
      $region30: #{dqn_forward.3} parent=11 // pred_check_branch
        %242 = sbr.rel (%p240) target = $region32
      $region31: #{dqn_forward.3} parent=11 // pred_region
        _
      $region32: #{dqn_forward.3} parent=11 // pred_fallthru
        _
      // Predicated region
      $region33: #{dqn_forward.3} parent=11 // pred_check
        %p243 = pneg %p166
      $region34: #{dqn_forward.3} parent=11 // pred_check_branch
        %245 = sbr.rel (%p243) target = $region36
      $region35: #{dqn_forward.3} parent=11 // pred_region
        _
      $region36: #{dqn_forward.3} parent=11 // pred_fallthru
        _
      // Predicated region
      $region37: #{dqn_forward.3} parent=11 // pred_check
        %p246 = pneg %p187
      $region38: #{dqn_forward.3} parent=11 // pred_check_branch
        %248 = sbr.rel (%p246) target = $region40
      $region39: #{dqn_forward.3} parent=11 // pred_region
        _
      $region40: #{dqn_forward.3} parent=11 // pred_fallthru
        _
    $region12: #{dqn_forward.3} parent=5 // pred_fallthru
      _
    %p249 = scmp.lt.s32.totalorder %s14, 2
    // Predicated region
    $region41: #{dqn_forward.3} parent=5 // pred_check
      %p250 = pneg %p249
    $region42: #{dqn_forward.3} parent=5 // pred_check_branch
      %252 = sbr.rel (%p250) target = $region44
    $region43: #{dqn_forward.3} parent=5 // pred_region
      // Predicated region
      $region45: #{dqn_forward.3} parent=43 // pred_check
        %p253 = pneg %p34
      $region46: #{dqn_forward.3} parent=43 // pred_check_branch
        %255 = sbr.rel (%p253) target = $region48
      $region47: #{dqn_forward.3} parent=43 // pred_region
        %s256 = smul.u32 32, %s14
        %p257 = scmp.lt.s32.totalorder %s256, 63
        %s258 = scalar_select %p257, %s256, 63
        %s259 = smul.addr %s258, 4
        %s260 = scalar_lea.vmem %s0, %s259
        %s261 = smul.u32 32, %s14
      $region48: #{dqn_forward.3} parent=43 // pred_fallthru
        _
    $region44: #{dqn_forward.3} parent=5 // pred_fallthru
      _
    %p262 = scmp.le.s32.totalorder 1, %s14
    %p263 = scmp.lt.s32.totalorder %s14, 3
    %p264 = pnand %p262, %p263
    %p265 = pneg %p264
    // Predicated region
    $region49: #{dqn_forward.3} parent=5 // pred_check
      _
    $region50: #{dqn_forward.3} parent=5 // pred_check_branch
      %267 = sbr.rel (%p264) target = $region52
    $region51: #{dqn_forward.3} parent=5 // pred_region
      %s268 = ssub.s32 %s14, 1
      %s269 = smul.u32 32, %s19
      %p270 = scmp.lt.s32.totalorder %s269, 63
      %s271 = scalar_select %p270, %s269, 63
      %s272 = smul.addr %s271, 4
      %s273 = scalar_lea.vmem %s0, %s272
      %p274 = pneg %p40
      %p275 = pneg %p37
      %p276 = pneg %p61
      %p277 = pneg %p58
      %p278 = pneg %p82
      %p279 = pneg %p79
      %p280 = pneg %p103
      %p281 = pneg %p100
      %p282 = pneg %p124
      %p283 = pneg %p121
      %p284 = pneg %p145
      %p285 = pneg %p142
      %p286 = pneg %p166
      %p287 = pneg %p163
      %p288 = pneg %p187
      %p289 = pneg %p184
      %p290 = pneg %p213
      %p291 = pneg %p210
      %s292 = smul.u32 32, %s19
      %p293 = scmp.lt.s32.totalorder %s292, 63
      %s294 = scalar_select %p293, %s292, 63
      %s295 = smul.addr %s294, 4
      %s296 = scalar_lea.vmem %s8, %s295
      %s297 = smul.u32 32, %s19
      %p298 = scmp.lt.s32.totalorder %s297, 63
      %s299 = scalar_select %p298, %s297, 63
      %s300 = smul.addr %s299, 4
      %s301 = scalar_lea.vmem %s0, %s300
      %s302 = smul.u32 32, %s19
      %s303 = smul.u32 32, %s19
      %p304 = scmp.lt.s32.totalorder %s303, 63
      %s305 = scalar_select %p304, %s303, 63
      %s306 = smul.addr %s305, 4
      %s307 = scalar_lea.vmem %s8, %s306
      %s308 = smul.u32 32, %s19
      %v310 = vld [vmem:[%s301] sm:$0xf]
      %v311 = vld [vmem:[%s301 + $0x4] sm:$0xf]
      %v312 = vld [vmem:[%s301 + $0x8] sm:$0xf]
      %v313 = vld [vmem:[%s301 + $0xc] sm:$0xf]
      %v314 = vld [vmem:[%s301 + $0x10] sm:$0xf]
      %v315 = vld [vmem:[%s301 + $0x14] sm:$0xf]
      %v316 = vld [vmem:[%s301 + $0x18] sm:$0xf]
      %v317 = vld [vmem:[%s301 + $0x1c] sm:$0xf]
      %v318 = vld [vmem:[%s301 + $0x20] sm:$0xf]
      %v319 = vld [vmem:[%s301 + $0x24] sm:$0xf]
      %v320 = vld [vmem:[%s301 + $0x28] sm:$0xf]
      %v321 = vld [vmem:[%s301 + $0x2c] sm:$0xf]
      %v322 = vld [vmem:[%s301 + $0x30] sm:$0xf]
      %v323 = vld [vmem:[%s301 + $0x34] sm:$0xf]
      %v324 = vld [vmem:[%s301 + $0x38] sm:$0xf]
      %v325 = vld [vmem:[%s301 + $0x3c] sm:$0xf]
      %v326 = vld [vmem:[%s301 + $0x40] sm:$0xf]
      %v327 = vld [vmem:[%s301 + $0x44] sm:$0xf]
      %v328 = vld [vmem:[%s301 + $0x48] sm:$0xf]
      %v329 = vld [vmem:[%s301 + $0x4c] sm:$0xf]
      %v330 = vld [vmem:[%s301 + $0x50] sm:$0xf]
      %v331 = vld [vmem:[%s301 + $0x54] sm:$0xf]
      %v332 = vld [vmem:[%s301 + $0x58] sm:$0xf]
      %v333 = vld [vmem:[%s301 + $0x5c] sm:$0xf]
      %v334 = vld [vmem:[%s301 + $0x60] sm:$0xf]
      %v335 = vld [vmem:[%s301 + $0x64] sm:$0xf]
      %v336 = vld [vmem:[%s301 + $0x68] sm:$0xf]
      %v337 = vld [vmem:[%s301 + $0x6c] sm:$0xf]
      %v338 = vld [vmem:[%s301 + $0x70] sm:$0xf]
      %v339 = vld [vmem:[%s301 + $0x74] sm:$0xf]
      %v340 = vld [vmem:[%s301 + $0x78] sm:$0xf]
      %v341 = vld [vmem:[%s301 + $0x7c] sm:$0xf]
      %v342 = vld [vmem:[%s1] sm:$0xf]
      %v343 = vld [vmem:[%s1 + $0x4] sm:$0xf]
      %v344 = vld [vmem:[%s1 + $0x8] sm:$0xf]
      %v345 = vld [vmem:[%s1 + $0xc] sm:$0x3]
      %v346 = vld [vmem:[%s2] sm:$0x1]
      %v348 = vperm.slane %v346, 0
      %v382 = vunpack.c.l.b16 %v310
      %v383 = vunpack.c.l.b16 %v311
      %v384 = vunpack.c.l.b16 %v312
      %v385 = vunpack.c.l.b16 %v313
      %v386 = vunpack.c.l.b16 %v314
      %v387 = vunpack.c.l.b16 %v315
      %v388 = vunpack.c.l.b16 %v316
      %v389 = vunpack.c.l.b16 %v317
      %v390 = vunpack.c.l.b16 %v318
      %v391 = vunpack.c.l.b16 %v319
      %v392 = vunpack.c.l.b16 %v320
      %v393 = vunpack.c.l.b16 %v321
      %v394 = vunpack.c.l.b16 %v322
      %v395 = vunpack.c.l.b16 %v323
      %v396 = vunpack.c.l.b16 %v324
      %v397 = vunpack.c.l.b16 %v325
      %v398 = vunpack.c.l.b16 %v326
      %v399 = vunpack.c.l.b16 %v327
      %v400 = vunpack.c.l.b16 %v328
      %v401 = vunpack.c.l.b16 %v329
      %v402 = vunpack.c.l.b16 %v330
      %v403 = vunpack.c.l.b16 %v331
      %v404 = vunpack.c.l.b16 %v332
      %v405 = vunpack.c.l.b16 %v333
      %v406 = vunpack.c.l.b16 %v334
      %v407 = vunpack.c.l.b16 %v335
      %v408 = vunpack.c.l.b16 %v336
      %v409 = vunpack.c.l.b16 %v337
      %v410 = vunpack.c.l.b16 %v338
      %v411 = vunpack.c.l.b16 %v339
      %v412 = vunpack.c.l.b16 %v340
      %v413 = vunpack.c.l.b16 %v341
      %v414 = vpack.c.b16 %v383, %v382
      %v415 = vpack.c.b16 %v385, %v384
      %v416 = vpack.c.b16 %v387, %v386
      %v417 = vpack.c.b16 %v389, %v388
      %v418 = vpack.c.b16 %v391, %v390
      %v419 = vpack.c.b16 %v393, %v392
      %v420 = vpack.c.b16 %v395, %v394
      %v421 = vpack.c.b16 %v397, %v396
      %v422 = vpack.c.b16 %v399, %v398
      %v423 = vpack.c.b16 %v401, %v400
      %v424 = vpack.c.b16 %v403, %v402
      %v425 = vpack.c.b16 %v405, %v404
      %v426 = vpack.c.b16 %v407, %v406
      %v427 = vpack.c.b16 %v409, %v408
      %v428 = vpack.c.b16 %v411, %v410
      %v429 = vpack.c.b16 %v413, %v412
      %v434 = vunpack.c.l.b16 %v342
      %v435 = vunpack.c.l.b16 %v343
      %v436 = vunpack.c.l.b16 %v344
      %v437 = vunpack.c.l.b16 %v345
      %v438 = vpack.c.b16 %v435, %v434
      %v439 = vpack.c.b16 %v437, %v436
      %vm441 = vcmask 220160
      %v443 = vsel %vm441, %v414, 0
      %v446 = vsel %vm441, %v415, 0
      %v449 = vsel %vm441, %v416, 0
      %v452 = vsel %vm441, %v417, 0
      %v455 = vsel %vm441, %v418, 0
      %v458 = vsel %vm441, %v419, 0
      %v461 = vsel %vm441, %v420, 0
      %v464 = vsel %vm441, %v421, 0
      %v467 = vsel %vm441, %v422, 0
      %v470 = vsel %vm441, %v423, 0
      %v473 = vsel %vm441, %v424, 0
      %v476 = vsel %vm441, %v425, 0
      %v479 = vsel %vm441, %v426, 0
      %v482 = vsel %vm441, %v427, 0
      %v485 = vsel %vm441, %v428, 0
      %v488 = vsel %vm441, %v429, 0
      %vm490 = vcmask 1044480
      %vm491 = vcmask 1045504
      %v492 = vsel %vm490, 4294967295, 65535
      %v493 = vsel %vm491, %v492, 0
      %v495 = vand.u32 %v439, %v493
      %497 = vmatpush.bf16.msra.mxu0 0
      %498 = vmatpush.bf16.msra.mxu0 0
      %499 = vmatpush.bf16.msra.mxu0 0
      %500 = vmatpush.bf16.msra.mxu0 0
      %501 = vmatpush.bf16.msra.mxu0 0
      %502 = vmatpush.bf16.msra.mxu0 0
      %503 = vmatpush.bf16.msra.mxu0 %v495
      %504 = vmatpush.bf16.msra.mxu0 %v438
      %505 = vmatmul.bf16.gmra.mxu0 %v443
      %v506 = vpop.f32.mrf.mxu0
      %v507 = vadd.f32 %v348, %v506
      %v508 = vpop.f32.mrf.mxu0
      %v509 = vadd.f32 %v348, %v508
      %510 = vmatmul.bf16.gmra.mxu0 %v446
      %v511 = vpop.f32.mrf.mxu0
      %v512 = vadd.f32 %v348, %v511
      %v513 = vpop.f32.mrf.mxu0
      %v514 = vadd.f32 %v348, %v513
      %515 = vmatmul.bf16.gmra.mxu0 %v449
      %v516 = vpop.f32.mrf.mxu0
      %v517 = vadd.f32 %v348, %v516
      %v518 = vpop.f32.mrf.mxu0
      %v519 = vadd.f32 %v348, %v518
      %520 = vmatmul.bf16.gmra.mxu0 %v452
      %v521 = vpop.f32.mrf.mxu0
      %v522 = vadd.f32 %v348, %v521
      %v523 = vpop.f32.mrf.mxu0
      %v524 = vadd.f32 %v348, %v523
      %525 = vmatmul.bf16.gmra.mxu0 %v455
      %v526 = vpop.f32.mrf.mxu0
      %v527 = vadd.f32 %v348, %v526
      %v528 = vpop.f32.mrf.mxu0
      %v529 = vadd.f32 %v348, %v528
      %530 = vmatmul.bf16.gmra.mxu0 %v458
      %v531 = vpop.f32.mrf.mxu0
      %v532 = vadd.f32 %v348, %v531
      %v533 = vpop.f32.mrf.mxu0
      %v534 = vadd.f32 %v348, %v533
      %535 = vmatmul.bf16.gmra.mxu0 %v461
      %v536 = vpop.f32.mrf.mxu0
      %v537 = vadd.f32 %v348, %v536
      %v538 = vpop.f32.mrf.mxu0
      %v539 = vadd.f32 %v348, %v538
      %540 = vmatmul.bf16.gmra.mxu0 %v464
      %v541 = vpop.f32.mrf.mxu0
      %v542 = vadd.f32 %v348, %v541
      %v543 = vpop.f32.mrf.mxu0
      %v544 = vadd.f32 %v348, %v543
      %545 = vmatmul.bf16.gmra.mxu0 %v467
      %v546 = vpop.f32.mrf.mxu0
      %v547 = vadd.f32 %v348, %v546
      %v548 = vpop.f32.mrf.mxu0
      %v549 = vadd.f32 %v348, %v548
      %550 = vmatmul.bf16.gmra.mxu0 %v470
      %v551 = vpop.f32.mrf.mxu0
      %v552 = vadd.f32 %v348, %v551
      %v553 = vpop.f32.mrf.mxu0
      %v554 = vadd.f32 %v348, %v553
      %555 = vmatmul.bf16.gmra.mxu0 %v473
      %v556 = vpop.f32.mrf.mxu0
      %v557 = vadd.f32 %v348, %v556
      %v558 = vpop.f32.mrf.mxu0
      %v559 = vadd.f32 %v348, %v558
      %560 = vmatmul.bf16.gmra.mxu0 %v476
      %v561 = vpop.f32.mrf.mxu0
      %v562 = vadd.f32 %v348, %v561
      %v563 = vpop.f32.mrf.mxu0
      %v564 = vadd.f32 %v348, %v563
      %565 = vmatmul.bf16.gmra.mxu0 %v479
      %v566 = vpop.f32.mrf.mxu0
      %v567 = vadd.f32 %v348, %v566
      %v568 = vpop.f32.mrf.mxu0
      %v569 = vadd.f32 %v348, %v568
      %570 = vmatmul.bf16.gmra.mxu0 %v482
      %v571 = vpop.f32.mrf.mxu0
      %v572 = vadd.f32 %v348, %v571
      %v573 = vpop.f32.mrf.mxu0
      %v574 = vadd.f32 %v348, %v573
      %575 = vmatmul.bf16.gmra.mxu0 %v485
      %v576 = vpop.f32.mrf.mxu0
      %v577 = vadd.f32 %v348, %v576
      %v578 = vpop.f32.mrf.mxu0
      %v579 = vadd.f32 %v348, %v578
      %580 = vmatmul.bf16.gmra.mxu0 %v488
      %v581 = vpop.f32.mrf.mxu0
      %v582 = vadd.f32 %v348, %v581
      %v583 = vpop.f32.mrf.mxu0
      %v584 = vadd.f32 %v348, %v583
      %585 = vdwg.mxu0
      %v586 = vld [vmem:[%s3] sm:$0x1]
      %v587 = vld [vmem:[%s4] sm:$0x1]
      %v588 = vld [vmem:[%s5] sm:$0xff]
      %v589 = vld [vmem:[%s5 + $0x8] sm:$0xff]
      %v590 = vld [vmem:[%s5 + $0x10] sm:$0xff]
      %v591 = vld [vmem:[%s5 + $0x18] sm:$0xff]
      %v592 = vld [vmem:[%s5 + $0x20] sm:$0xff]
      %v593 = vld [vmem:[%s5 + $0x28] sm:$0xff]
      %v594 = vld [vmem:[%s5 + $0x30] sm:$0xff]
      %v595 = vld [vmem:[%s5 + $0x38] sm:$0xff]
      %v596 = vld [vmem:[%s5 + $0x40] sm:$0xff]
      %v597 = vld [vmem:[%s5 + $0x48] sm:$0xff]
      %v598 = vld [vmem:[%s5 + $0x50] sm:$0xff]
      %v599 = vld [vmem:[%s5 + $0x58] sm:$0xff]
      %v600 = vld [vmem:[%s5 + $0x60] sm:$0xff]
      %v601 = vld [vmem:[%s5 + $0x68] sm:$0xff]
      %v602 = vld [vmem:[%s5 + $0x70] sm:$0xff]
      %v603 = vld [vmem:[%s5 + $0x78] sm:$0xff]
      %v604 = vld [vmem:[%s6] sm:$0x3]
      %v606 = vperm.slane %v604, 0
      %v607 = vperm.slane %v604, 1
      %610 = vmatpush.msra.mxu0 %v544
      %611 = vmatpush.msra.mxu0 %v542
      %612 = vmatpush.msra.mxu0 %v539
      %613 = vmatpush.msra.mxu0 %v537
      %614 = vmatpush.msra.mxu0 %v534
      %615 = vmatpush.msra.mxu0 %v532
      %616 = vmatpush.msra.mxu0 %v529
      %617 = vmatpush.msra.mxu0 %v527
      %618 = vmatpush.msra.mxu0 %v524
      %619 = vmatpush.msra.mxu0 %v522
      %620 = vmatpush.msra.mxu0 %v519
      %621 = vmatpush.msra.mxu0 %v517
      %622 = vmatpush.msra.mxu0 %v514
      %623 = vmatpush.msra.mxu0 %v512
      %624 = vmatpush.msra.mxu0 %v509
      %625 = vmatpush.msra.mxu0 %v507
      %626 = vmatmul.f32.gmra.mxu0 %v606
      %v627 = vpop.f32.mrf.mxu0
      %v628 = vadd.f32 0.0, %v627
      %629 = vdwg.mxu0
      %630 = vmatpush.msra.mxu0 %v584
      %631 = vmatpush.msra.mxu0 %v582
      %632 = vmatpush.msra.mxu0 %v579
      %633 = vmatpush.msra.mxu0 %v577
      %634 = vmatpush.msra.mxu0 %v574
      %635 = vmatpush.msra.mxu0 %v572
      %636 = vmatpush.msra.mxu0 %v569
      %637 = vmatpush.msra.mxu0 %v567
      %638 = vmatpush.msra.mxu0 %v564
      %639 = vmatpush.msra.mxu0 %v562
      %640 = vmatpush.msra.mxu0 %v559
      %641 = vmatpush.msra.mxu0 %v557
      %642 = vmatpush.msra.mxu0 %v554
      %643 = vmatpush.msra.mxu0 %v552
      %644 = vmatpush.msra.mxu0 %v549
      %645 = vmatpush.msra.mxu0 %v547
      %646 = vmatmul.f32.gmra.mxu0 %v607
      %v647 = vpop.f32.mrf.mxu0
      %v648 = vadd.f32 %v628, %v647
      %649 = vdwg.mxu0
      %650 = vmatpush.msra.mxu0 %v603
      %651 = vmatpush.msra.mxu0 %v602
      %652 = vmatpush.msra.mxu0 %v601
      %653 = vmatpush.msra.mxu0 %v600
      %654 = vmatpush.msra.mxu0 %v599
      %655 = vmatpush.msra.mxu0 %v598
      %656 = vmatpush.msra.mxu0 %v597
      %657 = vmatpush.msra.mxu0 %v596
      %658 = vmatpush.msra.mxu0 %v595
      %659 = vmatpush.msra.mxu0 %v594
      %660 = vmatpush.msra.mxu0 %v593
      %661 = vmatpush.msra.mxu0 %v592
      %662 = vmatpush.msra.mxu0 %v591
      %663 = vmatpush.msra.mxu0 %v590
      %664 = vmatpush.msra.mxu0 %v589
      %665 = vmatpush.msra.mxu0 %v588
      %666 = vmatmul.f32.gmra.mxu0 %v648
      %v667 = vpop.f32.mrf.mxu0
      %v668 = vadd.f32 0.0, %v667
      %669 = vdwg.mxu0
      %v670 = vmul.f32 %v668, 0.0009765625
      %v671 = vperm.slane %v670, 0
      %v672 = vsub.f32 %v507, %v671
      %v673 = vsub.f32 %v509, %v671
      %v674 = vsub.f32 %v512, %v671
      %v675 = vsub.f32 %v514, %v671
      %v676 = vsub.f32 %v517, %v671
      %v677 = vsub.f32 %v519, %v671
      %v678 = vsub.f32 %v522, %v671
      %v679 = vsub.f32 %v524, %v671
      %v680 = vsub.f32 %v527, %v671
      %v681 = vsub.f32 %v529, %v671
      %v682 = vsub.f32 %v532, %v671
      %v683 = vsub.f32 %v534, %v671
      %v684 = vsub.f32 %v537, %v671
      %v685 = vsub.f32 %v539, %v671
      %v686 = vsub.f32 %v542, %v671
      %v687 = vsub.f32 %v544, %v671
      %v688 = vsub.f32 %v547, %v671
      %v689 = vsub.f32 %v549, %v671
      %v690 = vsub.f32 %v552, %v671
      %v691 = vsub.f32 %v554, %v671
      %v692 = vsub.f32 %v557, %v671
      %v693 = vsub.f32 %v559, %v671
      %v694 = vsub.f32 %v562, %v671
      %v695 = vsub.f32 %v564, %v671
      %v696 = vsub.f32 %v567, %v671
      %v697 = vsub.f32 %v569, %v671
      %v698 = vsub.f32 %v572, %v671
      %v699 = vsub.f32 %v574, %v671
      %v700 = vsub.f32 %v577, %v671
      %v701 = vsub.f32 %v579, %v671
      %v702 = vsub.f32 %v582, %v671
      %v703 = vsub.f32 %v584, %v671
      %v704 = vmul.f32 %v672, %v672
      %v705 = vmul.f32 %v673, %v673
      %v706 = vmul.f32 %v674, %v674
      %v707 = vmul.f32 %v675, %v675
      %v708 = vmul.f32 %v676, %v676
      %v709 = vmul.f32 %v677, %v677
      %v710 = vmul.f32 %v678, %v678
      %v711 = vmul.f32 %v679, %v679
      %v712 = vmul.f32 %v680, %v680
      %v713 = vmul.f32 %v681, %v681
      %v714 = vmul.f32 %v682, %v682
      %v715 = vmul.f32 %v683, %v683
      %v716 = vmul.f32 %v684, %v684
      %v717 = vmul.f32 %v685, %v685
      %v718 = vmul.f32 %v686, %v686
      %v719 = vmul.f32 %v687, %v687
      %v720 = vmul.f32 %v688, %v688
      %v721 = vmul.f32 %v689, %v689
      %v722 = vmul.f32 %v690, %v690
      %v723 = vmul.f32 %v691, %v691
      %v724 = vmul.f32 %v692, %v692
      %v725 = vmul.f32 %v693, %v693
      %v726 = vmul.f32 %v694, %v694
      %v727 = vmul.f32 %v695, %v695
      %v728 = vmul.f32 %v696, %v696
      %v729 = vmul.f32 %v697, %v697
      %v730 = vmul.f32 %v698, %v698
      %v731 = vmul.f32 %v699, %v699
      %v732 = vmul.f32 %v700, %v700
      %v733 = vmul.f32 %v701, %v701
      %v734 = vmul.f32 %v702, %v702
      %v735 = vmul.f32 %v703, %v703
      %736 = vmatpush.msra.mxu0 %v719
      %737 = vmatpush.msra.mxu0 %v718
      %738 = vmatpush.msra.mxu0 %v717
      %739 = vmatpush.msra.mxu0 %v716
      %740 = vmatpush.msra.mxu0 %v715
      %741 = vmatpush.msra.mxu0 %v714
      %742 = vmatpush.msra.mxu0 %v713
      %743 = vmatpush.msra.mxu0 %v712
      %744 = vmatpush.msra.mxu0 %v711
      %745 = vmatpush.msra.mxu0 %v710
      %746 = vmatpush.msra.mxu0 %v709
      %747 = vmatpush.msra.mxu0 %v708
      %748 = vmatpush.msra.mxu0 %v707
      %749 = vmatpush.msra.mxu0 %v706
      %750 = vmatpush.msra.mxu0 %v705
      %751 = vmatpush.msra.mxu0 %v704
      %752 = vmatmul.f32.gmra.mxu0 %v606
      %v753 = vpop.f32.mrf.mxu0
      %v754 = vadd.f32 0.0, %v753
      %755 = vdwg.mxu0
      %756 = vmatpush.msra.mxu0 %v735
      %757 = vmatpush.msra.mxu0 %v734
      %758 = vmatpush.msra.mxu0 %v733
      %759 = vmatpush.msra.mxu0 %v732
      %760 = vmatpush.msra.mxu0 %v731
      %761 = vmatpush.msra.mxu0 %v730
      %762 = vmatpush.msra.mxu0 %v729
      %763 = vmatpush.msra.mxu0 %v728
      %764 = vmatpush.msra.mxu0 %v727
      %765 = vmatpush.msra.mxu0 %v726
      %766 = vmatpush.msra.mxu0 %v725
      %767 = vmatpush.msra.mxu0 %v724
      %768 = vmatpush.msra.mxu0 %v723
      %769 = vmatpush.msra.mxu0 %v722
      %770 = vmatpush.msra.mxu0 %v721
      %771 = vmatpush.msra.mxu0 %v720
      %772 = vmatmul.f32.gmra.mxu0 %v607
      %v773 = vpop.f32.mrf.mxu0
      %v774 = vadd.f32 %v754, %v773
      %775 = vdwg.mxu0
      %776 = vmatpush.msra.mxu0 %v603
      %777 = vmatpush.msra.mxu0 %v602
      %778 = vmatpush.msra.mxu0 %v601
      %779 = vmatpush.msra.mxu0 %v600
      %780 = vmatpush.msra.mxu0 %v599
      %781 = vmatpush.msra.mxu0 %v598
      %782 = vmatpush.msra.mxu0 %v597
      %783 = vmatpush.msra.mxu0 %v596
      %784 = vmatpush.msra.mxu0 %v595
      %785 = vmatpush.msra.mxu0 %v594
      %786 = vmatpush.msra.mxu0 %v593
      %787 = vmatpush.msra.mxu0 %v592
      %788 = vmatpush.msra.mxu0 %v591
      %789 = vmatpush.msra.mxu0 %v590
      %790 = vmatpush.msra.mxu0 %v589
      %791 = vmatpush.msra.mxu0 %v588
      %792 = vmatmul.f32.gmra.mxu0 %v774
      %v793 = vpop.f32.mrf.mxu0
      %v794 = vadd.f32 0.0, %v793
      %795 = vdwg.mxu0
      %v796 = vmul.f32 %v794, 0.0009765625
      %v797 = vadd.f32 %v796, 1e-05
      %v798 = vrsqrt.pop %v797
      %v799 = vmul.f32 %v798, %v797
      %v800 = vmul.f32 %v799, %v798
      %v801 = vmul.f32 0.5, %v800
      %v802 = vsub.f32 1.5, %v801
      %v803 = vmul.f32 %v798, %v802
      %vm804 = vweird.f32 %v797
      %vm805 = vweird.f32 %v798
      %vm806 = vmor %vm804, %vm805
      %v807 = vsel %vm806, %v798, %v803
      %v808 = vmul.f32 %v807, %v586
      %v809 = vperm.slane %v808, 0
      %v810 = vmul.f32 %v672, %v809
      %v811 = vmul.f32 %v673, %v809
      %v812 = vmul.f32 %v674, %v809
      %v813 = vmul.f32 %v675, %v809
      %v814 = vmul.f32 %v676, %v809
      %v815 = vmul.f32 %v677, %v809
      %v816 = vmul.f32 %v678, %v809
      %v817 = vmul.f32 %v679, %v809
      %v818 = vmul.f32 %v680, %v809
      %v819 = vmul.f32 %v681, %v809
      %v820 = vmul.f32 %v682, %v809
      %v821 = vmul.f32 %v683, %v809
      %v822 = vmul.f32 %v684, %v809
      %v823 = vmul.f32 %v685, %v809
      %v824 = vmul.f32 %v686, %v809
      %v825 = vmul.f32 %v687, %v809
      %v826 = vmul.f32 %v688, %v809
      %v827 = vmul.f32 %v689, %v809
      %v828 = vmul.f32 %v690, %v809
      %v829 = vmul.f32 %v691, %v809
      %v830 = vmul.f32 %v692, %v809
      %v831 = vmul.f32 %v693, %v809
      %v832 = vmul.f32 %v694, %v809
      %v833 = vmul.f32 %v695, %v809
      %v834 = vmul.f32 %v696, %v809
      %v835 = vmul.f32 %v697, %v809
      %v836 = vmul.f32 %v698, %v809
      %v837 = vmul.f32 %v699, %v809
      %v838 = vmul.f32 %v700, %v809
      %v839 = vmul.f32 %v701, %v809
      %v840 = vmul.f32 %v702, %v809
      %v841 = vmul.f32 %v703, %v809
      %v843 = vperm.slane %v587, 0
      %v845 = vadd.f32 %v810, %v843
      %v846 = vadd.f32 %v811, %v843
      %v847 = vadd.f32 %v812, %v843
      %v848 = vadd.f32 %v813, %v843
      %v849 = vadd.f32 %v814, %v843
      %v850 = vadd.f32 %v815, %v843
      %v851 = vadd.f32 %v816, %v843
      %v852 = vadd.f32 %v817, %v843
      %v853 = vadd.f32 %v818, %v843
      %v854 = vadd.f32 %v819, %v843
      %v855 = vadd.f32 %v820, %v843
      %v856 = vadd.f32 %v821, %v843
      %v857 = vadd.f32 %v822, %v843
      %v858 = vadd.f32 %v823, %v843
      %v859 = vadd.f32 %v824, %v843
      %v860 = vadd.f32 %v825, %v843
      %v861 = vadd.f32 %v826, %v843
      %v862 = vadd.f32 %v827, %v843
      %v863 = vadd.f32 %v828, %v843
      %v864 = vadd.f32 %v829, %v843
      %v865 = vadd.f32 %v830, %v843
      %v866 = vadd.f32 %v831, %v843
      %v867 = vadd.f32 %v832, %v843
      %v868 = vadd.f32 %v833, %v843
      %v869 = vadd.f32 %v834, %v843
      %v870 = vadd.f32 %v835, %v843
      %v871 = vadd.f32 %v836, %v843
      %v872 = vadd.f32 %v837, %v843
      %v873 = vadd.f32 %v838, %v843
      %v874 = vadd.f32 %v839, %v843
      %v875 = vadd.f32 %v840, %v843
      %v876 = vadd.f32 %v841, %v843
      %v877 = vmax.f32 %v845, 0.0
      %v878 = vmax.f32 %v846, 0.0
      %v879 = vmax.f32 %v847, 0.0
      %v880 = vmax.f32 %v848, 0.0
      %v881 = vmax.f32 %v849, 0.0
      %v882 = vmax.f32 %v850, 0.0
      %v883 = vmax.f32 %v851, 0.0
      %v884 = vmax.f32 %v852, 0.0
      %v885 = vmax.f32 %v853, 0.0
      %v886 = vmax.f32 %v854, 0.0
      %v887 = vmax.f32 %v855, 0.0
      %v888 = vmax.f32 %v856, 0.0
      %v889 = vmax.f32 %v857, 0.0
      %v890 = vmax.f32 %v858, 0.0
      %v891 = vmax.f32 %v859, 0.0
      %v892 = vmax.f32 %v860, 0.0
      %v893 = vmax.f32 %v861, 0.0
      %v894 = vmax.f32 %v862, 0.0
      %v895 = vmax.f32 %v863, 0.0
      %v896 = vmax.f32 %v864, 0.0
      %v897 = vmax.f32 %v865, 0.0
      %v898 = vmax.f32 %v866, 0.0
      %v899 = vmax.f32 %v867, 0.0
      %v900 = vmax.f32 %v868, 0.0
      %v901 = vmax.f32 %v869, 0.0
      %v902 = vmax.f32 %v870, 0.0
      %v903 = vmax.f32 %v871, 0.0
      %v904 = vmax.f32 %v872, 0.0
      %v905 = vmax.f32 %v873, 0.0
      %v906 = vmax.f32 %v874, 0.0
      %v907 = vmax.f32 %v875, 0.0
      %v908 = vmax.f32 %v876, 0.0
      %v909 = vpack.c.bf16 %v877, %v877
      %v910 = vpack.c.bf16 %v878, %v878
      %v911 = vpack.c.bf16 %v879, %v879
      %v912 = vpack.c.bf16 %v880, %v880
      %v913 = vpack.c.bf16 %v881, %v881
      %v914 = vpack.c.bf16 %v882, %v882
      %v915 = vpack.c.bf16 %v883, %v883
      %v916 = vpack.c.bf16 %v884, %v884
      %v917 = vpack.c.bf16 %v885, %v885
      %v918 = vpack.c.bf16 %v886, %v886
      %v919 = vpack.c.bf16 %v887, %v887
      %v920 = vpack.c.bf16 %v888, %v888
      %v921 = vpack.c.bf16 %v889, %v889
      %v922 = vpack.c.bf16 %v890, %v890
      %v923 = vpack.c.bf16 %v891, %v891
      %v924 = vpack.c.bf16 %v892, %v892
      %v925 = vpack.c.bf16 %v893, %v893
      %v926 = vpack.c.bf16 %v894, %v894
      %v927 = vpack.c.bf16 %v895, %v895
      %v928 = vpack.c.bf16 %v896, %v896
      %v929 = vpack.c.bf16 %v897, %v897
      %v930 = vpack.c.bf16 %v898, %v898
      %v931 = vpack.c.bf16 %v899, %v899
      %v932 = vpack.c.bf16 %v900, %v900
      %v933 = vpack.c.bf16 %v901, %v901
      %v934 = vpack.c.bf16 %v902, %v902
      %v935 = vpack.c.bf16 %v903, %v903
      %v936 = vpack.c.bf16 %v904, %v904
      %v937 = vpack.c.bf16 %v905, %v905
      %v938 = vpack.c.bf16 %v906, %v906
      %v939 = vpack.c.bf16 %v907, %v907
      %v940 = vpack.c.bf16 %v908, %v908
      %vm941 = vcmask 257024
      %942 = vst.msk [vmem:[%s307] sm:$0xf] %vm941, %v909
      %943 = vst.msk [vmem:[%s307 + $0x4] sm:$0xf] %vm941, %v910
      %944 = vst.msk [vmem:[%s307 + $0x8] sm:$0xf] %vm941, %v911
      %945 = vst.msk [vmem:[%s307 + $0xc] sm:$0xf] %vm941, %v912
      %946 = vst.msk [vmem:[%s307 + $0x10] sm:$0xf] %vm941, %v913
      %947 = vst.msk [vmem:[%s307 + $0x14] sm:$0xf] %vm941, %v914
      %948 = vst.msk [vmem:[%s307 + $0x18] sm:$0xf] %vm941, %v915
      %949 = vst.msk [vmem:[%s307 + $0x1c] sm:$0xf] %vm941, %v916
      %950 = vst.msk [vmem:[%s307 + $0x20] sm:$0xf] %vm941, %v917
      %951 = vst.msk [vmem:[%s307 + $0x24] sm:$0xf] %vm941, %v918
      %952 = vst.msk [vmem:[%s307 + $0x28] sm:$0xf] %vm941, %v919
      %953 = vst.msk [vmem:[%s307 + $0x2c] sm:$0xf] %vm941, %v920
      %954 = vst.msk [vmem:[%s307 + $0x30] sm:$0xf] %vm941, %v921
      %955 = vst.msk [vmem:[%s307 + $0x34] sm:$0xf] %vm941, %v922
      %956 = vst.msk [vmem:[%s307 + $0x38] sm:$0xf] %vm941, %v923
      %957 = vst.msk [vmem:[%s307 + $0x3c] sm:$0xf] %vm941, %v924
      %958 = vst.msk [vmem:[%s307 + $0x40] sm:$0xf] %vm941, %v925
      %959 = vst.msk [vmem:[%s307 + $0x44] sm:$0xf] %vm941, %v926
      %960 = vst.msk [vmem:[%s307 + $0x48] sm:$0xf] %vm941, %v927
      %961 = vst.msk [vmem:[%s307 + $0x4c] sm:$0xf] %vm941, %v928
      %962 = vst.msk [vmem:[%s307 + $0x50] sm:$0xf] %vm941, %v929
      %963 = vst.msk [vmem:[%s307 + $0x54] sm:$0xf] %vm941, %v930
      %964 = vst.msk [vmem:[%s307 + $0x58] sm:$0xf] %vm941, %v931
      %965 = vst.msk [vmem:[%s307 + $0x5c] sm:$0xf] %vm941, %v932
      %966 = vst.msk [vmem:[%s307 + $0x60] sm:$0xf] %vm941, %v933
      %967 = vst.msk [vmem:[%s307 + $0x64] sm:$0xf] %vm941, %v934
      %968 = vst.msk [vmem:[%s307 + $0x68] sm:$0xf] %vm941, %v935
      %969 = vst.msk [vmem:[%s307 + $0x6c] sm:$0xf] %vm941, %v936
      %970 = vst.msk [vmem:[%s307 + $0x70] sm:$0xf] %vm941, %v937
      %971 = vst.msk [vmem:[%s307 + $0x74] sm:$0xf] %vm941, %v938
      %972 = vst.msk [vmem:[%s307 + $0x78] sm:$0xf] %vm941, %v939
      %973 = vst.msk [vmem:[%s307 + $0x7c] sm:$0xf] %vm941, %v940
      %s974 = smul.u32 32, %s19
      %p975 = scmp.lt.s32.totalorder %s974, 63
      %s976 = scalar_select %p975, %s974, 63
      %s977 = smul.addr %s976, 4
      %s978 = scalar_lea.vmem %s8, %s977
      // Predicated region
      $region53: #{dqn_forward.3} parent=51 // pred_check
        %p979 = pneg %p210
      $region54: #{dqn_forward.3} parent=51 // pred_check_branch
        %981 = sbr.rel (%p979) target = $region56
      $region55: #{dqn_forward.3} parent=51 // pred_region
        %s982 = smul.u32 32, %s19
      $region56: #{dqn_forward.3} parent=51 // pred_fallthru
        _
    $region52: #{dqn_forward.3} parent=5 // pred_fallthru
      _
    %p983 = scmp.le.s32.totalorder 2, %s14
    // Predicated region
    $region57: #{dqn_forward.3} parent=5 // pred_check
      %p984 = pneg %p983
    $region58: #{dqn_forward.3} parent=5 // pred_check_branch
      %986 = sbr.rel (%p984) target = $region60
    $region59: #{dqn_forward.3} parent=5 // pred_region
      %s987 = ssub.s32 %s14, 2
      // Predicated region
      $region61: #{dqn_forward.3} parent=59 // pred_check
        %p988 = pneg %p216
      $region62: #{dqn_forward.3} parent=59 // pred_check_branch
        %990 = sbr.rel (%p988) target = $region64
      $region63: #{dqn_forward.3} parent=59 // pred_region
        %s991 = smul.u32 32, %s20
        %p992 = scmp.lt.s32.totalorder %s991, 63
        %s993 = scalar_select %p992, %s991, 63
        %s994 = smul.addr %s993, 4
        %s995 = scalar_lea.vmem %s8, %s994
      $region64: #{dqn_forward.3} parent=59 // pred_fallthru
        _
    $region60: #{dqn_forward.3} parent=5 // pred_fallthru
      _
  $region6: #{dqn_forward.3} parent=0 // loop_footer
    %s18 = sadd.s32 1, %s14
  $region7: #{dqn_forward.3} parent=0 // loop_footer_branch
    %13 = sbr.rel target = $region3
  $region8: #{dqn_forward.3} parent=0 // loop_exit
    _

// kernel: dqn_forward.4
$region0: #{dqn_forward.4}
  #allocation0 [shape = 'u32[]', space=smem, size = 0x4, offset = 0x4, fixed_abs, tag = 'smem constant byte address 0x4 - core index']
  #allocation1 [shape = 'u32[72,128]{1,0:T(1,128)}', space=vmem, size = 0x9000, scoped, tag = 'internal scratch']
  %s0 = inlined_call_operand.vmem [shape: bf16[128,288], index: 0, kind: input, shape index: {}]
  %s1 = inlined_call_operand.vmem [shape: bf16[288,128], index: 1, kind: input, shape index: {}]
  %s2 = inlined_call_operand.vmem [shape: f32[1,128], index: 2, kind: input, shape index: {}]
  %s3 = inlined_call_operand.vmem [shape: f32[1,128], index: 3, kind: input, shape index: {}]
  %s4 = inlined_call_operand.vmem [shape: f32[1,128], index: 4, kind: input, shape index: {}]
  %s5 = inlined_call_operand.vmem [shape: f32[128,128], index: 5, kind: input, shape index: {}]
  %s6 = inlined_call_operand.vmem [shape: f32[1,64], index: 6, kind: input, shape index: {}]
  %s7 = inlined_call_operand.vmem [shape: f32[64,1], index: 7, kind: input, shape index: {}]
  %s8 = inlined_call_operand.vmem [shape: bf16[128,64], index: 8, kind: output, shape index: {}]
  %s9 = sld [smem:[#allocation0]]
  $region65: #{dqn_forward.4} parent=0
    _
  %s11 = ssub.s32 1, %s9
  %s12 = scalar_select 0, %s11, %s9
  loop: start=0, step=1, limit=4
  $region2: #{dqn_forward.4} parent=0 // loop_pre_header
    _
  $region3: #{dqn_forward.4} parent=0 // loop_header
    %s14 = sphi 0, %s18
    %p15 = scmp.ge.s32.totalorder %s14, 4
    %s24 = sphi 0, %s26
    %s27 = sphi 0, %s24
    %s28 = sphi 0, %s27
    %s44 = sphi 0, %s28
    %s48 = sphi 0, %s48
    %s50 = sphi 0, %s48
    %s51 = sphi 0, %s50
    %s65 = sphi 0, %s51
    %s69 = sphi 0, %s69
    %s71 = sphi 0, %s69
    %s72 = sphi 0, %s71
    %s86 = sphi 0, %s72
    %s90 = sphi 0, %s90
    %s92 = sphi 0, %s90
    %s93 = sphi 0, %s92
    %s107 = sphi 0, %s93
    %s111 = sphi 0, %s111
    %s113 = sphi 0, %s111
    %s114 = sphi 0, %s113
    %s128 = sphi 0, %s114
    %s132 = sphi 0, %s132
    %s134 = sphi 0, %s132
    %s135 = sphi 0, %s134
    %s149 = sphi 0, %s135
    %s153 = sphi 0, %s153
    %s155 = sphi 0, %s153
    %s156 = sphi 0, %s155
    %s170 = sphi 0, %s156
    %s174 = sphi 0, %s174
    %s176 = sphi 0, %s174
    %s177 = sphi 0, %s176
    %s191 = sphi 0, %s177
    %s197 = sphi 0, %s199
    %s200 = sphi 0, %s197
    %s201 = sphi 0, %s200
    %s217 = sphi 0, %s201
  $region4: #{dqn_forward.4} parent=0 // loop_header_branch
    %17 = sbr.rel (%p15) target = $region8
  $region5: #{dqn_forward.4} parent=0 // loop_body
    %s19 = ssub.s32 %s14, 1
    %s20 = ssub.s32 %s14, 2
    %s21 = sadd.s32 %s14, 1
    %s22 = ssub.s32 %s14, %s21
    %p23 = scmp.eq.s32.totalorder %s22, 0
    %s25 = sadd.s32 %s24, 1
    %s26 = scalar_select %p23, %s24, %s25
    %p29 = pneg %p23
    %p30 = scmp.eq.s32.totalorder %s14, 1
    %p31 = por %p29, %p30
    %p32 = scmp.ne.s32.totalorder %s24, %s27
    %p33 = scmp.eq.s32.totalorder %s14, 0
    %p34 = por %p32, %p33
    %p35 = scmp.ne.s32.totalorder %s24, %s27
    %p36 = scmp.eq.s32.totalorder %s19, 1
    %p37 = por %p35, %p36
    %p38 = scmp.ne.s32.totalorder %s27, %s28
    %p39 = scmp.eq.s32.totalorder %s19, 0
    %p40 = por %p38, %p39
    %p41 = scmp.ne.s32.totalorder %s27, %s28
    %p42 = scmp.eq.s32.totalorder %s20, 1
    %p43 = por %p41, %p42
    %p45 = scmp.ne.s32.totalorder %s28, %s44
    %p46 = scmp.eq.s32.totalorder %s20, 0
    %p47 = por %p45, %p46
    %s49 = sadd.s32 %s48, 1
    %p52 = scmp.eq.s32.totalorder %s14, 1
    %p53 = scmp.ne.s32.totalorder %s48, %s50
    %p54 = scmp.eq.s32.totalorder %s14, 0
    %p55 = por %p53, %p54
    %p56 = scmp.ne.s32.totalorder %s48, %s50
    %p57 = scmp.eq.s32.totalorder %s19, 1
    %p58 = por %p56, %p57
    %p59 = scmp.ne.s32.totalorder %s50, %s51
    %p60 = scmp.eq.s32.totalorder %s19, 0
    %p61 = por %p59, %p60
    %p62 = scmp.ne.s32.totalorder %s50, %s51
    %p63 = scmp.eq.s32.totalorder %s20, 1
    %p64 = por %p62, %p63
    %p66 = scmp.ne.s32.totalorder %s51, %s65
    %p67 = scmp.eq.s32.totalorder %s20, 0
    %p68 = por %p66, %p67
    %s70 = sadd.s32 %s69, 1
    %p73 = scmp.eq.s32.totalorder %s14, 1
    %p74 = scmp.ne.s32.totalorder %s69, %s71
    %p75 = scmp.eq.s32.totalorder %s14, 0
    %p76 = por %p74, %p75
    %p77 = scmp.ne.s32.totalorder %s69, %s71
    %p78 = scmp.eq.s32.totalorder %s19, 1
    %p79 = por %p77, %p78
    %p80 = scmp.ne.s32.totalorder %s71, %s72
    %p81 = scmp.eq.s32.totalorder %s19, 0
    %p82 = por %p80, %p81
    %p83 = scmp.ne.s32.totalorder %s71, %s72
    %p84 = scmp.eq.s32.totalorder %s20, 1
    %p85 = por %p83, %p84
    %p87 = scmp.ne.s32.totalorder %s72, %s86
    %p88 = scmp.eq.s32.totalorder %s20, 0
    %p89 = por %p87, %p88
    %s91 = sadd.s32 %s90, 1
    %p94 = scmp.eq.s32.totalorder %s14, 1
    %p95 = scmp.ne.s32.totalorder %s90, %s92
    %p96 = scmp.eq.s32.totalorder %s14, 0
    %p97 = por %p95, %p96
    %p98 = scmp.ne.s32.totalorder %s90, %s92
    %p99 = scmp.eq.s32.totalorder %s19, 1
    %p100 = por %p98, %p99
    %p101 = scmp.ne.s32.totalorder %s92, %s93
    %p102 = scmp.eq.s32.totalorder %s19, 0
    %p103 = por %p101, %p102
    %p104 = scmp.ne.s32.totalorder %s92, %s93
    %p105 = scmp.eq.s32.totalorder %s20, 1
    %p106 = por %p104, %p105
    %p108 = scmp.ne.s32.totalorder %s93, %s107
    %p109 = scmp.eq.s32.totalorder %s20, 0
    %p110 = por %p108, %p109
    %s112 = sadd.s32 %s111, 1
    %p115 = scmp.eq.s32.totalorder %s14, 1
    %p116 = scmp.ne.s32.totalorder %s111, %s113
    %p117 = scmp.eq.s32.totalorder %s14, 0
    %p118 = por %p116, %p117
    %p119 = scmp.ne.s32.totalorder %s111, %s113
    %p120 = scmp.eq.s32.totalorder %s19, 1
    %p121 = por %p119, %p120
    %p122 = scmp.ne.s32.totalorder %s113, %s114
    %p123 = scmp.eq.s32.totalorder %s19, 0
    %p124 = por %p122, %p123
    %p125 = scmp.ne.s32.totalorder %s113, %s114
    %p126 = scmp.eq.s32.totalorder %s20, 1
    %p127 = por %p125, %p126
    %p129 = scmp.ne.s32.totalorder %s114, %s128
    %p130 = scmp.eq.s32.totalorder %s20, 0
    %p131 = por %p129, %p130
    %s133 = sadd.s32 %s132, 1
    %p136 = scmp.eq.s32.totalorder %s14, 1
    %p137 = scmp.ne.s32.totalorder %s132, %s134
    %p138 = scmp.eq.s32.totalorder %s14, 0
    %p139 = por %p137, %p138
    %p140 = scmp.ne.s32.totalorder %s132, %s134
    %p141 = scmp.eq.s32.totalorder %s19, 1
    %p142 = por %p140, %p141
    %p143 = scmp.ne.s32.totalorder %s134, %s135
    %p144 = scmp.eq.s32.totalorder %s19, 0
    %p145 = por %p143, %p144
    %p146 = scmp.ne.s32.totalorder %s134, %s135
    %p147 = scmp.eq.s32.totalorder %s20, 1
    %p148 = por %p146, %p147
    %p150 = scmp.ne.s32.totalorder %s135, %s149
    %p151 = scmp.eq.s32.totalorder %s20, 0
    %p152 = por %p150, %p151
    %s154 = sadd.s32 %s153, 1
    %p157 = scmp.eq.s32.totalorder %s14, 1
    %p158 = scmp.ne.s32.totalorder %s153, %s155
    %p159 = scmp.eq.s32.totalorder %s14, 0
    %p160 = por %p158, %p159
    %p161 = scmp.ne.s32.totalorder %s153, %s155
    %p162 = scmp.eq.s32.totalorder %s19, 1
    %p163 = por %p161, %p162
    %p164 = scmp.ne.s32.totalorder %s155, %s156
    %p165 = scmp.eq.s32.totalorder %s19, 0
    %p166 = por %p164, %p165
    %p167 = scmp.ne.s32.totalorder %s155, %s156
    %p168 = scmp.eq.s32.totalorder %s20, 1
    %p169 = por %p167, %p168
    %p171 = scmp.ne.s32.totalorder %s156, %s170
    %p172 = scmp.eq.s32.totalorder %s20, 0
    %p173 = por %p171, %p172
    %s175 = sadd.s32 %s174, 1
    %p178 = scmp.eq.s32.totalorder %s14, 1
    %p179 = scmp.ne.s32.totalorder %s174, %s176
    %p180 = scmp.eq.s32.totalorder %s14, 0
    %p181 = por %p179, %p180
    %p182 = scmp.ne.s32.totalorder %s174, %s176
    %p183 = scmp.eq.s32.totalorder %s19, 1
    %p184 = por %p182, %p183
    %p185 = scmp.ne.s32.totalorder %s176, %s177
    %p186 = scmp.eq.s32.totalorder %s19, 0
    %p187 = por %p185, %p186
    %p188 = scmp.ne.s32.totalorder %s176, %s177
    %p189 = scmp.eq.s32.totalorder %s20, 1
    %p190 = por %p188, %p189
    %p192 = scmp.ne.s32.totalorder %s177, %s191
    %p193 = scmp.eq.s32.totalorder %s20, 0
    %p194 = por %p192, %p193
    %s195 = ssub.s32 %s14, %s21
    %p196 = scmp.eq.s32.totalorder %s195, 0
    %s198 = sadd.s32 %s197, 1
    %s199 = scalar_select %p196, %s197, %s198
    %p202 = pneg %p196
    %p203 = scmp.eq.s32.totalorder %s14, 1
    %p204 = por %p202, %p203
    %p205 = scmp.ne.s32.totalorder %s197, %s200
    %p206 = scmp.eq.s32.totalorder %s14, 0
    %p207 = por %p205, %p206
    %p208 = scmp.ne.s32.totalorder %s197, %s200
    %p209 = scmp.eq.s32.totalorder %s19, 1
    %p210 = por %p208, %p209
    %p211 = scmp.ne.s32.totalorder %s200, %s201
    %p212 = scmp.eq.s32.totalorder %s19, 0
    %p213 = por %p211, %p212
    %p214 = scmp.ne.s32.totalorder %s200, %s201
    %p215 = scmp.eq.s32.totalorder %s20, 1
    %p216 = por %p214, %p215
    %p218 = scmp.ne.s32.totalorder %s201, %s217
    %p219 = scmp.eq.s32.totalorder %s20, 0
    %p220 = por %p218, %p219
    %p221 = scmp.le.s32.totalorder 1, %s14
    %p222 = scmp.lt.s32.totalorder %s14, 3
    %p223 = pnand %p221, %p222
    %p224 = pneg %p223
    // Predicated region
    $region9: #{dqn_forward.4} parent=5 // pred_check
      _
    $region10: #{dqn_forward.4} parent=5 // pred_check_branch
      %226 = sbr.rel (%p223) target = $region12
    $region11: #{dqn_forward.4} parent=5 // pred_region
      %s227 = ssub.s32 %s14, 1
      // Predicated region
      $region13: #{dqn_forward.4} parent=11 // pred_check
        %p228 = pneg %p61
      $region14: #{dqn_forward.4} parent=11 // pred_check_branch
        %230 = sbr.rel (%p228) target = $region16
      $region15: #{dqn_forward.4} parent=11 // pred_region
        _
      $region16: #{dqn_forward.4} parent=11 // pred_fallthru
        _
      // Predicated region
      $region17: #{dqn_forward.4} parent=11 // pred_check
        %p231 = pneg %p82
      $region18: #{dqn_forward.4} parent=11 // pred_check_branch
        %233 = sbr.rel (%p231) target = $region20
      $region19: #{dqn_forward.4} parent=11 // pred_region
        _
      $region20: #{dqn_forward.4} parent=11 // pred_fallthru
        _
      // Predicated region
      $region21: #{dqn_forward.4} parent=11 // pred_check
        %p234 = pneg %p103
      $region22: #{dqn_forward.4} parent=11 // pred_check_branch
        %236 = sbr.rel (%p234) target = $region24
      $region23: #{dqn_forward.4} parent=11 // pred_region
        _
      $region24: #{dqn_forward.4} parent=11 // pred_fallthru
        _
      // Predicated region
      $region25: #{dqn_forward.4} parent=11 // pred_check
        %p237 = pneg %p124
      $region26: #{dqn_forward.4} parent=11 // pred_check_branch
        %239 = sbr.rel (%p237) target = $region28
      $region27: #{dqn_forward.4} parent=11 // pred_region
        _
      $region28: #{dqn_forward.4} parent=11 // pred_fallthru
        _
      // Predicated region
      $region29: #{dqn_forward.4} parent=11 // pred_check
        %p240 = pneg %p145
      $region30: #{dqn_forward.4} parent=11 // pred_check_branch
        %242 = sbr.rel (%p240) target = $region32
      $region31: #{dqn_forward.4} parent=11 // pred_region
        _
      $region32: #{dqn_forward.4} parent=11 // pred_fallthru
        _
      // Predicated region
      $region33: #{dqn_forward.4} parent=11 // pred_check
        %p243 = pneg %p166
      $region34: #{dqn_forward.4} parent=11 // pred_check_branch
        %245 = sbr.rel (%p243) target = $region36
      $region35: #{dqn_forward.4} parent=11 // pred_region
        _
      $region36: #{dqn_forward.4} parent=11 // pred_fallthru
        _
      // Predicated region
      $region37: #{dqn_forward.4} parent=11 // pred_check
        %p246 = pneg %p187
      $region38: #{dqn_forward.4} parent=11 // pred_check_branch
        %248 = sbr.rel (%p246) target = $region40
      $region39: #{dqn_forward.4} parent=11 // pred_region
        _
      $region40: #{dqn_forward.4} parent=11 // pred_fallthru
        _
    $region12: #{dqn_forward.4} parent=5 // pred_fallthru
      _
    %p249 = scmp.lt.s32.totalorder %s14, 2
    // Predicated region
    $region41: #{dqn_forward.4} parent=5 // pred_check
      %p250 = pneg %p249
    $region42: #{dqn_forward.4} parent=5 // pred_check_branch
      %252 = sbr.rel (%p250) target = $region44
    $region43: #{dqn_forward.4} parent=5 // pred_region
      // Predicated region
      $region45: #{dqn_forward.4} parent=43 // pred_check
        %p253 = pneg %p34
      $region46: #{dqn_forward.4} parent=43 // pred_check_branch
        %255 = sbr.rel (%p253) target = $region48
      $region47: #{dqn_forward.4} parent=43 // pred_region
        %s256 = smul.u32 8, %s14
        %p257 = scmp.lt.s32.totalorder %s256, 15
        %s258 = scalar_select %p257, %s256, 15
        %s259 = smul.addr %s258, 3
        %s260 = smul.addr %s259, 4
        %s261 = scalar_lea.vmem %s0, %s260
        %s262 = smul.u32 8, %s14
      $region48: #{dqn_forward.4} parent=43 // pred_fallthru
        _
    $region44: #{dqn_forward.4} parent=5 // pred_fallthru
      _
    %p263 = scmp.le.s32.totalorder 1, %s14
    %p264 = scmp.lt.s32.totalorder %s14, 3
    %p265 = pnand %p263, %p264
    %p266 = pneg %p265
    // Predicated region
    $region49: #{dqn_forward.4} parent=5 // pred_check
      _
    $region50: #{dqn_forward.4} parent=5 // pred_check_branch
      %268 = sbr.rel (%p265) target = $region52
    $region51: #{dqn_forward.4} parent=5 // pred_region
      %s269 = ssub.s32 %s14, 1
      %s270 = smul.u32 8, %s19
      %p271 = scmp.lt.s32.totalorder %s270, 15
      %s272 = scalar_select %p271, %s270, 15
      %s273 = smul.addr %s272, 3
      %s274 = smul.addr %s273, 4
      %s275 = scalar_lea.vmem %s0, %s274
      %p276 = pneg %p40
      %p277 = pneg %p37
      %p278 = pneg %p61
      %p279 = pneg %p58
      %p280 = pneg %p82
      %p281 = pneg %p79
      %p282 = pneg %p103
      %p283 = pneg %p100
      %p284 = pneg %p124
      %p285 = pneg %p121
      %p286 = pneg %p145
      %p287 = pneg %p142
      %p288 = pneg %p166
      %p289 = pneg %p163
      %p290 = pneg %p187
      %p291 = pneg %p184
      %p292 = pneg %p213
      %p293 = pneg %p210
      %s294 = smul.u32 8, %s19
      %p295 = scmp.lt.s32.totalorder %s294, 15
      %s296 = scalar_select %p295, %s294, 15
      %s297 = smul.addr %s296, 4
      %s298 = scalar_lea.vmem %s8, %s297
      %s299 = smul.u32 8, %s19
      %p300 = scmp.lt.s32.totalorder %s299, 15
      %s301 = scalar_select %p300, %s299, 15
      %s302 = smul.addr %s301, 3
      %s303 = smul.addr %s302, 4
      %s304 = scalar_lea.vmem %s0, %s303
      %s305 = smul.u32 8, %s19
      %s306 = smul.u32 8, %s19
      %p307 = scmp.lt.s32.totalorder %s306, 15
      %s308 = scalar_select %p307, %s306, 15
      %s309 = smul.addr %s308, 4
      %s310 = scalar_lea.vmem %s8, %s309
      %s311 = smul.u32 8, %s19
      %v313 = vld [vmem:[%s304] sm:$0xff]
      %v314 = vld [vmem:[%s304 + $0x8] sm:$0xf]
      %v315 = vld [vmem:[%s304 + $0xc] sm:$0xff]
      %v316 = vld [vmem:[%s304 + $0x14] sm:$0xf]
      %v317 = vld [vmem:[%s304 + $0x18] sm:$0xff]
      %v318 = vld [vmem:[%s304 + $0x20] sm:$0xf]
      %v319 = vld [vmem:[%s304 + $0x24] sm:$0xff]
      %v320 = vld [vmem:[%s304 + $0x2c] sm:$0xf]
      %v321 = vld [vmem:[%s304 + $0x30] sm:$0xff]
      %v322 = vld [vmem:[%s304 + $0x38] sm:$0xf]
      %v323 = vld [vmem:[%s304 + $0x3c] sm:$0xff]
      %v324 = vld [vmem:[%s304 + $0x44] sm:$0xf]
      %v325 = vld [vmem:[%s304 + $0x48] sm:$0xff]
      %v326 = vld [vmem:[%s304 + $0x50] sm:$0xf]
      %v327 = vld [vmem:[%s304 + $0x54] sm:$0xff]
      %v328 = vld [vmem:[%s304 + $0x5c] sm:$0xf]
      %v329 = vld [vmem:[%s1] sm:$0xf]
      %v330 = vld [vmem:[%s1 + $0x4] sm:$0xf]
      %v331 = vld [vmem:[%s1 + $0x8] sm:$0xf]
      %v332 = vld [vmem:[%s1 + $0xc] sm:$0xf]
      %v333 = vld [vmem:[%s1 + $0x10] sm:$0xf]
      %v334 = vld [vmem:[%s1 + $0x14] sm:$0xf]
      %v335 = vld [vmem:[%s1 + $0x18] sm:$0xf]
      %v336 = vld [vmem:[%s1 + $0x1c] sm:$0xf]
      %v337 = vld [vmem:[%s1 + $0x20] sm:$0xf]
      %v338 = vld [vmem:[%s1 + $0x24] sm:$0xf]
      %v339 = vld [vmem:[%s1 + $0x28] sm:$0xf]
      %v340 = vld [vmem:[%s1 + $0x2c] sm:$0xf]
      %v341 = vld [vmem:[%s1 + $0x30] sm:$0xf]
      %v342 = vld [vmem:[%s1 + $0x34] sm:$0xf]
      %v343 = vld [vmem:[%s1 + $0x38] sm:$0xf]
      %v344 = vld [vmem:[%s1 + $0x3c] sm:$0xf]
      %v345 = vld [vmem:[%s1 + $0x40] sm:$0xf]
      %v346 = vld [vmem:[%s1 + $0x44] sm:$0xf]
      %v347 = vld [vmem:[%s1 + $0x48] sm:$0xf]
      %v348 = vld [vmem:[%s1 + $0x4c] sm:$0xf]
      %v349 = vld [vmem:[%s1 + $0x50] sm:$0xf]
      %v350 = vld [vmem:[%s1 + $0x54] sm:$0xf]
      %v351 = vld [vmem:[%s1 + $0x58] sm:$0xf]
      %v352 = vld [vmem:[%s1 + $0x5c] sm:$0xf]
      %v353 = vld [vmem:[%s1 + $0x60] sm:$0xf]
      %v354 = vld [vmem:[%s1 + $0x64] sm:$0xf]
      %v355 = vld [vmem:[%s1 + $0x68] sm:$0xf]
      %v356 = vld [vmem:[%s1 + $0x6c] sm:$0xf]
      %v357 = vld [vmem:[%s1 + $0x70] sm:$0xf]
      %v358 = vld [vmem:[%s1 + $0x74] sm:$0xf]
      %v359 = vld [vmem:[%s1 + $0x78] sm:$0xf]
      %v360 = vld [vmem:[%s1 + $0x7c] sm:$0xf]
      %v361 = vld [vmem:[%s1 + $0x80] sm:$0xf]
      %v362 = vld [vmem:[%s1 + $0x84] sm:$0xf]
      %v363 = vld [vmem:[%s1 + $0x88] sm:$0xf]
      %v364 = vld [vmem:[%s1 + $0x8c] sm:$0xf]
      %v365 = vld [vmem:[%s2] sm:$0x1]
      %v367 = vperm.slane %v365, 0
      %v385 = vunpack.c.l.b16 %v313
      %v386 = vunpack.c.h.b16 %v313
      %v387 = vunpack.c.l.b16 %v314
      %v388 = vunpack.c.l.b16 %v315
      %v389 = vunpack.c.h.b16 %v315
      %v390 = vunpack.c.l.b16 %v316
      %v391 = vunpack.c.l.b16 %v317
      %v392 = vunpack.c.h.b16 %v317
      %v393 = vunpack.c.l.b16 %v318
      %v394 = vunpack.c.l.b16 %v319
      %v395 = vunpack.c.h.b16 %v319
      %v396 = vunpack.c.l.b16 %v320
      %v397 = vunpack.c.l.b16 %v321
      %v398 = vunpack.c.h.b16 %v321
      %v399 = vunpack.c.l.b16 %v322
      %v400 = vunpack.c.l.b16 %v323
      %v401 = vunpack.c.h.b16 %v323
      %v402 = vunpack.c.l.b16 %v324
      %v403 = vunpack.c.l.b16 %v325
      %v404 = vunpack.c.h.b16 %v325
      %v405 = vunpack.c.l.b16 %v326
      %v406 = vunpack.c.l.b16 %v327
      %v407 = vunpack.c.h.b16 %v327
      %v408 = vunpack.c.l.b16 %v328
      %v409 = vpack.c.b16 %v388, %v385
      %v410 = vpack.c.b16 %v389, %v386
      %v411 = vpack.c.b16 %v390, %v387
      %v412 = vpack.c.b16 %v394, %v391
      %v413 = vpack.c.b16 %v395, %v392
      %v414 = vpack.c.b16 %v396, %v393
      %v415 = vpack.c.b16 %v400, %v397
      %v416 = vpack.c.b16 %v401, %v398
      %v417 = vpack.c.b16 %v402, %v399
      %v418 = vpack.c.b16 %v406, %v403
      %v419 = vpack.c.b16 %v407, %v404
      %v420 = vpack.c.b16 %v408, %v405
      %v465 = vunpack.c.l.b16 %v329
      %v466 = vunpack.c.l.b16 %v330
      %v467 = vunpack.c.l.b16 %v331
      %v468 = vunpack.c.l.b16 %v332
      %v469 = vunpack.c.l.b16 %v333
      %v470 = vunpack.c.l.b16 %v334
      %v471 = vunpack.c.l.b16 %v335
      %v472 = vunpack.c.l.b16 %v336
      %v473 = vunpack.c.l.b16 %v337
      %v474 = vunpack.c.l.b16 %v338
      %v475 = vunpack.c.l.b16 %v339
      %v476 = vunpack.c.l.b16 %v340
      %v477 = vunpack.c.l.b16 %v341
      %v478 = vunpack.c.l.b16 %v342
      %v479 = vunpack.c.l.b16 %v343
      %v480 = vunpack.c.l.b16 %v344
      %v481 = vunpack.c.l.b16 %v345
      %v482 = vunpack.c.l.b16 %v346
      %v483 = vunpack.c.l.b16 %v347
      %v484 = vunpack.c.l.b16 %v348
      %v485 = vunpack.c.l.b16 %v349
      %v486 = vunpack.c.l.b16 %v350
      %v487 = vunpack.c.l.b16 %v351
      %v488 = vunpack.c.l.b16 %v352
      %v489 = vunpack.c.l.b16 %v353
      %v490 = vunpack.c.l.b16 %v354
      %v491 = vunpack.c.l.b16 %v355
      %v492 = vunpack.c.l.b16 %v356
      %v493 = vunpack.c.l.b16 %v357
      %v494 = vunpack.c.l.b16 %v358
      %v495 = vunpack.c.l.b16 %v359
      %v496 = vunpack.c.l.b16 %v360
      %v497 = vunpack.c.l.b16 %v361
      %v498 = vunpack.c.l.b16 %v362
      %v499 = vunpack.c.l.b16 %v363
      %v500 = vunpack.c.l.b16 %v364
      %v501 = vpack.c.b16 %v466, %v465
      %v502 = vpack.c.b16 %v468, %v467
      %v503 = vpack.c.b16 %v470, %v469
      %v504 = vpack.c.b16 %v472, %v471
      %v505 = vpack.c.b16 %v474, %v473
      %v506 = vpack.c.b16 %v476, %v475
      %v507 = vpack.c.b16 %v478, %v477
      %v508 = vpack.c.b16 %v480, %v479
      %v509 = vpack.c.b16 %v482, %v481
      %v510 = vpack.c.b16 %v484, %v483
      %v511 = vpack.c.b16 %v486, %v485
      %v512 = vpack.c.b16 %v488, %v487
      %v513 = vpack.c.b16 %v490, %v489
      %v514 = vpack.c.b16 %v492, %v491
      %v515 = vpack.c.b16 %v494, %v493
      %v516 = vpack.c.b16 %v496, %v495
      %v517 = vpack.c.b16 %v498, %v497
      %v518 = vpack.c.b16 %v500, %v499
      %vm537 = vcmask 261120
      %v539 = vsel %vm537, %v411, 0
      %v542 = vsel %vm537, %v414, 0
      %v545 = vsel %vm537, %v417, 0
      %v548 = vsel %vm537, %v420, 0
      %550 = vmatpush.bf16.msra.mxu0 %v508
      %551 = vmatpush.bf16.msra.mxu0 %v507
      %552 = vmatpush.bf16.msra.mxu0 %v506
      %553 = vmatpush.bf16.msra.mxu0 %v505
      %554 = vmatpush.bf16.msra.mxu0 %v504
      %555 = vmatpush.bf16.msra.mxu0 %v503
      %556 = vmatpush.bf16.msra.mxu0 %v502
      %557 = vmatpush.bf16.msra.mxu0 %v501
      %558 = vmatmul.bf16.gmra.mxu0 %v409
      %v559 = vpop.f32.mrf.mxu0
      %v560 = vadd.f32 %v367, %v559
      %v561 = vpop.f32.mrf.mxu0
      %v562 = vadd.f32 %v367, %v561
      %563 = vmatmul.bf16.gmra.mxu0 %v412
      %v564 = vpop.f32.mrf.mxu0
      %v565 = vadd.f32 %v367, %v564
      %v566 = vpop.f32.mrf.mxu0
      %v567 = vadd.f32 %v367, %v566
      %568 = vmatmul.bf16.gmra.mxu0 %v415
      %v569 = vpop.f32.mrf.mxu0
      %v570 = vadd.f32 %v367, %v569
      %v571 = vpop.f32.mrf.mxu0
      %v572 = vadd.f32 %v367, %v571
      %573 = vmatmul.bf16.gmra.mxu0 %v418
      %v574 = vpop.f32.mrf.mxu0
      %v575 = vadd.f32 %v367, %v574
      %v576 = vpop.f32.mrf.mxu0
      %v577 = vadd.f32 %v367, %v576
      %578 = vdwg.mxu0
      %579 = vmatpush.bf16.msra.mxu0 %v516
      %580 = vmatpush.bf16.msra.mxu0 %v515
      %581 = vmatpush.bf16.msra.mxu0 %v514
      %582 = vmatpush.bf16.msra.mxu0 %v513
      %583 = vmatpush.bf16.msra.mxu0 %v512
      %584 = vmatpush.bf16.msra.mxu0 %v511
      %585 = vmatpush.bf16.msra.mxu0 %v510
      %586 = vmatpush.bf16.msra.mxu0 %v509
      %587 = vmatmul.bf16.gmra.mxu0 %v410
      %v588 = vpop.f32.mrf.mxu0
      %v589 = vadd.f32 %v560, %v588
      %v590 = vpop.f32.mrf.mxu0
      %v591 = vadd.f32 %v562, %v590
      %592 = vmatmul.bf16.gmra.mxu0 %v413
      %v593 = vpop.f32.mrf.mxu0
      %v594 = vadd.f32 %v565, %v593
      %v595 = vpop.f32.mrf.mxu0
      %v596 = vadd.f32 %v567, %v595
      %597 = vmatmul.bf16.gmra.mxu0 %v416
      %v598 = vpop.f32.mrf.mxu0
      %v599 = vadd.f32 %v570, %v598
      %v600 = vpop.f32.mrf.mxu0
      %v601 = vadd.f32 %v572, %v600
      %602 = vmatmul.bf16.gmra.mxu0 %v419
      %v603 = vpop.f32.mrf.mxu0
      %v604 = vadd.f32 %v575, %v603
      %v605 = vpop.f32.mrf.mxu0
      %v606 = vadd.f32 %v577, %v605
      %607 = vdwg.mxu0
      %608 = vmatpush.bf16.msra.mxu0 0
      %609 = vmatpush.bf16.msra.mxu0 0
      %610 = vmatpush.bf16.msra.mxu0 0
      %611 = vmatpush.bf16.msra.mxu0 0
      %612 = vmatpush.bf16.msra.mxu0 0
      %613 = vmatpush.bf16.msra.mxu0 0
      %614 = vmatpush.bf16.msra.mxu0 %v518
      %615 = vmatpush.bf16.msra.mxu0 %v517
      %616 = vmatmul.bf16.gmra.mxu0 %v539
      %v617 = vpop.f32.mrf.mxu0
      %v618 = vadd.f32 %v589, %v617
      %v619 = vpop.f32.mrf.mxu0
      %v620 = vadd.f32 %v591, %v619
      %621 = vmatmul.bf16.gmra.mxu0 %v542
      %v622 = vpop.f32.mrf.mxu0
      %v623 = vadd.f32 %v594, %v622
      %v624 = vpop.f32.mrf.mxu0
      %v625 = vadd.f32 %v596, %v624
      %626 = vmatmul.bf16.gmra.mxu0 %v545
      %v627 = vpop.f32.mrf.mxu0
      %v628 = vadd.f32 %v599, %v627
      %v629 = vpop.f32.mrf.mxu0
      %v630 = vadd.f32 %v601, %v629
      %631 = vmatmul.bf16.gmra.mxu0 %v548
      %v632 = vpop.f32.mrf.mxu0
      %v633 = vadd.f32 %v604, %v632
      %v634 = vpop.f32.mrf.mxu0
      %v635 = vadd.f32 %v606, %v634
      %636 = vdwg.mxu0
      %v637 = vld [vmem:[%s3] sm:$0x1]
      %v638 = vld [vmem:[%s4] sm:$0x1]
      %v639 = vld [vmem:[%s5] sm:$0xff]
      %v640 = vld [vmem:[%s5 + $0x8] sm:$0xff]
      %v641 = vld [vmem:[%s5 + $0x10] sm:$0xff]
      %v642 = vld [vmem:[%s5 + $0x18] sm:$0xff]
      %v643 = vld [vmem:[%s5 + $0x20] sm:$0xff]
      %v644 = vld [vmem:[%s5 + $0x28] sm:$0xff]
      %v645 = vld [vmem:[%s5 + $0x30] sm:$0xff]
      %v646 = vld [vmem:[%s5 + $0x38] sm:$0xff]
      %v647 = vld [vmem:[%s5 + $0x40] sm:$0xff]
      %v648 = vld [vmem:[%s5 + $0x48] sm:$0xff]
      %v649 = vld [vmem:[%s5 + $0x50] sm:$0xff]
      %v650 = vld [vmem:[%s5 + $0x58] sm:$0xff]
      %v651 = vld [vmem:[%s5 + $0x60] sm:$0xff]
      %v652 = vld [vmem:[%s5 + $0x68] sm:$0xff]
      %v653 = vld [vmem:[%s5 + $0x70] sm:$0xff]
      %v654 = vld [vmem:[%s5 + $0x78] sm:$0xff]
      %v655 = vld [vmem:[%s6] sm:$0x1]
      %vm656 = vcmask 523264
      %v658 = vsel %vm656, %v655, 0
      %660 = vmatpush.msra.mxu0 0.0
      %661 = vmatpush.msra.mxu0 0.0
      %662 = vmatpush.msra.mxu0 0.0
      %663 = vmatpush.msra.mxu0 0.0
      %664 = vmatpush.msra.mxu0 0.0
      %665 = vmatpush.msra.mxu0 0.0
      %666 = vmatpush.msra.mxu0 0.0
      %667 = vmatpush.msra.mxu0 0.0
      %668 = vmatpush.msra.mxu0 %v635
      %669 = vmatpush.msra.mxu0 %v633
      %670 = vmatpush.msra.mxu0 %v630
      %671 = vmatpush.msra.mxu0 %v628
      %672 = vmatpush.msra.mxu0 %v625
      %673 = vmatpush.msra.mxu0 %v623
      %674 = vmatpush.msra.mxu0 %v620
      %675 = vmatpush.msra.mxu0 %v618
      %676 = vmatmul.f32.gmra.mxu0 %v658
      %v677 = vpop.f32.mrf.mxu0
      %v678 = vadd.f32 0.0, %v677
      %679 = vdwg.mxu0
      %680 = vmatpush.msra.mxu0 %v654
      %681 = vmatpush.msra.mxu0 %v653
      %682 = vmatpush.msra.mxu0 %v652
      %683 = vmatpush.msra.mxu0 %v651
      %684 = vmatpush.msra.mxu0 %v650
      %685 = vmatpush.msra.mxu0 %v649
      %686 = vmatpush.msra.mxu0 %v648
      %687 = vmatpush.msra.mxu0 %v647
      %688 = vmatpush.msra.mxu0 %v646
      %689 = vmatpush.msra.mxu0 %v645
      %690 = vmatpush.msra.mxu0 %v644
      %691 = vmatpush.msra.mxu0 %v643
      %692 = vmatpush.msra.mxu0 %v642
      %693 = vmatpush.msra.mxu0 %v641
      %694 = vmatpush.msra.mxu0 %v640
      %695 = vmatpush.msra.mxu0 %v639
      %696 = vmatmul.f32.gmra.mxu0 %v678
      %v697 = vpop.f32.mrf.mxu0
      %v698 = vadd.f32 0.0, %v697
      %699 = vdwg.mxu0
      %v700 = vmul.f32 %v698, 0.001953125
      %v701 = vperm.slane %v700, 0
      %v702 = vsub.f32 %v618, %v701
      %v703 = vsub.f32 %v620, %v701
      %v704 = vsub.f32 %v623, %v701
      %v705 = vsub.f32 %v625, %v701
      %v706 = vsub.f32 %v628, %v701
      %v707 = vsub.f32 %v630, %v701
      %v708 = vsub.f32 %v633, %v701
      %v709 = vsub.f32 %v635, %v701
      %v710 = vmul.f32 %v702, %v702
      %v711 = vmul.f32 %v703, %v703
      %v712 = vmul.f32 %v704, %v704
      %v713 = vmul.f32 %v705, %v705
      %v714 = vmul.f32 %v706, %v706
      %v715 = vmul.f32 %v707, %v707
      %v716 = vmul.f32 %v708, %v708
      %v717 = vmul.f32 %v709, %v709
      %718 = vmatpush.msra.mxu0 0.0
      %719 = vmatpush.msra.mxu0 0.0
      %720 = vmatpush.msra.mxu0 0.0
      %721 = vmatpush.msra.mxu0 0.0
      %722 = vmatpush.msra.mxu0 0.0
      %723 = vmatpush.msra.mxu0 0.0
      %724 = vmatpush.msra.mxu0 0.0
      %725 = vmatpush.msra.mxu0 0.0
      %726 = vmatpush.msra.mxu0 %v717
      %727 = vmatpush.msra.mxu0 %v716
      %728 = vmatpush.msra.mxu0 %v715
      %729 = vmatpush.msra.mxu0 %v714
      %730 = vmatpush.msra.mxu0 %v713
      %731 = vmatpush.msra.mxu0 %v712
      %732 = vmatpush.msra.mxu0 %v711
      %733 = vmatpush.msra.mxu0 %v710
      %734 = vmatmul.f32.gmra.mxu0 %v658
      %v735 = vpop.f32.mrf.mxu0
      %v736 = vadd.f32 0.0, %v735
      %737 = vdwg.mxu0
      %738 = vmatpush.msra.mxu0 %v654
      %739 = vmatpush.msra.mxu0 %v653
      %740 = vmatpush.msra.mxu0 %v652
      %741 = vmatpush.msra.mxu0 %v651
      %742 = vmatpush.msra.mxu0 %v650
      %743 = vmatpush.msra.mxu0 %v649
      %744 = vmatpush.msra.mxu0 %v648
      %745 = vmatpush.msra.mxu0 %v647
      %746 = vmatpush.msra.mxu0 %v646
      %747 = vmatpush.msra.mxu0 %v645
      %748 = vmatpush.msra.mxu0 %v644
      %749 = vmatpush.msra.mxu0 %v643
      %750 = vmatpush.msra.mxu0 %v642
      %751 = vmatpush.msra.mxu0 %v641
      %752 = vmatpush.msra.mxu0 %v640
      %753 = vmatpush.msra.mxu0 %v639
      %754 = vmatmul.f32.gmra.mxu0 %v736
      %v755 = vpop.f32.mrf.mxu0
      %v756 = vadd.f32 0.0, %v755
      %757 = vdwg.mxu0
      %v758 = vmul.f32 %v756, 0.001953125
      %v759 = vadd.f32 %v758, 1e-05
      %v760 = vrsqrt.pop %v759
      %v761 = vmul.f32 %v760, %v759
      %v762 = vmul.f32 %v761, %v760
      %v763 = vmul.f32 0.5, %v762
      %v764 = vsub.f32 1.5, %v763
      %v765 = vmul.f32 %v760, %v764
      %vm766 = vweird.f32 %v759
      %vm767 = vweird.f32 %v760
      %vm768 = vmor %vm766, %vm767
      %v769 = vsel %vm768, %v760, %v765
      %v770 = vmul.f32 %v769, %v637
      %v771 = vperm.slane %v770, 0
      %v772 = vmul.f32 %v702, %v771
      %v773 = vmul.f32 %v703, %v771
      %v774 = vmul.f32 %v704, %v771
      %v775 = vmul.f32 %v705, %v771
      %v776 = vmul.f32 %v706, %v771
      %v777 = vmul.f32 %v707, %v771
      %v778 = vmul.f32 %v708, %v771
      %v779 = vmul.f32 %v709, %v771
      %v781 = vperm.slane %v638, 0
      %v783 = vadd.f32 %v772, %v781
      %v784 = vadd.f32 %v773, %v781
      %v785 = vadd.f32 %v774, %v781
      %v786 = vadd.f32 %v775, %v781
      %v787 = vadd.f32 %v776, %v781
      %v788 = vadd.f32 %v777, %v781
      %v789 = vadd.f32 %v778, %v781
      %v790 = vadd.f32 %v779, %v781
      %v791 = vmax.f32 %v783, 0.0
      %v792 = vmax.f32 %v784, 0.0
      %v793 = vmax.f32 %v785, 0.0
      %v794 = vmax.f32 %v786, 0.0
      %v795 = vmax.f32 %v787, 0.0
      %v796 = vmax.f32 %v788, 0.0
      %v797 = vmax.f32 %v789, 0.0
      %v798 = vmax.f32 %v790, 0.0
      %v799 = vpack.c.bf16 %v791, %v791
      %v800 = vpack.c.bf16 %v792, %v792
      %v801 = vpack.c.bf16 %v793, %v793
      %v802 = vpack.c.bf16 %v794, %v794
      %v803 = vpack.c.bf16 %v795, %v795
      %v804 = vpack.c.bf16 %v796, %v796
      %v805 = vpack.c.bf16 %v797, %v797
      %v806 = vpack.c.bf16 %v798, %v798
      %vm807 = vcmask 519168
      %808 = vst.msk [vmem:[%s310] sm:$0xf] %vm807, %v799
      %809 = vst.msk [vmem:[%s310 + $0x4] sm:$0xf] %vm807, %v800
      %810 = vst.msk [vmem:[%s310 + $0x8] sm:$0xf] %vm807, %v801
      %811 = vst.msk [vmem:[%s310 + $0xc] sm:$0xf] %vm807, %v802
      %812 = vst.msk [vmem:[%s310 + $0x10] sm:$0xf] %vm807, %v803
      %813 = vst.msk [vmem:[%s310 + $0x14] sm:$0xf] %vm807, %v804
      %814 = vst.msk [vmem:[%s310 + $0x18] sm:$0xf] %vm807, %v805
      %815 = vst.msk [vmem:[%s310 + $0x1c] sm:$0xf] %vm807, %v806
      %s816 = smul.u32 8, %s19
      %p817 = scmp.lt.s32.totalorder %s816, 15
      %s818 = scalar_select %p817, %s816, 15
      %s819 = smul.addr %s818, 4
      %s820 = scalar_lea.vmem %s8, %s819
      // Predicated region
      $region53: #{dqn_forward.4} parent=51 // pred_check
        %p821 = pneg %p210
      $region54: #{dqn_forward.4} parent=51 // pred_check_branch
        %823 = sbr.rel (%p821) target = $region56
      $region55: #{dqn_forward.4} parent=51 // pred_region
        %s824 = smul.u32 8, %s19
      $region56: #{dqn_forward.4} parent=51 // pred_fallthru
        _
    $region52: #{dqn_forward.4} parent=5 // pred_fallthru
      _
    %p825 = scmp.le.s32.totalorder 2, %s14
    // Predicated region
    $region57: #{dqn_forward.4} parent=5 // pred_check
      %p826 = pneg %p825
    $region58: #{dqn_forward.4} parent=5 // pred_check_branch
      %828 = sbr.rel (%p826) target = $region60
    $region59: #{dqn_forward.4} parent=5 // pred_region
      %s829 = ssub.s32 %s14, 2
      // Predicated region
      $region61: #{dqn_forward.4} parent=59 // pred_check
        %p830 = pneg %p216
      $region62: #{dqn_forward.4} parent=59 // pred_check_branch
        %832 = sbr.rel (%p830) target = $region64
      $region63: #{dqn_forward.4} parent=59 // pred_region
        %s833 = smul.u32 8, %s20
        %p834 = scmp.lt.s32.totalorder %s833, 15
        %s835 = scalar_select %p834, %s833, 15
        %s836 = smul.addr %s835, 4
        %s837 = scalar_lea.vmem %s8, %s836
      $region64: #{dqn_forward.4} parent=59 // pred_fallthru
        _
    $region60: #{dqn_forward.4} parent=5 // pred_fallthru
      _
  $region6: #{dqn_forward.4} parent=0 // loop_footer
    %s18 = sadd.s32 1, %s14
  $region7: #{dqn_forward.4} parent=0 // loop_footer_branch
    %13 = sbr.rel target = $region3
  $region8: #{dqn_forward.4} parent=0 // loop_exit
    _

// kernel: dqn_forward.5
$region0: #{dqn_forward.5}
  #allocation0 [shape = 'u32[]', space=smem, size = 0x4, offset = 0x4, fixed_abs, tag = 'smem constant byte address 0x4 - core index']
  #allocation1 [shape = 'u32[72,128]{1,0:T(1,128)}', space=vmem, size = 0x9000, scoped, tag = 'internal scratch']
  %s0 = inlined_call_operand.vmem [shape: bf16[32,576], index: 0, kind: input, shape index: {}]
  %s1 = inlined_call_operand.vmem [shape: bf16[576,128], index: 1, kind: input, shape index: {}]
  %s2 = inlined_call_operand.vmem [shape: f32[1,128], index: 2, kind: input, shape index: {}]
  %s3 = inlined_call_operand.vmem [shape: f32[1,128], index: 3, kind: input, shape index: {}]
  %s4 = inlined_call_operand.vmem [shape: f32[1,128], index: 4, kind: input, shape index: {}]
  %s5 = inlined_call_operand.vmem [shape: f32[128,128], index: 5, kind: input, shape index: {}]
  %s6 = inlined_call_operand.vmem [shape: f32[2,32], index: 6, kind: input, shape index: {}]
  %s7 = inlined_call_operand.vmem [shape: f32[32,2], index: 7, kind: input, shape index: {}]
  %s8 = inlined_call_operand.vmem [shape: bf16[128,128], index: 8, kind: input, shape index: {}]
  %s9 = inlined_call_operand.vmem [shape: f32[1,128], index: 9, kind: input, shape index: {}]
  %s10 = inlined_call_operand.vmem [shape: bf16[128,128], index: 10, kind: input, shape index: {}]
  %s11 = inlined_call_operand.vmem [shape: f32[1,128], index: 11, kind: input, shape index: {}]
  %s12 = inlined_call_operand.hbm [shape: f32[2,128], index: 12, kind: output, shape index: {}]
  %s13 = sld [smem:[#allocation0]]
  $region58: #{dqn_forward.5} parent=0
    _
  %s15 = ssub.s32 1, %s13
  %s16 = scalar_select 0, %s15, %s13
  $region1: #{dqn_forward.5} parent=0
    #allocation2 [shape = 'u8[1024]{0}', space=vmem, size = 0x400, scoped, tag = 'output window, operand 0, single buffered']
    #allocation3 [shape = 's32[1]{0}', space=sflag, size = 0x4, scoped, tag = 'scoped memory for dqn_forward.5']
    %17 = vsyncpa [#allocation3], 0
    // Predicated region
    $region2: #{dqn_forward.5} parent=1 // pred_check
      _
    $region3: #{dqn_forward.5} parent=1 // pred_check_branch
      %19 = sbr.rel (0) target = $region5
    $region4: #{dqn_forward.5} parent=1 // pred_region
      _
    $region5: #{dqn_forward.5} parent=1 // pred_fallthru
      _
    // Predicated region
    $region6: #{dqn_forward.5} parent=1 // pred_check
      _
    $region7: #{dqn_forward.5} parent=1 // pred_check_branch
      %21 = sbr.rel (0) target = $region9
    $region8: #{dqn_forward.5} parent=1 // pred_region
      _
    $region9: #{dqn_forward.5} parent=1 // pred_fallthru
      _
    // Predicated region
    $region10: #{dqn_forward.5} parent=1 // pred_check
      _
    $region11: #{dqn_forward.5} parent=1 // pred_check_branch
      %23 = sbr.rel (0) target = $region13
    $region12: #{dqn_forward.5} parent=1 // pred_region
      _
    $region13: #{dqn_forward.5} parent=1 // pred_fallthru
      _
    // Predicated region
    $region14: #{dqn_forward.5} parent=1 // pred_check
      _
    $region15: #{dqn_forward.5} parent=1 // pred_check_branch
      %25 = sbr.rel (0) target = $region17
    $region16: #{dqn_forward.5} parent=1 // pred_region
      _
    $region17: #{dqn_forward.5} parent=1 // pred_fallthru
      _
    // Predicated region
    $region18: #{dqn_forward.5} parent=1 // pred_check
      _
    $region19: #{dqn_forward.5} parent=1 // pred_check_branch
      %27 = sbr.rel (0) target = $region21
    $region20: #{dqn_forward.5} parent=1 // pred_region
      _
    $region21: #{dqn_forward.5} parent=1 // pred_fallthru
      _
    // Predicated region
    $region22: #{dqn_forward.5} parent=1 // pred_check
      _
    $region23: #{dqn_forward.5} parent=1 // pred_check_branch
      %29 = sbr.rel (0) target = $region25
    $region24: #{dqn_forward.5} parent=1 // pred_region
      _
    $region25: #{dqn_forward.5} parent=1 // pred_fallthru
      _
    // Predicated region
    $region26: #{dqn_forward.5} parent=1 // pred_check
      _
    $region27: #{dqn_forward.5} parent=1 // pred_check_branch
      %31 = sbr.rel (0) target = $region29
    $region28: #{dqn_forward.5} parent=1 // pred_region
      _
    $region29: #{dqn_forward.5} parent=1 // pred_fallthru
      _
    // Predicated region
    $region30: #{dqn_forward.5} parent=1 // pred_check
      _
    $region31: #{dqn_forward.5} parent=1 // pred_check_branch
      %33 = sbr.rel (0) target = $region33
    $region32: #{dqn_forward.5} parent=1 // pred_region
      _
    $region33: #{dqn_forward.5} parent=1 // pred_fallthru
      _
    // Predicated region
    $region34: #{dqn_forward.5} parent=1 // pred_check
      _
    $region35: #{dqn_forward.5} parent=1 // pred_check_branch
      %35 = sbr.rel (0) target = $region37
    $region36: #{dqn_forward.5} parent=1 // pred_region
      _
    $region37: #{dqn_forward.5} parent=1 // pred_fallthru
      _
    // Predicated region
    $region38: #{dqn_forward.5} parent=1 // pred_check
      _
    $region39: #{dqn_forward.5} parent=1 // pred_check_branch
      %37 = sbr.rel (0) target = $region41
    $region40: #{dqn_forward.5} parent=1 // pred_region
      _
    $region41: #{dqn_forward.5} parent=1 // pred_fallthru
      _
    // Predicated region
    $region42: #{dqn_forward.5} parent=1 // pred_check
      _
    $region43: #{dqn_forward.5} parent=1 // pred_check_branch
      %39 = sbr.rel (0) target = $region45
    $region44: #{dqn_forward.5} parent=1 // pred_region
      _
    $region45: #{dqn_forward.5} parent=1 // pred_fallthru
      _
    // Predicated region
    $region46: #{dqn_forward.5} parent=1 // pred_check
      _
    $region47: #{dqn_forward.5} parent=1 // pred_check_branch
      %41 = sbr.rel (0) target = $region49
    $region48: #{dqn_forward.5} parent=1 // pred_region
      _
    $region49: #{dqn_forward.5} parent=1 // pred_fallthru
      _
    %v43 = vld [vmem:[%s0] sm:$0xff]
    %v44 = vld [vmem:[%s0 + $0x8] sm:$0xff]
    %v45 = vld [vmem:[%s0 + $0x10] sm:$0xf]
    %v46 = vld [vmem:[%s0 + $0x14] sm:$0xff]
    %v47 = vld [vmem:[%s0 + $0x1c] sm:$0xff]
    %v48 = vld [vmem:[%s0 + $0x24] sm:$0xf]
    %v49 = vld [vmem:[%s0 + $0x28] sm:$0xff]
    %v50 = vld [vmem:[%s0 + $0x30] sm:$0xff]
    %v51 = vld [vmem:[%s0 + $0x38] sm:$0xf]
    %v52 = vld [vmem:[%s0 + $0x3c] sm:$0xff]
    %v53 = vld [vmem:[%s0 + $0x44] sm:$0xff]
    %v54 = vld [vmem:[%s0 + $0x4c] sm:$0xf]
    %v55 = vld [vmem:[%s1] sm:$0xf]
    %v56 = vld [vmem:[%s1 + $0x4] sm:$0xf]
    %v57 = vld [vmem:[%s1 + $0x8] sm:$0xf]
    %v58 = vld [vmem:[%s1 + $0xc] sm:$0xf]
    %v59 = vld [vmem:[%s1 + $0x10] sm:$0xf]
    %v60 = vld [vmem:[%s1 + $0x14] sm:$0xf]
    %v61 = vld [vmem:[%s1 + $0x18] sm:$0xf]
    %v62 = vld [vmem:[%s1 + $0x1c] sm:$0xf]
    %v63 = vld [vmem:[%s1 + $0x20] sm:$0xf]
    %v64 = vld [vmem:[%s1 + $0x24] sm:$0xf]
    %v65 = vld [vmem:[%s1 + $0x28] sm:$0xf]
    %v66 = vld [vmem:[%s1 + $0x2c] sm:$0xf]
    %v67 = vld [vmem:[%s1 + $0x30] sm:$0xf]
    %v68 = vld [vmem:[%s1 + $0x34] sm:$0xf]
    %v69 = vld [vmem:[%s1 + $0x38] sm:$0xf]
    %v70 = vld [vmem:[%s1 + $0x3c] sm:$0xf]
    %v71 = vld [vmem:[%s1 + $0x40] sm:$0xf]
    %v72 = vld [vmem:[%s1 + $0x44] sm:$0xf]
    %v73 = vld [vmem:[%s1 + $0x48] sm:$0xf]
    %v74 = vld [vmem:[%s1 + $0x4c] sm:$0xf]
    %v75 = vld [vmem:[%s1 + $0x50] sm:$0xf]
    %v76 = vld [vmem:[%s1 + $0x54] sm:$0xf]
    %v77 = vld [vmem:[%s1 + $0x58] sm:$0xf]
    %v78 = vld [vmem:[%s1 + $0x5c] sm:$0xf]
    %v79 = vld [vmem:[%s1 + $0x60] sm:$0xf]
    %v80 = vld [vmem:[%s1 + $0x64] sm:$0xf]
    %v81 = vld [vmem:[%s1 + $0x68] sm:$0xf]
    %v82 = vld [vmem:[%s1 + $0x6c] sm:$0xf]
    %v83 = vld [vmem:[%s1 + $0x70] sm:$0xf]
    %v84 = vld [vmem:[%s1 + $0x74] sm:$0xf]
    %v85 = vld [vmem:[%s1 + $0x78] sm:$0xf]
    %v86 = vld [vmem:[%s1 + $0x7c] sm:$0xf]
    %v87 = vld [vmem:[%s1 + $0x80] sm:$0xf]
    %v88 = vld [vmem:[%s1 + $0x84] sm:$0xf]
    %v89 = vld [vmem:[%s1 + $0x88] sm:$0xf]
    %v90 = vld [vmem:[%s1 + $0x8c] sm:$0xf]
    %v91 = vld [vmem:[%s1 + $0x90] sm:$0xf]
    %v92 = vld [vmem:[%s1 + $0x94] sm:$0xf]
    %v93 = vld [vmem:[%s1 + $0x98] sm:$0xf]
    %v94 = vld [vmem:[%s1 + $0x9c] sm:$0xf]
    %v95 = vld [vmem:[%s1 + $0xa0] sm:$0xf]
    %v96 = vld [vmem:[%s1 + $0xa4] sm:$0xf]
    %v97 = vld [vmem:[%s1 + $0xa8] sm:$0xf]
    %v98 = vld [vmem:[%s1 + $0xac] sm:$0xf]
    %v99 = vld [vmem:[%s1 + $0xb0] sm:$0xf]
    %v100 = vld [vmem:[%s1 + $0xb4] sm:$0xf]
    %v101 = vld [vmem:[%s1 + $0xb8] sm:$0xf]
    %v102 = vld [vmem:[%s1 + $0xbc] sm:$0xf]
    %v103 = vld [vmem:[%s1 + $0xc0] sm:$0xf]
    %v104 = vld [vmem:[%s1 + $0xc4] sm:$0xf]
    %v105 = vld [vmem:[%s1 + $0xc8] sm:$0xf]
    %v106 = vld [vmem:[%s1 + $0xcc] sm:$0xf]
    %v107 = vld [vmem:[%s1 + $0xd0] sm:$0xf]
    %v108 = vld [vmem:[%s1 + $0xd4] sm:$0xf]
    %v109 = vld [vmem:[%s1 + $0xd8] sm:$0xf]
    %v110 = vld [vmem:[%s1 + $0xdc] sm:$0xf]
    %v111 = vld [vmem:[%s1 + $0xe0] sm:$0xf]
    %v112 = vld [vmem:[%s1 + $0xe4] sm:$0xf]
    %v113 = vld [vmem:[%s1 + $0xe8] sm:$0xf]
    %v114 = vld [vmem:[%s1 + $0xec] sm:$0xf]
    %v115 = vld [vmem:[%s1 + $0xf0] sm:$0xf]
    %v116 = vld [vmem:[%s1 + $0xf4] sm:$0xf]
    %v117 = vld [vmem:[%s1 + $0xf8] sm:$0xf]
    %v118 = vld [vmem:[%s1 + $0xfc] sm:$0xf]
    %v119 = vld [vmem:[%s1 + $0x100] sm:$0xf]
    %v120 = vld [vmem:[%s1 + $0x104] sm:$0xf]
    %v121 = vld [vmem:[%s1 + $0x108] sm:$0xf]
    %v122 = vld [vmem:[%s1 + $0x10c] sm:$0xf]
    %v123 = vld [vmem:[%s1 + $0x110] sm:$0xf]
    %v124 = vld [vmem:[%s1 + $0x114] sm:$0xf]
    %v125 = vld [vmem:[%s1 + $0x118] sm:$0xf]
    %v126 = vld [vmem:[%s1 + $0x11c] sm:$0xf]
    %v127 = vld [vmem:[%s2] sm:$0x1]
    %v129 = vperm.slane %v127, 0
    %v143 = vunpack.c.l.b16 %v43
    %v144 = vunpack.c.h.b16 %v43
    %v145 = vunpack.c.l.b16 %v44
    %v146 = vunpack.c.h.b16 %v44
    %v147 = vunpack.c.l.b16 %v45
    %v148 = vunpack.c.l.b16 %v46
    %v149 = vunpack.c.h.b16 %v46
    %v150 = vunpack.c.l.b16 %v47
    %v151 = vunpack.c.h.b16 %v47
    %v152 = vunpack.c.l.b16 %v48
    %v153 = vunpack.c.l.b16 %v49
    %v154 = vunpack.c.h.b16 %v49
    %v155 = vunpack.c.l.b16 %v50
    %v156 = vunpack.c.h.b16 %v50
    %v157 = vunpack.c.l.b16 %v51
    %v158 = vunpack.c.l.b16 %v52
    %v159 = vunpack.c.h.b16 %v52
    %v160 = vunpack.c.l.b16 %v53
    %v161 = vunpack.c.h.b16 %v53
    %v162 = vunpack.c.l.b16 %v54
    %v163 = vpack.c.b16 %v148, %v143
    %v164 = vpack.c.b16 %v149, %v144
    %v165 = vpack.c.b16 %v150, %v145
    %v166 = vpack.c.b16 %v151, %v146
    %v167 = vpack.c.b16 %v152, %v147
    %v168 = vpack.c.b16 %v158, %v153
    %v169 = vpack.c.b16 %v159, %v154
    %v170 = vpack.c.b16 %v160, %v155
    %v171 = vpack.c.b16 %v161, %v156
    %v172 = vpack.c.b16 %v162, %v157
    %v253 = vunpack.c.l.b16 %v55
    %v254 = vunpack.c.l.b16 %v56
    %v255 = vunpack.c.l.b16 %v57
    %v256 = vunpack.c.l.b16 %v58
    %v257 = vunpack.c.l.b16 %v59
    %v258 = vunpack.c.l.b16 %v60
    %v259 = vunpack.c.l.b16 %v61
    %v260 = vunpack.c.l.b16 %v62
    %v261 = vunpack.c.l.b16 %v63
    %v262 = vunpack.c.l.b16 %v64
    %v263 = vunpack.c.l.b16 %v65
    %v264 = vunpack.c.l.b16 %v66
    %v265 = vunpack.c.l.b16 %v67
    %v266 = vunpack.c.l.b16 %v68
    %v267 = vunpack.c.l.b16 %v69
    %v268 = vunpack.c.l.b16 %v70
    %v269 = vunpack.c.l.b16 %v71
    %v270 = vunpack.c.l.b16 %v72
    %v271 = vunpack.c.l.b16 %v73
    %v272 = vunpack.c.l.b16 %v74
    %v273 = vunpack.c.l.b16 %v75
    %v274 = vunpack.c.l.b16 %v76
    %v275 = vunpack.c.l.b16 %v77
    %v276 = vunpack.c.l.b16 %v78
    %v277 = vunpack.c.l.b16 %v79
    %v278 = vunpack.c.l.b16 %v80
    %v279 = vunpack.c.l.b16 %v81
    %v280 = vunpack.c.l.b16 %v82
    %v281 = vunpack.c.l.b16 %v83
    %v282 = vunpack.c.l.b16 %v84
    %v283 = vunpack.c.l.b16 %v85
    %v284 = vunpack.c.l.b16 %v86
    %v285 = vunpack.c.l.b16 %v87
    %v286 = vunpack.c.l.b16 %v88
    %v287 = vunpack.c.l.b16 %v89
    %v288 = vunpack.c.l.b16 %v90
    %v289 = vunpack.c.l.b16 %v91
    %v290 = vunpack.c.l.b16 %v92
    %v291 = vunpack.c.l.b16 %v93
    %v292 = vunpack.c.l.b16 %v94
    %v293 = vunpack.c.l.b16 %v95
    %v294 = vunpack.c.l.b16 %v96
    %v295 = vunpack.c.l.b16 %v97
    %v296 = vunpack.c.l.b16 %v98
    %v297 = vunpack.c.l.b16 %v99
    %v298 = vunpack.c.l.b16 %v100
    %v299 = vunpack.c.l.b16 %v101
    %v300 = vunpack.c.l.b16 %v102
    %v301 = vunpack.c.l.b16 %v103
    %v302 = vunpack.c.l.b16 %v104
    %v303 = vunpack.c.l.b16 %v105
    %v304 = vunpack.c.l.b16 %v106
    %v305 = vunpack.c.l.b16 %v107
    %v306 = vunpack.c.l.b16 %v108
    %v307 = vunpack.c.l.b16 %v109
    %v308 = vunpack.c.l.b16 %v110
    %v309 = vunpack.c.l.b16 %v111
    %v310 = vunpack.c.l.b16 %v112
    %v311 = vunpack.c.l.b16 %v113
    %v312 = vunpack.c.l.b16 %v114
    %v313 = vunpack.c.l.b16 %v115
    %v314 = vunpack.c.l.b16 %v116
    %v315 = vunpack.c.l.b16 %v117
    %v316 = vunpack.c.l.b16 %v118
    %v317 = vunpack.c.l.b16 %v119
    %v318 = vunpack.c.l.b16 %v120
    %v319 = vunpack.c.l.b16 %v121
    %v320 = vunpack.c.l.b16 %v122
    %v321 = vunpack.c.l.b16 %v123
    %v322 = vunpack.c.l.b16 %v124
    %v323 = vunpack.c.l.b16 %v125
    %v324 = vunpack.c.l.b16 %v126
    %v325 = vpack.c.b16 %v254, %v253
    %v326 = vpack.c.b16 %v256, %v255
    %v327 = vpack.c.b16 %v258, %v257
    %v328 = vpack.c.b16 %v260, %v259
    %v329 = vpack.c.b16 %v262, %v261
    %v330 = vpack.c.b16 %v264, %v263
    %v331 = vpack.c.b16 %v266, %v265
    %v332 = vpack.c.b16 %v268, %v267
    %v333 = vpack.c.b16 %v270, %v269
    %v334 = vpack.c.b16 %v272, %v271
    %v335 = vpack.c.b16 %v274, %v273
    %v336 = vpack.c.b16 %v276, %v275
    %v337 = vpack.c.b16 %v278, %v277
    %v338 = vpack.c.b16 %v280, %v279
    %v339 = vpack.c.b16 %v282, %v281
    %v340 = vpack.c.b16 %v284, %v283
    %v341 = vpack.c.b16 %v286, %v285
    %v342 = vpack.c.b16 %v288, %v287
    %v343 = vpack.c.b16 %v290, %v289
    %v344 = vpack.c.b16 %v292, %v291
    %v345 = vpack.c.b16 %v294, %v293
    %v346 = vpack.c.b16 %v296, %v295
    %v347 = vpack.c.b16 %v298, %v297
    %v348 = vpack.c.b16 %v300, %v299
    %v349 = vpack.c.b16 %v302, %v301
    %v350 = vpack.c.b16 %v304, %v303
    %v351 = vpack.c.b16 %v306, %v305
    %v352 = vpack.c.b16 %v308, %v307
    %v353 = vpack.c.b16 %v310, %v309
    %v354 = vpack.c.b16 %v312, %v311
    %v355 = vpack.c.b16 %v314, %v313
    %v356 = vpack.c.b16 %v316, %v315
    %v357 = vpack.c.b16 %v318, %v317
    %v358 = vpack.c.b16 %v320, %v319
    %v359 = vpack.c.b16 %v322, %v321
    %v360 = vpack.c.b16 %v324, %v323
    %vm397 = vcmask 523264
    %v399 = vsel %vm397, %v167, 0
    %v402 = vsel %vm397, %v172, 0
    %404 = vmatpush.bf16.msra.mxu0 %v332
    %405 = vmatpush.bf16.msra.mxu0 %v331
    %406 = vmatpush.bf16.msra.mxu0 %v330
    %407 = vmatpush.bf16.msra.mxu0 %v329
    %408 = vmatpush.bf16.msra.mxu0 %v328
    %409 = vmatpush.bf16.msra.mxu0 %v327
    %410 = vmatpush.bf16.msra.mxu0 %v326
    %411 = vmatpush.bf16.msra.mxu0 %v325
    %412 = vmatmul.bf16.gmra.mxu0 %v163
    %v413 = vpop.f32.mrf.mxu0
    %v414 = vadd.f32 %v129, %v413
    %v415 = vpop.f32.mrf.mxu0
    %v416 = vadd.f32 %v129, %v415
    %417 = vmatmul.bf16.gmra.mxu0 %v168
    %v418 = vpop.f32.mrf.mxu0
    %v419 = vadd.f32 %v129, %v418
    %v420 = vpop.f32.mrf.mxu0
    %v421 = vadd.f32 %v129, %v420
    %422 = vdwg.mxu0
    %423 = vmatpush.bf16.msra.mxu0 %v340
    %424 = vmatpush.bf16.msra.mxu0 %v339
    %425 = vmatpush.bf16.msra.mxu0 %v338
    %426 = vmatpush.bf16.msra.mxu0 %v337
    %427 = vmatpush.bf16.msra.mxu0 %v336
    %428 = vmatpush.bf16.msra.mxu0 %v335
    %429 = vmatpush.bf16.msra.mxu0 %v334
    %430 = vmatpush.bf16.msra.mxu0 %v333
    %431 = vmatmul.bf16.gmra.mxu0 %v164
    %v432 = vpop.f32.mrf.mxu0
    %v433 = vadd.f32 %v414, %v432
    %v434 = vpop.f32.mrf.mxu0
    %v435 = vadd.f32 %v416, %v434
    %436 = vmatmul.bf16.gmra.mxu0 %v169
    %v437 = vpop.f32.mrf.mxu0
    %v438 = vadd.f32 %v419, %v437
    %v439 = vpop.f32.mrf.mxu0
    %v440 = vadd.f32 %v421, %v439
    %441 = vdwg.mxu0
    %442 = vmatpush.bf16.msra.mxu0 %v348
    %443 = vmatpush.bf16.msra.mxu0 %v347
    %444 = vmatpush.bf16.msra.mxu0 %v346
    %445 = vmatpush.bf16.msra.mxu0 %v345
    %446 = vmatpush.bf16.msra.mxu0 %v344
    %447 = vmatpush.bf16.msra.mxu0 %v343
    %448 = vmatpush.bf16.msra.mxu0 %v342
    %449 = vmatpush.bf16.msra.mxu0 %v341
    %450 = vmatmul.bf16.gmra.mxu0 %v165
    %v451 = vpop.f32.mrf.mxu0
    %v452 = vadd.f32 %v433, %v451
    %v453 = vpop.f32.mrf.mxu0
    %v454 = vadd.f32 %v435, %v453
    %455 = vmatmul.bf16.gmra.mxu0 %v170
    %v456 = vpop.f32.mrf.mxu0
    %v457 = vadd.f32 %v438, %v456
    %v458 = vpop.f32.mrf.mxu0
    %v459 = vadd.f32 %v440, %v458
    %460 = vdwg.mxu0
    %461 = vmatpush.bf16.msra.mxu0 %v356
    %462 = vmatpush.bf16.msra.mxu0 %v355
    %463 = vmatpush.bf16.msra.mxu0 %v354
    %464 = vmatpush.bf16.msra.mxu0 %v353
    %465 = vmatpush.bf16.msra.mxu0 %v352
    %466 = vmatpush.bf16.msra.mxu0 %v351
    %467 = vmatpush.bf16.msra.mxu0 %v350
    %468 = vmatpush.bf16.msra.mxu0 %v349
    %469 = vmatmul.bf16.gmra.mxu0 %v166
    %v470 = vpop.f32.mrf.mxu0
    %v471 = vadd.f32 %v452, %v470
    %v472 = vpop.f32.mrf.mxu0
    %v473 = vadd.f32 %v454, %v472
    %474 = vmatmul.bf16.gmra.mxu0 %v171
    %v475 = vpop.f32.mrf.mxu0
    %v476 = vadd.f32 %v457, %v475
    %v477 = vpop.f32.mrf.mxu0
    %v478 = vadd.f32 %v459, %v477
    %479 = vdwg.mxu0
    %480 = vmatpush.bf16.msra.mxu0 0
    %481 = vmatpush.bf16.msra.mxu0 0
    %482 = vmatpush.bf16.msra.mxu0 0
    %483 = vmatpush.bf16.msra.mxu0 0
    %484 = vmatpush.bf16.msra.mxu0 %v360
    %485 = vmatpush.bf16.msra.mxu0 %v359
    %486 = vmatpush.bf16.msra.mxu0 %v358
    %487 = vmatpush.bf16.msra.mxu0 %v357
    %488 = vmatmul.bf16.gmra.mxu0 %v399
    %v489 = vpop.f32.mrf.mxu0
    %v490 = vadd.f32 %v471, %v489
    %v491 = vpop.f32.mrf.mxu0
    %v492 = vadd.f32 %v473, %v491
    %493 = vmatmul.bf16.gmra.mxu0 %v402
    %v494 = vpop.f32.mrf.mxu0
    %v495 = vadd.f32 %v476, %v494
    %v496 = vpop.f32.mrf.mxu0
    %v497 = vadd.f32 %v478, %v496
    %498 = vdwg.mxu0
    %v499 = vld [vmem:[%s3] sm:$0x1]
    %v500 = vld [vmem:[%s4] sm:$0x1]
    %v501 = vld [vmem:[%s5] sm:$0xff]
    %v502 = vld [vmem:[%s5 + $0x8] sm:$0xff]
    %v503 = vld [vmem:[%s5 + $0x10] sm:$0xff]
    %v504 = vld [vmem:[%s5 + $0x18] sm:$0xff]
    %v505 = vld [vmem:[%s5 + $0x20] sm:$0xff]
    %v506 = vld [vmem:[%s5 + $0x28] sm:$0xff]
    %v507 = vld [vmem:[%s5 + $0x30] sm:$0xff]
    %v508 = vld [vmem:[%s5 + $0x38] sm:$0xff]
    %v509 = vld [vmem:[%s5 + $0x40] sm:$0xff]
    %v510 = vld [vmem:[%s5 + $0x48] sm:$0xff]
    %v511 = vld [vmem:[%s5 + $0x50] sm:$0xff]
    %v512 = vld [vmem:[%s5 + $0x58] sm:$0xff]
    %v513 = vld [vmem:[%s5 + $0x60] sm:$0xff]
    %v514 = vld [vmem:[%s5 + $0x68] sm:$0xff]
    %v515 = vld [vmem:[%s5 + $0x70] sm:$0xff]
    %v516 = vld [vmem:[%s5 + $0x78] sm:$0xff]
    %v517 = vld [vmem:[%s6] sm:$0x3]
    %v518 = vld [vmem:[%s7] sm:$0xff]
    %v519 = vld [vmem:[%s7 + $0x8] sm:$0xff]
    %v520 = vld [vmem:[%s7 + $0x10] sm:$0xff]
    %v521 = vld [vmem:[%s7 + $0x18] sm:$0xff]
    %vm522 = vcmask 261120
    %v524 = vsel %vm522, %v517, 0
    %526 = vmatpush.msra.mxu0 0.0
    %527 = vmatpush.msra.mxu0 0.0
    %528 = vmatpush.msra.mxu0 0.0
    %529 = vmatpush.msra.mxu0 0.0
    %530 = vmatpush.msra.mxu0 0.0
    %531 = vmatpush.msra.mxu0 0.0
    %532 = vmatpush.msra.mxu0 0.0
    %533 = vmatpush.msra.mxu0 0.0
    %534 = vmatpush.msra.mxu0 0.0
    %535 = vmatpush.msra.mxu0 0.0
    %536 = vmatpush.msra.mxu0 0.0
    %537 = vmatpush.msra.mxu0 0.0
    %538 = vmatpush.msra.mxu0 %v497
    %539 = vmatpush.msra.mxu0 %v495
    %540 = vmatpush.msra.mxu0 %v492
    %541 = vmatpush.msra.mxu0 %v490
    %542 = vmatmul.f32.gmra.mxu0 %v524
    %v543 = vpop.f32.mrf.mxu0
    %v544 = vadd.f32 0.0, %v543
    %545 = vdwg.mxu0
    %546 = vmatpush.msra.mxu0 %v516
    %547 = vmatpush.msra.mxu0 %v515
    %548 = vmatpush.msra.mxu0 %v514
    %549 = vmatpush.msra.mxu0 %v513
    %550 = vmatpush.msra.mxu0 %v512
    %551 = vmatpush.msra.mxu0 %v511
    %552 = vmatpush.msra.mxu0 %v510
    %553 = vmatpush.msra.mxu0 %v509
    %554 = vmatpush.msra.mxu0 %v508
    %555 = vmatpush.msra.mxu0 %v507
    %556 = vmatpush.msra.mxu0 %v506
    %557 = vmatpush.msra.mxu0 %v505
    %558 = vmatpush.msra.mxu0 %v504
    %559 = vmatpush.msra.mxu0 %v503
    %560 = vmatpush.msra.mxu0 %v502
    %561 = vmatpush.msra.mxu0 %v501
    %562 = vmatmul.f32.gmra.mxu0 %v544
    %v563 = vpop.f32.mrf.mxu0
    %v564 = vadd.f32 0.0, %v563
    %565 = vdwg.mxu0
    %v566 = vmul.f32 %v564, 0.0078125
    %vm567 = vcmask 15360
    %v569 = vsel %vm567, %v518, 0
    %v572 = vsel %vm567, %v519, 0
    %v575 = vsel %vm567, %v520, 0
    %v578 = vsel %vm567, %v521, 0
    %vm580 = vcmask 1041408
    %v582 = vsel %vm580, %v566, 0
    %584 = vmatpush.msra.mxu0 0.0
    %585 = vmatpush.msra.mxu0 0.0
    %586 = vmatpush.msra.mxu0 0.0
    %587 = vmatpush.msra.mxu0 0.0
    %588 = vmatpush.msra.mxu0 0.0
    %589 = vmatpush.msra.mxu0 0.0
    %590 = vmatpush.msra.mxu0 0.0
    %591 = vmatpush.msra.mxu0 0.0
    %592 = vmatpush.msra.mxu0 0.0
    %593 = vmatpush.msra.mxu0 0.0
    %594 = vmatpush.msra.mxu0 0.0
    %595 = vmatpush.msra.mxu0 0.0
    %596 = vmatpush.msra.mxu0 0.0
    %597 = vmatpush.msra.mxu0 0.0
    %598 = vmatpush.msra.mxu0 0.0
    %599 = vmatpush.msra.mxu0 %v582
    %600 = vmatmul.f32.gmra.mxu0 %v569
    %v601 = vpop.f32.mrf.mxu0
    %v602 = vadd.f32 0.0, %v601
    %603 = vmatmul.f32.gmra.mxu0 %v572
    %v604 = vpop.f32.mrf.mxu0
    %v605 = vadd.f32 0.0, %v604
    %606 = vmatmul.f32.gmra.mxu0 %v575
    %v607 = vpop.f32.mrf.mxu0
    %v608 = vadd.f32 0.0, %v607
    %609 = vmatmul.f32.gmra.mxu0 %v578
    %v610 = vpop.f32.mrf.mxu0
    %v611 = vadd.f32 0.0, %v610
    %612 = vdwg.mxu0
    %v613 = vsub.f32 %v490, %v602
    %v614 = vsub.f32 %v492, %v605
    %v615 = vsub.f32 %v495, %v608
    %v616 = vsub.f32 %v497, %v611
    %v617 = vmul.f32 %v613, %v613
    %v618 = vmul.f32 %v614, %v614
    %v619 = vmul.f32 %v615, %v615
    %v620 = vmul.f32 %v616, %v616
    %621 = vmatpush.msra.mxu0 0.0
    %622 = vmatpush.msra.mxu0 0.0
    %623 = vmatpush.msra.mxu0 0.0
    %624 = vmatpush.msra.mxu0 0.0
    %625 = vmatpush.msra.mxu0 0.0
    %626 = vmatpush.msra.mxu0 0.0
    %627 = vmatpush.msra.mxu0 0.0
    %628 = vmatpush.msra.mxu0 0.0
    %629 = vmatpush.msra.mxu0 0.0
    %630 = vmatpush.msra.mxu0 0.0
    %631 = vmatpush.msra.mxu0 0.0
    %632 = vmatpush.msra.mxu0 0.0
    %633 = vmatpush.msra.mxu0 %v620
    %634 = vmatpush.msra.mxu0 %v619
    %635 = vmatpush.msra.mxu0 %v618
    %636 = vmatpush.msra.mxu0 %v617
    %637 = vmatmul.f32.gmra.mxu0 %v524
    %v638 = vpop.f32.mrf.mxu0
    %v639 = vadd.f32 0.0, %v638
    %640 = vdwg.mxu0
    %641 = vmatpush.msra.mxu0 %v516
    %642 = vmatpush.msra.mxu0 %v515
    %643 = vmatpush.msra.mxu0 %v514
    %644 = vmatpush.msra.mxu0 %v513
    %645 = vmatpush.msra.mxu0 %v512
    %646 = vmatpush.msra.mxu0 %v511
    %647 = vmatpush.msra.mxu0 %v510
    %648 = vmatpush.msra.mxu0 %v509
    %649 = vmatpush.msra.mxu0 %v508
    %650 = vmatpush.msra.mxu0 %v507
    %651 = vmatpush.msra.mxu0 %v506
    %652 = vmatpush.msra.mxu0 %v505
    %653 = vmatpush.msra.mxu0 %v504
    %654 = vmatpush.msra.mxu0 %v503
    %655 = vmatpush.msra.mxu0 %v502
    %656 = vmatpush.msra.mxu0 %v501
    %657 = vmatmul.f32.gmra.mxu0 %v639
    %v658 = vpop.f32.mrf.mxu0
    %v659 = vadd.f32 0.0, %v658
    %660 = vdwg.mxu0
    %v661 = vmul.f32 %v659, 0.0078125
    %v662 = vadd.f32 %v661, 1e-05
    %v663 = vrsqrt.pop %v662
    %v664 = vmul.f32 %v663, %v662
    %v665 = vmul.f32 %v664, %v663
    %v666 = vmul.f32 0.5, %v665
    %v667 = vsub.f32 1.5, %v666
    %v668 = vmul.f32 %v663, %v667
    %vm669 = vweird.f32 %v662
    %vm670 = vweird.f32 %v663
    %vm671 = vmor %vm669, %vm670
    %v672 = vsel %vm671, %v663, %v668
    %v674 = vperm.slane %v499, 0
    %v676 = vmul.f32 %v672, %v674
    %v678 = vsel %vm580, %v676, 0
    %680 = vmatpush.msra.mxu0 0.0
    %681 = vmatpush.msra.mxu0 0.0
    %682 = vmatpush.msra.mxu0 0.0
    %683 = vmatpush.msra.mxu0 0.0
    %684 = vmatpush.msra.mxu0 0.0
    %685 = vmatpush.msra.mxu0 0.0
    %686 = vmatpush.msra.mxu0 0.0
    %687 = vmatpush.msra.mxu0 0.0
    %688 = vmatpush.msra.mxu0 0.0
    %689 = vmatpush.msra.mxu0 0.0
    %690 = vmatpush.msra.mxu0 0.0
    %691 = vmatpush.msra.mxu0 0.0
    %692 = vmatpush.msra.mxu0 0.0
    %693 = vmatpush.msra.mxu0 0.0
    %694 = vmatpush.msra.mxu0 0.0
    %695 = vmatpush.msra.mxu0 %v678
    %696 = vmatmul.f32.gmra.mxu0 %v569
    %v697 = vpop.f32.mrf.mxu0
    %v698 = vadd.f32 0.0, %v697
    %699 = vmatmul.f32.gmra.mxu0 %v572
    %v700 = vpop.f32.mrf.mxu0
    %v701 = vadd.f32 0.0, %v700
    %702 = vmatmul.f32.gmra.mxu0 %v575
    %v703 = vpop.f32.mrf.mxu0
    %v704 = vadd.f32 0.0, %v703
    %705 = vmatmul.f32.gmra.mxu0 %v578
    %v706 = vpop.f32.mrf.mxu0
    %v707 = vadd.f32 0.0, %v706
    %708 = vdwg.mxu0
    %v709 = vmul.f32 %v613, %v698
    %v710 = vmul.f32 %v614, %v701
    %v711 = vmul.f32 %v615, %v704
    %v712 = vmul.f32 %v616, %v707
    %v714 = vperm.slane %v500, 0
    %v716 = vadd.f32 %v709, %v714
    %v717 = vadd.f32 %v710, %v714
    %v718 = vadd.f32 %v711, %v714
    %v719 = vadd.f32 %v712, %v714
    %v720 = vmax.f32 %v716, 0.0
    %v721 = vmax.f32 %v717, 0.0
    %v722 = vmax.f32 %v718, 0.0
    %v723 = vmax.f32 %v719, 0.0
    %724 = vmatpush.msra.mxu0 0.0
    %725 = vmatpush.msra.mxu0 0.0
    %726 = vmatpush.msra.mxu0 0.0
    %727 = vmatpush.msra.mxu0 0.0
    %728 = vmatpush.msra.mxu0 0.0
    %729 = vmatpush.msra.mxu0 0.0
    %730 = vmatpush.msra.mxu0 0.0
    %731 = vmatpush.msra.mxu0 0.0
    %732 = vmatpush.msra.mxu0 0.0
    %733 = vmatpush.msra.mxu0 0.0
    %734 = vmatpush.msra.mxu0 0.0
    %735 = vmatpush.msra.mxu0 0.0
    %736 = vmatpush.msra.mxu0 %v723
    %737 = vmatpush.msra.mxu0 %v722
    %738 = vmatpush.msra.mxu0 %v721
    %739 = vmatpush.msra.mxu0 %v720
    %740 = vmatmul.f32.gmra.mxu0 %v524
    %v741 = vpop.f32.mrf.mxu0
    %v742 = vadd.f32 0.0, %v741
    %743 = vdwg.mxu0
    %v744 = vmul.f32 %v742, 0.0625
    %v745 = vpack.c.bf16 %v744, %v744
    %v746 = vld [vmem:[%s8] sm:$0xf]
    %v747 = vld [vmem:[%s8 + $0x4] sm:$0xf]
    %v748 = vld [vmem:[%s8 + $0x8] sm:$0xf]
    %v749 = vld [vmem:[%s8 + $0xc] sm:$0xf]
    %v750 = vld [vmem:[%s8 + $0x10] sm:$0xf]
    %v751 = vld [vmem:[%s8 + $0x14] sm:$0xf]
    %v752 = vld [vmem:[%s8 + $0x18] sm:$0xf]
    %v753 = vld [vmem:[%s8 + $0x1c] sm:$0xf]
    %v754 = vld [vmem:[%s8 + $0x20] sm:$0xf]
    %v755 = vld [vmem:[%s8 + $0x24] sm:$0xf]
    %v756 = vld [vmem:[%s8 + $0x28] sm:$0xf]
    %v757 = vld [vmem:[%s8 + $0x2c] sm:$0xf]
    %v758 = vld [vmem:[%s8 + $0x30] sm:$0xf]
    %v759 = vld [vmem:[%s8 + $0x34] sm:$0xf]
    %v760 = vld [vmem:[%s8 + $0x38] sm:$0xf]
    %v761 = vld [vmem:[%s8 + $0x3c] sm:$0xf]
    %v762 = vld [vmem:[%s9] sm:$0x1]
    %v764 = vperm.slane %v762, 0
    %v782 = vunpack.c.l.b16 %v746
    %v783 = vunpack.c.l.b16 %v747
    %v784 = vunpack.c.l.b16 %v748
    %v785 = vunpack.c.l.b16 %v749
    %v786 = vunpack.c.l.b16 %v750
    %v787 = vunpack.c.l.b16 %v751
    %v788 = vunpack.c.l.b16 %v752
    %v789 = vunpack.c.l.b16 %v753
    %v790 = vunpack.c.l.b16 %v754
    %v791 = vunpack.c.l.b16 %v755
    %v792 = vunpack.c.l.b16 %v756
    %v793 = vunpack.c.l.b16 %v757
    %v794 = vunpack.c.l.b16 %v758
    %v795 = vunpack.c.l.b16 %v759
    %v796 = vunpack.c.l.b16 %v760
    %v797 = vunpack.c.l.b16 %v761
    %v798 = vpack.c.b16 %v783, %v782
    %v799 = vpack.c.b16 %v785, %v784
    %v800 = vpack.c.b16 %v787, %v786
    %v801 = vpack.c.b16 %v789, %v788
    %v802 = vpack.c.b16 %v791, %v790
    %v803 = vpack.c.b16 %v793, %v792
    %v804 = vpack.c.b16 %v795, %v794
    %v805 = vpack.c.b16 %v797, %v796
    %814 = vmatpush.bf16.msra.mxu0 %v805
    %815 = vmatpush.bf16.msra.mxu0 %v804
    %816 = vmatpush.bf16.msra.mxu0 %v803
    %817 = vmatpush.bf16.msra.mxu0 %v802
    %818 = vmatpush.bf16.msra.mxu0 %v801
    %819 = vmatpush.bf16.msra.mxu0 %v800
    %820 = vmatpush.bf16.msra.mxu0 %v799
    %821 = vmatpush.bf16.msra.mxu0 %v798
    %822 = vmatmul.bf16.gmra.mxu0 %v745
    %v823 = vpop.f32.mrf.mxu0
    %v824 = vadd.f32 %v764, %v823
    %v825 = vpop.f32.mrf.mxu0
    %826 = vdwg.mxu0
    %v827 = vmax.f32 %v824, 0.0
    %v828 = vpack.c.bf16 %v827, %v827
    %v829 = vld [vmem:[%s10] sm:$0xf]
    %v830 = vld [vmem:[%s10 + $0x4] sm:$0xf]
    %v831 = vld [vmem:[%s10 + $0x8] sm:$0xf]
    %v832 = vld [vmem:[%s10 + $0xc] sm:$0xf]
    %v833 = vld [vmem:[%s10 + $0x10] sm:$0xf]
    %v834 = vld [vmem:[%s10 + $0x14] sm:$0xf]
    %v835 = vld [vmem:[%s10 + $0x18] sm:$0xf]
    %v836 = vld [vmem:[%s10 + $0x1c] sm:$0xf]
    %v837 = vld [vmem:[%s10 + $0x20] sm:$0xf]
    %v838 = vld [vmem:[%s10 + $0x24] sm:$0xf]
    %v839 = vld [vmem:[%s10 + $0x28] sm:$0xf]
    %v840 = vld [vmem:[%s10 + $0x2c] sm:$0xf]
    %v841 = vld [vmem:[%s10 + $0x30] sm:$0xf]
    %v842 = vld [vmem:[%s10 + $0x34] sm:$0xf]
    %v843 = vld [vmem:[%s10 + $0x38] sm:$0xf]
    %v844 = vld [vmem:[%s10 + $0x3c] sm:$0xf]
    %v845 = vld [vmem:[%s11] sm:$0x1]
    %v847 = vperm.slane %v845, 0
    %v865 = vunpack.c.l.b16 %v829
    %v866 = vunpack.c.l.b16 %v830
    %v867 = vunpack.c.l.b16 %v831
    %v868 = vunpack.c.l.b16 %v832
    %v869 = vunpack.c.l.b16 %v833
    %v870 = vunpack.c.l.b16 %v834
    %v871 = vunpack.c.l.b16 %v835
    %v872 = vunpack.c.l.b16 %v836
    %v873 = vunpack.c.l.b16 %v837
    %v874 = vunpack.c.l.b16 %v838
    %v875 = vunpack.c.l.b16 %v839
    %v876 = vunpack.c.l.b16 %v840
    %v877 = vunpack.c.l.b16 %v841
    %v878 = vunpack.c.l.b16 %v842
    %v879 = vunpack.c.l.b16 %v843
    %v880 = vunpack.c.l.b16 %v844
    %v881 = vpack.c.b16 %v866, %v865
    %v882 = vpack.c.b16 %v868, %v867
    %v883 = vpack.c.b16 %v870, %v869
    %v884 = vpack.c.b16 %v872, %v871
    %v885 = vpack.c.b16 %v874, %v873
    %v886 = vpack.c.b16 %v876, %v875
    %v887 = vpack.c.b16 %v878, %v877
    %v888 = vpack.c.b16 %v880, %v879
    %897 = vmatpush.bf16.msra.mxu0 %v888
    %898 = vmatpush.bf16.msra.mxu0 %v887
    %899 = vmatpush.bf16.msra.mxu0 %v886
    %900 = vmatpush.bf16.msra.mxu0 %v885
    %901 = vmatpush.bf16.msra.mxu0 %v884
    %902 = vmatpush.bf16.msra.mxu0 %v883
    %903 = vmatpush.bf16.msra.mxu0 %v882
    %904 = vmatpush.bf16.msra.mxu0 %v881
    %905 = vmatmul.bf16.gmra.mxu0 %v828
    %v906 = vpop.f32.mrf.mxu0
    %v907 = vadd.f32 %v847, %v906
    %v908 = vpop.f32.mrf.mxu0
    %909 = vdwg.mxu0
    %910 = vst [vmem:[#allocation2] sm:$0x3] %v907
    // Predicated region
    $region50: #{dqn_forward.5} parent=1 // pred_check
      _
    $region51: #{dqn_forward.5} parent=1 // pred_check_branch
      %912 = sbr.rel (0) target = $region53
    $region52: #{dqn_forward.5} parent=1 // pred_region
      %914 = vsyncadd [#allocation3], 0
      %s916 = sshll.u32 [#allocation2], 4
      %s917 = int_to_ptr.vmem [resolvable:$true] %s916
      %s918 = sshll.u32 %s12, 4
      %s919 = int_to_ptr.hbm [resolvable:$true] %s918
      %921 = dma.vmem_to_hbm [thread:$0]  %s917, 32, %s919, [#allocation3]
    $region53: #{dqn_forward.5} parent=1 // pred_fallthru
      _
    // Predicated region
    $region54: #{dqn_forward.5} parent=1 // pred_check
      _
    $region55: #{dqn_forward.5} parent=1 // pred_check_branch
      %923 = sbr.rel (0) target = $region57
    $region56: #{dqn_forward.5} parent=1 // pred_region
      %925 = dma.done [#allocation3], 32
    $region57: #{dqn_forward.5} parent=1 // pred_fallthru
      _
    %926 = vsyncpa [#allocation3], 1

</llo_original>
